<compile_context>
chip_gen: v7x
topology: tpu7x:2x2x1
jax: 0.10.0
libtpu: 0.0.40
codegen_flags: <defaults>
</compile_context>

<pallas_src>
import functools
import math

import jax
import jax.numpy as jnp
from jax import lax
from jax.experimental import pallas as pl
from jax.experimental.pallas import tpu as pltpu


def _round_up(x, m):
    return (x + m - 1) // m * m


# ------------------------------ fused kernel --------------------------------

def fused_dt_kernel(
    # per-batch-element inputs (fetched once per b)
    obj_ref, mask_ref, goal_ref, act_ref,
    # prologue constants (fetched once)
    enc_w1_ref, enc_b1_ref, enc_w2_ref, enc_b2_ref,
    goal_w_ref, goal_b_ref, act_emb_ref, pos_ref, cmask_ref,
    # per-layer weights (stacked over L, streamed by the grid pipeline)
    ln1w_ref, ln1b_ref, wqkv_ref, bqkv_ref, wo_ref, bo_ref,
    ln2w_ref, ln2b_ref, wup_ref, bup_ref, wdn_ref, bdn_ref,
    # epilogue constants
    lnfw_ref, lnfb_ref, headw_ref, headb_ref,
    # output + scratch
    out_ref, x_sc,
):
    layer = pl.program_id(1)
    n_layers = pl.num_programs(1)
    S, H = pos_ref.shape
    T, N = mask_ref.shape[1], mask_ref.shape[2]
    A = act_emb_ref.shape[0]
    f32, bf16 = jnp.float32, jnp.bfloat16

    def layernorm(v, w, b):
        mu = jnp.mean(v, axis=-1, keepdims=True)
        var = jnp.mean((v - mu) ** 2, axis=-1, keepdims=True)
        return (v - mu) * lax.rsqrt(var + 1e-5) * w + b

    # ---- prologue (layer 0): encode + assemble token sequence in VMEM ----
    @pl.when(layer == 0)
    def _prologue():
        # per-object 2-layer ReLU MLP as flat 2-D matmuls (bf16 MXU, f32 acc)
        obj = obj_ref[0].astype(bf16)                                 # [T*N, F]
        h = jnp.dot(obj, enc_w1_ref[...],
                    preferred_element_type=f32) + enc_b1_ref[...]
        h = jnp.maximum(h, 0.0)
        h = jnp.dot(h.astype(bf16), enc_w2_ref[...],
                    preferred_element_type=f32) + enc_b2_ref[...]
        h = jnp.maximum(h, 0.0)                                       # [T*N, H]

        mask2d = mask_ref[0]                                          # [T, N]
        denom = jnp.sum(mask2d, axis=1, keepdims=True) + 1e-6         # [T, 1]

        goal_tok = (jnp.dot(goal_ref[0].astype(bf16), goal_w_ref[...],
                            preferred_element_type=f32)
                    + goal_b_ref[...])                                # [1, H]

        # action-history embedding as a one-hot matmul (no gather)
        act_idx = act_ref[0]                                          # [T, 1]
        iota_a = lax.broadcasted_iota(jnp.int32, (T, A), 1)
        onehot = (iota_a == act_idx).astype(bf16)
        act_tok = jnp.dot(onehot, act_emb_ref[...],
                          preferred_element_type=f32)                 # [T, H]

        pos = pos_ref[...]                                            # [S, H]
        x_sc[0:1, :] = goal_tok + pos[0:1, :]
        for t in range(T):
            # filter-masked mean pool over objects, expressed as a 1xN matmul
            s_tok = jnp.dot(mask2d[t:t + 1, :], h[t * N:(t + 1) * N, :],
                            preferred_element_type=f32) / denom[t:t + 1, :]
            x_sc[1 + 2 * t:2 + 2 * t, :] = s_tok + pos[1 + 2 * t:2 + 2 * t, :]
            x_sc[2 + 2 * t:3 + 2 * t, :] = (act_tok[t:t + 1, :]
                                            + pos[2 + 2 * t:3 + 2 * t, :])

    # ---- transformer block (every layer) ----
    x = x_sc[...]                                                     # [S, H]

    h1 = layernorm(x, ln1w_ref[0], ln1b_ref[0])
    qkv = (jnp.dot(h1.astype(bf16), wqkv_ref[0],
                   preferred_element_type=f32) + bqkv_ref[0])         # [S, 3H]
    q = qkv[:, 0 * H:1 * H]
    k = qkv[:, 1 * H:2 * H]
    v = qkv[:, 2 * H:3 * H]

    # scores = q @ k^T (contraction on the last dim of both -> no XLU transpose)
    scores = lax.dot_general(q.astype(bf16), k.astype(bf16),
                             (((1,), (1,)), ((), ())),
                             preferred_element_type=f32)              # [S, S]
    scores = scores * (1.0 / math.sqrt(H)) + cmask_ref[...]           # causal
    scores = scores - jnp.max(scores, axis=-1, keepdims=True)
    p = jnp.exp(scores)
    p = p * pl.reciprocal(jnp.sum(p, axis=-1, keepdims=True), approx=True)

    attn = jnp.dot(p.astype(bf16), v.astype(bf16),
                   preferred_element_type=f32)                        # [S, H]
    o = (jnp.dot(attn.astype(bf16), wo_ref[0],
                 preferred_element_type=f32) + bo_ref[0])
    x = x + o

    h2 = layernorm(x, ln2w_ref[0], ln2b_ref[0])
    up = (jnp.dot(h2.astype(bf16), wup_ref[0],
                  preferred_element_type=f32) + bup_ref[0])           # [S, 4H]
    # TODO(synk): PyTorch nn.GELU defaults to exact GELU; tanh approx used here.
    up = jax.nn.gelu(up, approximate=True)
    dn = (jnp.dot(up.astype(bf16), wdn_ref[0],
                  preferred_element_type=f32) + bdn_ref[0])
    x = x + dn
    x_sc[...] = x

    # ---- epilogue (last layer): final LN + action head over all tokens ----
    # (head applied to every token position; wrapper slices out state tokens)
    @pl.when(layer == n_layers - 1)
    def _epilogue():
        xf = layernorm(x, lnfw_ref[...], lnfb_ref[...])
        logits = (jnp.dot(xf.astype(bf16), headw_ref[...],
                          preferred_element_type=f32) + headb_ref[...])
        out_ref[0] = logits                                           # [S, Apad]


# ------------------------------ full forward --------------------------------

def abil_dt_forward(params, states, goal_tensors, actions, filt_obj_tensors):
    B, T, N, F = states.shape
    H = params['enc_w1'].shape[1]
    A = params['head_w'].shape[1]
    G = params['goal_w'].shape[0]
    L = len(params['blocks'])
    S = 1 + 2 * T
    A_pad = _round_up(A, 128)
    N_pad = _round_up(N, 8)            # sublane-align per-timestep object slabs
    f32, bf16 = jnp.float32, jnp.bfloat16

    # ---- input massaging (plain JAX, all tiny) ----
    states_p = jnp.pad(states, ((0, 0), (0, 0), (0, N_pad - N), (0, 0)))
    mask_p = jnp.pad(filt_obj_tensors, ((0, 0), (0, 0), (0, N_pad - N)))
    obj = states_p.reshape(B, T * N_pad, F).astype(f32)
    mask = mask_p.astype(f32)                                    # [B, T, Npad]
    goal = goal_tensors.reshape(B, 1, G).astype(f32)
    act = actions.reshape(B, T, 1).astype(jnp.int32)

    # ---- weight packing: stack per-layer weights, bf16 MXU operands ----
    def stack(name, dtype=None):
        a = jnp.stack([blk[name] for blk in params['blocks']], axis=0)
        return a.astype(dtype) if dtype is not None else a

    ln1w, ln1b = stack('ln1_w'), stack('ln1_b')
    wqkv, bqkv = stack('w_qkv', bf16), stack('b_qkv')
    wo, bo = stack('w_o', bf16), stack('b_o')
    ln2w, ln2b = stack('ln2_w'), stack('ln2_b')
    wup, bup = stack('w_up', bf16), stack('b_up')
    wdn, bdn = stack('w_dn', bf16), stack('b_dn')

    enc_w1, enc_b1 = params['enc_w1'].astype(bf16), params['enc_b1']
    enc_w2, enc_b2 = params['enc_w2'].astype(bf16), params['enc_b2']
    goal_w, goal_b = params['goal_w'].astype(bf16), params['goal_b']
    act_emb = params['act_emb'].astype(bf16)
    pos_emb = params['pos_emb']
    lnf_w, lnf_b = params['lnf_w'], params['lnf_b']
    head_w = jnp.pad(params['head_w'], ((0, 0), (0, A_pad - A))).astype(bf16)
    head_b = jnp.pad(params['head_b'], ((0, 0), (0, A_pad - A))).astype(f32)

    # additive causal mask, built once host-side (hoisted out of the kernel)
    qi = jnp.arange(S)[:, None]
    ki = jnp.arange(S)[None, :]
    cmask = jnp.where(ki <= qi, 0.0, -1e9).astype(f32)

    # ---- BlockSpecs ----
    def const_spec(arr):
        nd = arr.ndim
        return pl.BlockSpec(arr.shape, lambda b, l: (0,) * nd)

    def batch_spec(arr):
        nd = arr.ndim
        return pl.BlockSpec((1,) + arr.shape[1:],
                            lambda b, l: (b,) + (0,) * (nd - 1))

    def layer_spec(arr):
        nd = arr.ndim
        return pl.BlockSpec((1,) + arr.shape[1:],
                            lambda b, l: (l,) + (0,) * (nd - 1))

    inputs = [obj, mask, goal, act,
              enc_w1, enc_b1, enc_w2, enc_b2,
              goal_w, goal_b, act_emb, pos_emb, cmask,
              ln1w, ln1b, wqkv, bqkv, wo, bo,
              ln2w, ln2b, wup, bup, wdn, bdn,
              lnf_w, lnf_b, head_w, head_b]
    in_specs = [batch_spec(obj), batch_spec(mask), batch_spec(goal),
                batch_spec(act),
                const_spec(enc_w1), const_spec(enc_b1),
                const_spec(enc_w2), const_spec(enc_b2),
                const_spec(goal_w), const_spec(goal_b),
                const_spec(act_emb), const_spec(pos_emb), const_spec(cmask),
                layer_spec(ln1w), layer_spec(ln1b),
                layer_spec(wqkv), layer_spec(bqkv),
                layer_spec(wo), layer_spec(bo),
                layer_spec(ln2w), layer_spec(ln2b),
                layer_spec(wup), layer_spec(bup),
                layer_spec(wdn), layer_spec(bdn),
                const_spec(lnf_w), const_spec(lnf_b),
                const_spec(head_w), const_spec(head_b)]
    out_spec = pl.BlockSpec((1, S, A_pad), lambda b, l: (b, 0, 0))

    flops = 2 * B * (T * N_pad * (F * H + H * H)
                     + L * S * (3 * H * H + H * H + 8 * H * H)
                     + 2 * L * S * S * H
                     + S * H * A_pad + G * H)
    bytes_accessed = int(sum(x.size * x.dtype.itemsize for x in inputs)
                         + B * S * A_pad * 4)
    transcendentals = B * L * (S * S + S * 4 * H)

    out = pl.pallas_call(
        fused_dt_kernel,
        out_shape=jax.ShapeDtypeStruct((B, S, A_pad), f32),
        grid=(B, L),
        in_specs=in_specs,
        out_specs=out_spec,
        scratch_shapes=[pltpu.VMEM((S, H), f32)],   # token tensor resident over L
        compiler_params=pltpu.CompilerParams(
            dimension_semantics=("parallel", "arbitrary")),
        cost_estimate=pl.CostEstimate(flops=flops,
                                      transcendentals=transcendentals,
                                      bytes_accessed=bytes_accessed),
    )(*inputs)

    # state-token positions (1, 3, 5, ...) and the real action logits
    return out[:, 1::2, :A]                                       # [B, T, A]


# ------------------------------- param init ---------------------------------

def init_params(key, *, F, G, H, A, L, S):
    scale = 0.02
    keys = iter(jax.random.split(key, 16 + 8 * L))

    def nrm(shape):
        return jax.random.normal(next(keys), shape, jnp.float32) * scale

    p = {
        'enc_w1': nrm((F, H)), 'enc_b1': jnp.zeros((1, H), jnp.float32),
        'enc_w2': nrm((H, H)), 'enc_b2': jnp.zeros((1, H), jnp.float32),
        'goal_w': nrm((G, H)), 'goal_b': jnp.zeros((1, H), jnp.float32),
        'act_emb': nrm((A, H)),
        'pos_emb': nrm((S, H)),
        'lnf_w': jnp.ones((1, H), jnp.float32),
        'lnf_b': jnp.zeros((1, H), jnp.float32),
        'head_w': nrm((H, A)), 'head_b': jnp.zeros((1, A), jnp.float32),
        'blocks': [],
    }
    for _ in range(L):
        p['blocks'].append({
            'ln1_w': jnp.ones((1, H), jnp.float32),
            'ln1_b': jnp.zeros((1, H), jnp.float32),
            'w_qkv': nrm((H, 3 * H)), 'b_qkv': jnp.zeros((1, 3 * H), jnp.float32),
            'w_o': nrm((H, H)), 'b_o': jnp.zeros((1, H), jnp.float32),
            'ln2_w': jnp.ones((1, H), jnp.float32),
            'ln2_b': jnp.zeros((1, H), jnp.float32),
            'w_up': nrm((H, 4 * H)), 'b_up': jnp.zeros((1, 4 * H), jnp.float32),
            'w_dn': nrm((4 * H, H)), 'b_dn': jnp.zeros((1, H), jnp.float32),
        })
    return p


# ---------------------------------- main -------------------------------------

if __name__ == "__main__":
    B, T, N, F, G, H, A, L = 2, 4, 6, 16, 16, 128, 4, 2
    S = 1 + 2 * T  # goal + interleaved (state, action) tokens

    key = jax.random.PRNGKey(0)
    k_p, k_s, k_g, k_a, k_f = jax.random.split(key, 5)

    params = init_params(k_p, F=F, G=G, H=H, A=A, L=L, S=S)

    states = jax.random.normal(k_s, (B, T, N, F), jnp.float32)
    goal_tensors = jax.random.normal(k_g, (B, G), jnp.float32)
    actions = jax.random.randint(k_a, (B, T), 0, A, dtype=jnp.int32)
    filt_obj_tensors = (jax.random.uniform(k_f, (B, T, N)) > 0.5).astype(jnp.float32)
    filt_obj_tensors = filt_obj_tensors.at[..., 0].set(1.0)  # >=1 object kept

    fwd = jax.jit(functools.partial(abil_dt_forward, params))
    logits = fwd(states, goal_tensors, actions, filt_obj_tensors)
    jax.block_until_ready(logits)
    assert logits.shape == (B, T, A) and logits.dtype == jnp.float32
    print("KERNEL_OK")
</pallas_src>

<mosaic_0001>
module attributes {stable_mosaic.version = 11 : i64} {
  func.func @fused_dt_kernel(%arg0: i32, %arg1: i32, %arg2: memref<1x32x16xf32, #tpu.memory_space<vmem>>, %arg3: memref<1x4x8xf32, #tpu.memory_space<vmem>>, %arg4: memref<1x1x16xf32, #tpu.memory_space<vmem>>, %arg5: memref<1x4x1xi32, #tpu.memory_space<vmem>>, %arg6: memref<16x128xbf16, #tpu.memory_space<vmem>>, %arg7: memref<1x128xf32, #tpu.memory_space<vmem>>, %arg8: memref<128x128xbf16, #tpu.memory_space<vmem>>, %arg9: memref<1x128xf32, #tpu.memory_space<vmem>>, %arg10: memref<16x128xbf16, #tpu.memory_space<vmem>>, %arg11: memref<1x128xf32, #tpu.memory_space<vmem>>, %arg12: memref<4x128xbf16, #tpu.memory_space<vmem>>, %arg13: memref<9x128xf32, #tpu.memory_space<vmem>>, %arg14: memref<9x9xf32, #tpu.memory_space<vmem>>, %arg15: memref<1x1x128xf32, #tpu.memory_space<vmem>>, %arg16: memref<1x1x128xf32, #tpu.memory_space<vmem>>, %arg17: memref<1x128x384xbf16, #tpu.memory_space<vmem>>, %arg18: memref<1x1x384xf32, #tpu.memory_space<vmem>>, %arg19: memref<1x128x128xbf16, #tpu.memory_space<vmem>>, %arg20: memref<1x1x128xf32, #tpu.memory_space<vmem>>, %arg21: memref<1x1x128xf32, #tpu.memory_space<vmem>>, %arg22: memref<1x1x128xf32, #tpu.memory_space<vmem>>, %arg23: memref<1x128x512xbf16, #tpu.memory_space<vmem>>, %arg24: memref<1x1x512xf32, #tpu.memory_space<vmem>>, %arg25: memref<1x512x128xbf16, #tpu.memory_space<vmem>>, %arg26: memref<1x1x128xf32, #tpu.memory_space<vmem>>, %arg27: memref<1x128xf32, #tpu.memory_space<vmem>>, %arg28: memref<1x128xf32, #tpu.memory_space<vmem>>, %arg29: memref<128x128xbf16, #tpu.memory_space<vmem>>, %arg30: memref<1x128xf32, #tpu.memory_space<vmem>>, %arg31: memref<1x9x128xf32, #tpu.memory_space<vmem>>, %arg32: memref<9x128xf32, #tpu.memory_space<vmem>>) attributes {dimension_semantics = [#tpu.dimension_semantics<parallel>, #tpu.dimension_semantics<arbitrary>], iteration_bounds = array<i64: 2, 2>, scalar_prefetch = 0 : i64, scratch_operands = 1 : i64, tpu.core_type = #tpu.core_type<tc>, window_params = [{transform_indices = @transform_0, window_bounds = array<i64: 1, 32, 16>}, {transform_indices = @transform_1, window_bounds = array<i64: 1, 4, 8>}, {transform_indices = @transform_2, window_bounds = array<i64: 1, 1, 16>}, {transform_indices = @transform_3, window_bounds = array<i64: 1, 4, 1>}, {pipeline_mode = #tpu.pipeline_mode<synchronous>, transform_indices = @transform_4, window_bounds = array<i64: 16, 128>}, {pipeline_mode = #tpu.pipeline_mode<synchronous>, transform_indices = @transform_5, window_bounds = array<i64: 1, 128>}, {pipeline_mode = #tpu.pipeline_mode<synchronous>, transform_indices = @transform_6, window_bounds = array<i64: 128, 128>}, {pipeline_mode = #tpu.pipeline_mode<synchronous>, transform_indices = @transform_7, window_bounds = array<i64: 1, 128>}, {pipeline_mode = #tpu.pipeline_mode<synchronous>, transform_indices = @transform_8, window_bounds = array<i64: 16, 128>}, {pipeline_mode = #tpu.pipeline_mode<synchronous>, transform_indices = @transform_9, window_bounds = array<i64: 1, 128>}, {pipeline_mode = #tpu.pipeline_mode<synchronous>, transform_indices = @transform_10, window_bounds = array<i64: 4, 128>}, {pipeline_mode = #tpu.pipeline_mode<synchronous>, transform_indices = @transform_11, window_bounds = array<i64: 9, 128>}, {pipeline_mode = #tpu.pipeline_mode<synchronous>, transform_indices = @transform_12, window_bounds = array<i64: 9, 9>}, {transform_indices = @transform_13, window_bounds = array<i64: 1, 1, 128>}, {transform_indices = @transform_14, window_bounds = array<i64: 1, 1, 128>}, {transform_indices = @transform_15, window_bounds = array<i64: 1, 128, 384>}, {transform_indices = @transform_16, window_bounds = array<i64: 1, 1, 384>}, {transform_indices = @transform_17, window_bounds = array<i64: 1, 128, 128>}, {transform_indices = @transform_18, window_bounds = array<i64: 1, 1, 128>}, {transform_indices = @transform_19, window_bounds = array<i64: 1, 1, 128>}, {transform_indices = @transform_20, window_bounds = array<i64: 1, 1, 128>}, {transform_indices = @transform_21, window_bounds = array<i64: 1, 128, 512>}, {transform_indices = @transform_22, window_bounds = array<i64: 1, 1, 512>}, {transform_indices = @transform_23, window_bounds = array<i64: 1, 512, 128>}, {transform_indices = @transform_24, window_bounds = array<i64: 1, 1, 128>}, {pipeline_mode = #tpu.pipeline_mode<synchronous>, transform_indices = @transform_25, window_bounds = array<i64: 1, 128>}, {pipeline_mode = #tpu.pipeline_mode<synchronous>, transform_indices = @transform_26, window_bounds = array<i64: 1, 128>}, {pipeline_mode = #tpu.pipeline_mode<synchronous>, transform_indices = @transform_27, window_bounds = array<i64: 128, 128>}, {pipeline_mode = #tpu.pipeline_mode<synchronous>, transform_indices = @transform_28, window_bounds = array<i64: 1, 128>}, {transform_indices = @transform_29, window_bounds = array<i64: 1, 9, 128>}]} {
    %c0_i32 = arith.constant 0 : i32
    %0 = arith.cmpi eq, %arg1, %c0_i32 : i32
    %1 = arith.extui %0 : i1 to i32
    %c0_i32_0 = arith.constant 0 : i32
    %2 = arith.cmpi ne, %1, %c0_i32_0 : i32
    scf.if %2 {
      %c0_65 = arith.constant 0 : index
      %c0_66 = arith.constant 0 : index
      %c0_67 = arith.constant 0 : index
      %130 = vector.load %arg2[%c0_65, %c0_66, %c0_67] : memref<1x32x16xf32, #tpu.memory_space<vmem>>, vector<1x32x16xf32>
      %131 = vector.shape_cast %130 : vector<1x32x16xf32> to vector<32x16xf32>
      %132 = arith.truncf %131 : vector<32x16xf32> to vector<32x16xbf16>
      %c0_68 = arith.constant 0 : index
      %c0_69 = arith.constant 0 : index
      %133 = vector.load %arg6[%c0_68, %c0_69] : memref<16x128xbf16, #tpu.memory_space<vmem>>, vector<16x128xbf16>
      %cst_70 = arith.constant dense<0.000000e+00> : vector<32x128xf32>
      %134 = tpu.matmul %132, %133, %cst_70 {dimension_numbers = #tpu.dot_dimension_numbers<[1], [0], [0], [1], [0, 0, 1, 1], [], []>} : vector<32x16xbf16>, vector<16x128xbf16>, vector<32x128xf32> -> vector<32x128xf32>
      %c0_71 = arith.constant 0 : index
      %c0_72 = arith.constant 0 : index
      %135 = vector.load %arg7[%c0_71, %c0_72] : memref<1x128xf32, #tpu.memory_space<vmem>>, vector<1x128xf32>
      %136 = vector.broadcast %135 : vector<1x128xf32> to vector<32x128xf32>
      %137 = arith.addf %134, %136 : vector<32x128xf32>
      %cst_73 = arith.constant 0.000000e+00 : f32
      %138 = vector.broadcast %cst_73 : f32 to vector<32x128xf32>
      %139 = arith.maximumf %137, %138 : vector<32x128xf32>
      %140 = arith.truncf %139 : vector<32x128xf32> to vector<32x128xbf16>
      %c0_74 = arith.constant 0 : index
      %c0_75 = arith.constant 0 : index
      %141 = vector.load %arg8[%c0_74, %c0_75] : memref<128x128xbf16, #tpu.memory_space<vmem>>, vector<128x128xbf16>
      %cst_76 = arith.constant dense<0.000000e+00> : vector<32x128xf32>
      %142 = tpu.matmul %140, %141, %cst_76 {dimension_numbers = #tpu.dot_dimension_numbers<[1], [0], [0], [1], [0, 0, 1, 1], [], []>} : vector<32x128xbf16>, vector<128x128xbf16>, vector<32x128xf32> -> vector<32x128xf32>
      %c0_77 = arith.constant 0 : index
      %c0_78 = arith.constant 0 : index
      %143 = vector.load %arg9[%c0_77, %c0_78] : memref<1x128xf32, #tpu.memory_space<vmem>>, vector<1x128xf32>
      %144 = vector.broadcast %143 : vector<1x128xf32> to vector<32x128xf32>
      %145 = arith.addf %142, %144 : vector<32x128xf32>
      %cst_79 = arith.constant 0.000000e+00 : f32
      %146 = vector.broadcast %cst_79 : f32 to vector<32x128xf32>
      %147 = arith.maximumf %145, %146 : vector<32x128xf32>
      %c0_80 = arith.constant 0 : index
      %c0_81 = arith.constant 0 : index
      %c0_82 = arith.constant 0 : index
      %148 = vector.load %arg3[%c0_80, %c0_81, %c0_82] : memref<1x4x8xf32, #tpu.memory_space<vmem>>, vector<1x4x8xf32>
      %149 = vector.shape_cast %148 : vector<1x4x8xf32> to vector<4x8xf32>
      %cst_83 = arith.constant dense<0.000000e+00> : vector<4xf32>
      %150 = vector.multi_reduction <add>, %149, %cst_83 [1] : vector<4x8xf32> to vector<4xf32>
      %151 = vector.shape_cast %150 : vector<4xf32> to vector<4x1xf32>
      %cst_84 = arith.constant 9.99999997E-7 : f32
      %152 = vector.broadcast %cst_84 : f32 to vector<4x1xf32>
      %153 = arith.addf %151, %152 : vector<4x1xf32>
      %c0_85 = arith.constant 0 : index
      %c0_86 = arith.constant 0 : index
      %c0_87 = arith.constant 0 : index
      %154 = vector.load %arg4[%c0_85, %c0_86, %c0_87] : memref<1x1x16xf32, #tpu.memory_space<vmem>>, vector<1x1x16xf32>
      %155 = vector.shape_cast %154 : vector<1x1x16xf32> to vector<1x16xf32>
      %156 = arith.truncf %155 : vector<1x16xf32> to vector<1x16xbf16>
      %c0_88 = arith.constant 0 : index
      %c0_89 = arith.constant 0 : index
      %157 = vector.load %arg10[%c0_88, %c0_89] : memref<16x128xbf16, #tpu.memory_space<vmem>>, vector<16x128xbf16>
      %cst_90 = arith.constant dense<0.000000e+00> : vector<1x128xf32>
      %158 = tpu.matmul %156, %157, %cst_90 {dimension_numbers = #tpu.dot_dimension_numbers<[1], [0], [0], [1], [0, 0, 1, 1], [], []>} : vector<1x16xbf16>, vector<16x128xbf16>, vector<1x128xf32> -> vector<1x128xf32>
      %c0_91 = arith.constant 0 : index
      %c0_92 = arith.constant 0 : index
      %159 = vector.load %arg11[%c0_91, %c0_92] : memref<1x128xf32, #tpu.memory_space<vmem>>, vector<1x128xf32>
      %160 = arith.addf %158, %159 : vector<1x128xf32>
      %c0_93 = arith.constant 0 : index
      %c0_94 = arith.constant 0 : index
      %c0_95 = arith.constant 0 : index
      %161 = vector.load %arg5[%c0_93, %c0_94, %c0_95] : memref<1x4x1xi32, #tpu.memory_space<vmem>>, vector<1x4x1xi32>
      %162 = vector.shape_cast %161 : vector<1x4x1xi32> to vector<4x1xi32>
      %163 = tpu.iota {dimensions = array<i32: 1>} : vector<4x4xi32>
      %164 = vector.broadcast %162 : vector<4x1xi32> to vector<4x4xi32>
      %165 = arith.cmpi eq, %163, %164 : vector<4x4xi32>
      %166 = arith.extui %165 : vector<4x4xi1> to vector<4x4xi32>
      %167 = arith.sitofp %166 : vector<4x4xi32> to vector<4x4xf32>
      %168 = arith.truncf %167 : vector<4x4xf32> to vector<4x4xbf16>
      %c0_96 = arith.constant 0 : index
      %c0_97 = arith.constant 0 : index
      %169 = vector.load %arg12[%c0_96, %c0_97] : memref<4x128xbf16, #tpu.memory_space<vmem>>, vector<4x128xbf16>
      %cst_98 = arith.constant dense<0.000000e+00> : vector<4x128xf32>
      %170 = tpu.matmul %168, %169, %cst_98 {dimension_numbers = #tpu.dot_dimension_numbers<[1], [0], [0], [1], [0, 0, 1, 1], [], []>} : vector<4x4xbf16>, vector<4x128xbf16>, vector<4x128xf32> -> vector<4x128xf32>
      %c0_99 = arith.constant 0 : index
      %c0_100 = arith.constant 0 : index
      %171 = vector.load %arg13[%c0_99, %c0_100] : memref<9x128xf32, #tpu.memory_space<vmem>>, vector<9x128xf32>
      %172 = vector.extract_strided_slice %171 {offsets = [0, 0], sizes = [1, 128], strides = [1, 1]} : vector<9x128xf32> to vector<1x128xf32>
      %173 = arith.addf %160, %172 : vector<1x128xf32>
      %c0_101 = arith.constant 0 : index
      %c0_102 = arith.constant 0 : index
      %174 = vector.load %arg32[%c0_101, %c0_102] : memref<9x128xf32, #tpu.memory_space<vmem>>, vector<1x128xf32>
      tpu.vector_store %arg32[%c0_101, %c0_102], %173 {strides = array<i32>} : memref<9x128xf32, #tpu.memory_space<vmem>>, vector<1x128xf32>,
      %175 = vector.extract_strided_slice %149 {offsets = [0, 0], sizes = [1, 8], strides = [1, 1]} : vector<4x8xf32> to vector<1x8xf32>
      %176 = vector.extract_strided_slice %147 {offsets = [0, 0], sizes = [8, 128], strides = [1, 1]} : vector<32x128xf32> to vector<8x128xf32>
      %cst_103 = arith.constant dense<0.000000e+00> : vector<1x128xf32>
      %177 = tpu.matmul %175, %176, %cst_103 {dimension_numbers = #tpu.dot_dimension_numbers<[1], [0], [0], [1], [0, 0, 1, 1], [], []>} : vector<1x8xf32>, vector<8x128xf32>, vector<1x128xf32> -> vector<1x128xf32>
      %178 = vector.extract_strided_slice %153 {offsets = [0, 0], sizes = [1, 1], strides = [1, 1]} : vector<4x1xf32> to vector<1x1xf32>
      %179 = vector.broadcast %178 : vector<1x1xf32> to vector<1x128xf32>
      %180 = arith.divf %177, %179 : vector<1x128xf32>
      %181 = vector.extract_strided_slice %171 {offsets = [1, 0], sizes = [1, 128], strides = [1, 1]} : vector<9x128xf32> to vector<1x128xf32>
      %182 = arith.addf %180, %181 : vector<1x128xf32>
      %c1 = arith.constant 1 : index
      %c0_104 = arith.constant 0 : index
      %183 = vector.load %arg32[%c1, %c0_104] : memref<9x128xf32, #tpu.memory_space<vmem>>, vector<1x128xf32>
      tpu.vector_store %arg32[%c1, %c0_104], %182 {strides = array<i32>} : memref<9x128xf32, #tpu.memory_space<vmem>>, vector<1x128xf32>,
      %184 = vector.extract_strided_slice %170 {offsets = [0, 0], sizes = [1, 128], strides = [1, 1]} : vector<4x128xf32> to vector<1x128xf32>
      %185 = vector.extract_strided_slice %171 {offsets = [2, 0], sizes = [1, 128], strides = [1, 1]} : vector<9x128xf32> to vector<1x128xf32>
      %186 = arith.addf %184, %185 : vector<1x128xf32>
      %c2 = arith.constant 2 : index
      %c0_105 = arith.constant 0 : index
      %187 = vector.load %arg32[%c2, %c0_105] : memref<9x128xf32, #tpu.memory_space<vmem>>, vector<1x128xf32>
      tpu.vector_store %arg32[%c2, %c0_105], %186 {strides = array<i32>} : memref<9x128xf32, #tpu.memory_space<vmem>>, vector<1x128xf32>,
      %188 = vector.extract_strided_slice %149 {offsets = [1, 0], sizes = [1, 8], strides = [1, 1]} : vector<4x8xf32> to vector<1x8xf32>
      %189 = vector.extract_strided_slice %147 {offsets = [8, 0], sizes = [8, 128], strides = [1, 1]} : vector<32x128xf32> to vector<8x128xf32>
      %cst_106 = arith.constant dense<0.000000e+00> : vector<1x128xf32>
      %190 = tpu.matmul %188, %189, %cst_106 {dimension_numbers = #tpu.dot_dimension_numbers<[1], [0], [0], [1], [0, 0, 1, 1], [], []>} : vector<1x8xf32>, vector<8x128xf32>, vector<1x128xf32> -> vector<1x128xf32>
      %191 = vector.extract_strided_slice %153 {offsets = [1, 0], sizes = [1, 1], strides = [1, 1]} : vector<4x1xf32> to vector<1x1xf32>
      %192 = vector.broadcast %191 : vector<1x1xf32> to vector<1x128xf32>
      %193 = arith.divf %190, %192 : vector<1x128xf32>
      %194 = vector.extract_strided_slice %171 {offsets = [3, 0], sizes = [1, 128], strides = [1, 1]} : vector<9x128xf32> to vector<1x128xf32>
      %195 = arith.addf %193, %194 : vector<1x128xf32>
      %c3 = arith.constant 3 : index
      %c0_107 = arith.constant 0 : index
      %196 = vector.load %arg32[%c3, %c0_107] : memref<9x128xf32, #tpu.memory_space<vmem>>, vector<1x128xf32>
      tpu.vector_store %arg32[%c3, %c0_107], %195 {strides = array<i32>} : memref<9x128xf32, #tpu.memory_space<vmem>>, vector<1x128xf32>,
      %197 = vector.extract_strided_slice %170 {offsets = [1, 0], sizes = [1, 128], strides = [1, 1]} : vector<4x128xf32> to vector<1x128xf32>
      %198 = vector.extract_strided_slice %171 {offsets = [4, 0], sizes = [1, 128], strides = [1, 1]} : vector<9x128xf32> to vector<1x128xf32>
      %199 = arith.addf %197, %198 : vector<1x128xf32>
      %c4 = arith.constant 4 : index
      %c0_108 = arith.constant 0 : index
      %200 = vector.load %arg32[%c4, %c0_108] : memref<9x128xf32, #tpu.memory_space<vmem>>, vector<1x128xf32>
      tpu.vector_store %arg32[%c4, %c0_108], %199 {strides = array<i32>} : memref<9x128xf32, #tpu.memory_space<vmem>>, vector<1x128xf32>,
      %201 = vector.extract_strided_slice %149 {offsets = [2, 0], sizes = [1, 8], strides = [1, 1]} : vector<4x8xf32> to vector<1x8xf32>
      %202 = vector.extract_strided_slice %147 {offsets = [16, 0], sizes = [8, 128], strides = [1, 1]} : vector<32x128xf32> to vector<8x128xf32>
      %cst_109 = arith.constant dense<0.000000e+00> : vector<1x128xf32>
      %203 = tpu.matmul %201, %202, %cst_109 {dimension_numbers = #tpu.dot_dimension_numbers<[1], [0], [0], [1], [0, 0, 1, 1], [], []>} : vector<1x8xf32>, vector<8x128xf32>, vector<1x128xf32> -> vector<1x128xf32>
      %204 = vector.extract_strided_slice %153 {offsets = [2, 0], sizes = [1, 1], strides = [1, 1]} : vector<4x1xf32> to vector<1x1xf32>
      %205 = vector.broadcast %204 : vector<1x1xf32> to vector<1x128xf32>
      %206 = arith.divf %203, %205 : vector<1x128xf32>
      %207 = vector.extract_strided_slice %171 {offsets = [5, 0], sizes = [1, 128], strides = [1, 1]} : vector<9x128xf32> to vector<1x128xf32>
      %208 = arith.addf %206, %207 : vector<1x128xf32>
      %c5 = arith.constant 5 : index
      %c0_110 = arith.constant 0 : index
      %209 = vector.load %arg32[%c5, %c0_110] : memref<9x128xf32, #tpu.memory_space<vmem>>, vector<1x128xf32>
      tpu.vector_store %arg32[%c5, %c0_110], %208 {strides = array<i32>} : memref<9x128xf32, #tpu.memory_space<vmem>>, vector<1x128xf32>,
      %210 = vector.extract_strided_slice %170 {offsets = [2, 0], sizes = [1, 128], strides = [1, 1]} : vector<4x128xf32> to vector<1x128xf32>
      %211 = vector.extract_strided_slice %171 {offsets = [6, 0], sizes = [1, 128], strides = [1, 1]} : vector<9x128xf32> to vector<1x128xf32>
      %212 = arith.addf %210, %211 : vector<1x128xf32>
      %c6 = arith.constant 6 : index
      %c0_111 = arith.constant 0 : index
      %213 = vector.load %arg32[%c6, %c0_111] : memref<9x128xf32, #tpu.memory_space<vmem>>, vector<1x128xf32>
      tpu.vector_store %arg32[%c6, %c0_111], %212 {strides = array<i32>} : memref<9x128xf32, #tpu.memory_space<vmem>>, vector<1x128xf32>,
      %214 = vector.extract_strided_slice %149 {offsets = [3, 0], sizes = [1, 8], strides = [1, 1]} : vector<4x8xf32> to vector<1x8xf32>
      %215 = vector.extract_strided_slice %147 {offsets = [24, 0], sizes = [8, 128], strides = [1, 1]} : vector<32x128xf32> to vector<8x128xf32>
      %cst_112 = arith.constant dense<0.000000e+00> : vector<1x128xf32>
      %216 = tpu.matmul %214, %215, %cst_112 {dimension_numbers = #tpu.dot_dimension_numbers<[1], [0], [0], [1], [0, 0, 1, 1], [], []>} : vector<1x8xf32>, vector<8x128xf32>, vector<1x128xf32> -> vector<1x128xf32>
      %217 = vector.extract_strided_slice %153 {offsets = [3, 0], sizes = [1, 1], strides = [1, 1]} : vector<4x1xf32> to vector<1x1xf32>
      %218 = vector.broadcast %217 : vector<1x1xf32> to vector<1x128xf32>
      %219 = arith.divf %216, %218 : vector<1x128xf32>
      %220 = vector.extract_strided_slice %171 {offsets = [7, 0], sizes = [1, 128], strides = [1, 1]} : vector<9x128xf32> to vector<1x128xf32>
      %221 = arith.addf %219, %220 : vector<1x128xf32>
      %c7 = arith.constant 7 : index
      %c0_113 = arith.constant 0 : index
      %222 = vector.load %arg32[%c7, %c0_113] : memref<9x128xf32, #tpu.memory_space<vmem>>, vector<1x128xf32>
      tpu.vector_store %arg32[%c7, %c0_113], %221 {strides = array<i32>} : memref<9x128xf32, #tpu.memory_space<vmem>>, vector<1x128xf32>,
      %223 = vector.extract_strided_slice %170 {offsets = [3, 0], sizes = [1, 128], strides = [1, 1]} : vector<4x128xf32> to vector<1x128xf32>
      %224 = vector.extract_strided_slice %171 {offsets = [8, 0], sizes = [1, 128], strides = [1, 1]} : vector<9x128xf32> to vector<1x128xf32>
      %225 = arith.addf %223, %224 : vector<1x128xf32>
      %c8 = arith.constant 8 : index
      %c0_114 = arith.constant 0 : index
      %226 = vector.load %arg32[%c8, %c0_114] : memref<9x128xf32, #tpu.memory_space<vmem>>, vector<1x128xf32>
      tpu.vector_store %arg32[%c8, %c0_114], %225 {strides = array<i32>} : memref<9x128xf32, #tpu.memory_space<vmem>>, vector<1x128xf32>,
    } else {
    }
    %c0 = arith.constant 0 : index
    %c0_1 = arith.constant 0 : index
    %3 = vector.load %arg32[%c0, %c0_1] : memref<9x128xf32, #tpu.memory_space<vmem>>, vector<9x128xf32>
    %c0_2 = arith.constant 0 : index
    %c0_3 = arith.constant 0 : index
    %c0_4 = arith.constant 0 : index
    %4 = vector.load %arg15[%c0_2, %c0_3, %c0_4] : memref<1x1x128xf32, #tpu.memory_space<vmem>>, vector<1x1x128xf32>
    %5 = vector.shape_cast %4 : vector<1x1x128xf32> to vector<1x128xf32>
    %c0_5 = arith.constant 0 : index
    %c0_6 = arith.constant 0 : index
    %c0_7 = arith.constant 0 : index
    %6 = vector.load %arg16[%c0_5, %c0_6, %c0_7] : memref<1x1x128xf32, #tpu.memory_space<vmem>>, vector<1x1x128xf32>
    %7 = vector.shape_cast %6 : vector<1x1x128xf32> to vector<1x128xf32>
    %cst = arith.constant dense<0.000000e+00> : vector<9xf32>
    %8 = vector.multi_reduction <add>, %3, %cst [1] : vector<9x128xf32> to vector<9xf32>
    %9 = vector.shape_cast %8 : vector<9xf32> to vector<9x1xf32>
    %cst_8 = arith.constant 1.280000e+02 : f32
    %10 = vector.broadcast %cst_8 : f32 to vector<9x1xf32>
    %11 = arith.divf %9, %10 : vector<9x1xf32>
    %12 = vector.broadcast %11 : vector<9x1xf32> to vector<9x128xf32>
    %13 = arith.subf %3, %12 : vector<9x128xf32>
    %14 = arith.mulf %13, %13 : vector<9x128xf32>
    %cst_9 = arith.constant dense<0.000000e+00> : vector<9xf32>
    %15 = vector.multi_reduction <add>, %14, %cst_9 [1] : vector<9x128xf32> to vector<9xf32>
    %16 = vector.shape_cast %15 : vector<9xf32> to vector<9x1xf32>
    %cst_10 = arith.constant 1.280000e+02 : f32
    %17 = vector.broadcast %cst_10 : f32 to vector<9x1xf32>
    %18 = arith.divf %16, %17 : vector<9x1xf32>
    %19 = vector.broadcast %11 : vector<9x1xf32> to vector<9x128xf32>
    %20 = arith.subf %3, %19 : vector<9x128xf32>
    %cst_11 = arith.constant 9.99999974E-6 : f32
    %21 = vector.broadcast %cst_11 : f32 to vector<9x1xf32>
    %22 = arith.addf %18, %21 : vector<9x1xf32>
    %23 = math.rsqrt %22 : vector<9x1xf32>
    %24 = vector.broadcast %23 : vector<9x1xf32> to vector<9x128xf32>
    %25 = arith.mulf %20, %24 : vector<9x128xf32>
    %26 = vector.broadcast %5 : vector<1x128xf32> to vector<9x128xf32>
    %27 = arith.mulf %25, %26 : vector<9x128xf32>
    %28 = vector.broadcast %7 : vector<1x128xf32> to vector<9x128xf32>
    %29 = arith.addf %27, %28 : vector<9x128xf32>
    %30 = arith.truncf %29 : vector<9x128xf32> to vector<9x128xbf16>
    %c0_12 = arith.constant 0 : index
    %c0_13 = arith.constant 0 : index
    %c0_14 = arith.constant 0 : index
    %31 = vector.load %arg17[%c0_12, %c0_13, %c0_14] : memref<1x128x384xbf16, #tpu.memory_space<vmem>>, vector<1x128x384xbf16>
    %32 = vector.shape_cast %31 : vector<1x128x384xbf16> to vector<128x384xbf16>
    %cst_15 = arith.constant dense<0.000000e+00> : vector<9x384xf32>
    %33 = tpu.matmul %30, %32, %cst_15 {dimension_numbers = #tpu.dot_dimension_numbers<[1], [0], [0], [1], [0, 0, 1, 1], [], []>} : vector<9x128xbf16>, vector<128x384xbf16>, vector<9x384xf32> -> vector<9x384xf32>
    %c0_16 = arith.constant 0 : index
    %c0_17 = arith.constant 0 : index
    %c0_18 = arith.constant 0 : index
    %34 = vector.load %arg18[%c0_16, %c0_17, %c0_18] : memref<1x1x384xf32, #tpu.memory_space<vmem>>, vector<1x1x384xf32>
    %35 = vector.shape_cast %34 : vector<1x1x384xf32> to vector<1x384xf32>
    %36 = vector.broadcast %35 : vector<1x384xf32> to vector<9x384xf32>
    %37 = arith.addf %33, %36 : vector<9x384xf32>
    %38 = vector.extract_strided_slice %37 {offsets = [0, 0], sizes = [9, 128], strides = [1, 1]} : vector<9x384xf32> to vector<9x128xf32>
    %39 = vector.extract_strided_slice %37 {offsets = [0, 128], sizes = [9, 128], strides = [1, 1]} : vector<9x384xf32> to vector<9x128xf32>
    %40 = vector.extract_strided_slice %37 {offsets = [0, 256], sizes = [9, 128], strides = [1, 1]} : vector<9x384xf32> to vector<9x128xf32>
    %41 = arith.truncf %38 : vector<9x128xf32> to vector<9x128xbf16>
    %42 = arith.truncf %39 : vector<9x128xf32> to vector<9x128xbf16>
    %cst_19 = arith.constant dense<0.000000e+00> : vector<9x9xf32>
    %43 = tpu.matmul %41, %42, %cst_19 {dimension_numbers = #tpu.dot_dimension_numbers<[1], [1], [0], [0], [0, 0, 1, 0], [], []>} : vector<9x128xbf16>, vector<9x128xbf16>, vector<9x9xf32> -> vector<9x9xf32>
    %cst_20 = arith.constant 0.0883883461 : f32
    %44 = vector.broadcast %cst_20 : f32 to vector<9x9xf32>
    %45 = arith.mulf %43, %44 : vector<9x9xf32>
    %c0_21 = arith.constant 0 : index
    %c0_22 = arith.constant 0 : index
    %46 = vector.load %arg14[%c0_21, %c0_22] : memref<9x9xf32, #tpu.memory_space<vmem>>, vector<9x9xf32>
    %47 = arith.addf %45, %46 : vector<9x9xf32>
    %cst_23 = arith.constant dense<0xFF800000> : vector<9xf32>
    %48 = vector.multi_reduction <maximumf>, %47, %cst_23 [1] : vector<9x9xf32> to vector<9xf32>
    %49 = vector.shape_cast %48 : vector<9xf32> to vector<9x1xf32>
    %50 = vector.broadcast %49 : vector<9x1xf32> to vector<9x9xf32>
    %51 = arith.subf %47, %50 : vector<9x9xf32>
    %52 = math.exp %51 : vector<9x9xf32>
    %cst_24 = arith.constant dense<0.000000e+00> : vector<9xf32>
    %53 = vector.multi_reduction <add>, %52, %cst_24 [1] : vector<9x9xf32> to vector<9xf32>
    %54 = vector.shape_cast %53 : vector<9xf32> to vector<9x1xf32>
    %55 = tpu.reciprocal %54 {approx = true} : vector<9x1xf32> -> vector<9x1xf32>
    %56 = vector.broadcast %55 : vector<9x1xf32> to vector<9x9xf32>
    %57 = arith.mulf %52, %56 : vector<9x9xf32>
    %58 = arith.truncf %57 : vector<9x9xf32> to vector<9x9xbf16>
    %59 = arith.truncf %40 : vector<9x128xf32> to vector<9x128xbf16>
    %cst_25 = arith.constant dense<0.000000e+00> : vector<9x128xf32>
    %60 = tpu.matmul %58, %59, %cst_25 {dimension_numbers = #tpu.dot_dimension_numbers<[1], [0], [0], [1], [0, 0, 1, 1], [], []>} : vector<9x9xbf16>, vector<9x128xbf16>, vector<9x128xf32> -> vector<9x128xf32>
    %61 = arith.truncf %60 : vector<9x128xf32> to vector<9x128xbf16>
    %c0_26 = arith.constant 0 : index
    %c0_27 = arith.constant 0 : index
    %c0_28 = arith.constant 0 : index
    %62 = vector.load %arg19[%c0_26, %c0_27, %c0_28] : memref<1x128x128xbf16, #tpu.memory_space<vmem>>, vector<1x128x128xbf16>
    %63 = vector.shape_cast %62 : vector<1x128x128xbf16> to vector<128x128xbf16>
    %cst_29 = arith.constant dense<0.000000e+00> : vector<9x128xf32>
    %64 = tpu.matmul %61, %63, %cst_29 {dimension_numbers = #tpu.dot_dimension_numbers<[1], [0], [0], [1], [0, 0, 1, 1], [], []>} : vector<9x128xbf16>, vector<128x128xbf16>, vector<9x128xf32> -> vector<9x128xf32>
    %c0_30 = arith.constant 0 : index
    %c0_31 = arith.constant 0 : index
    %c0_32 = arith.constant 0 : index
    %65 = vector.load %arg20[%c0_30, %c0_31, %c0_32] : memref<1x1x128xf32, #tpu.memory_space<vmem>>, vector<1x1x128xf32>
    %66 = vector.shape_cast %65 : vector<1x1x128xf32> to vector<1x128xf32>
    %67 = vector.broadcast %66 : vector<1x128xf32> to vector<9x128xf32>
    %68 = arith.addf %64, %67 : vector<9x128xf32>
    %69 = arith.addf %3, %68 : vector<9x128xf32>
    %c0_33 = arith.constant 0 : index
    %c0_34 = arith.constant 0 : index
    %c0_35 = arith.constant 0 : index
    %70 = vector.load %arg21[%c0_33, %c0_34, %c0_35] : memref<1x1x128xf32, #tpu.memory_space<vmem>>, vector<1x1x128xf32>
    %71 = vector.shape_cast %70 : vector<1x1x128xf32> to vector<1x128xf32>
    %c0_36 = arith.constant 0 : index
    %c0_37 = arith.constant 0 : index
    %c0_38 = arith.constant 0 : index
    %72 = vector.load %arg22[%c0_36, %c0_37, %c0_38] : memref<1x1x128xf32, #tpu.memory_space<vmem>>, vector<1x1x128xf32>
    %73 = vector.shape_cast %72 : vector<1x1x128xf32> to vector<1x128xf32>
    %cst_39 = arith.constant dense<0.000000e+00> : vector<9xf32>
    %74 = vector.multi_reduction <add>, %69, %cst_39 [1] : vector<9x128xf32> to vector<9xf32>
    %75 = vector.shape_cast %74 : vector<9xf32> to vector<9x1xf32>
    %cst_40 = arith.constant 1.280000e+02 : f32
    %76 = vector.broadcast %cst_40 : f32 to vector<9x1xf32>
    %77 = arith.divf %75, %76 : vector<9x1xf32>
    %78 = vector.broadcast %77 : vector<9x1xf32> to vector<9x128xf32>
    %79 = arith.subf %69, %78 : vector<9x128xf32>
    %80 = arith.mulf %79, %79 : vector<9x128xf32>
    %cst_41 = arith.constant dense<0.000000e+00> : vector<9xf32>
    %81 = vector.multi_reduction <add>, %80, %cst_41 [1] : vector<9x128xf32> to vector<9xf32>
    %82 = vector.shape_cast %81 : vector<9xf32> to vector<9x1xf32>
    %cst_42 = arith.constant 1.280000e+02 : f32
    %83 = vector.broadcast %cst_42 : f32 to vector<9x1xf32>
    %84 = arith.divf %82, %83 : vector<9x1xf32>
    %85 = vector.broadcast %77 : vector<9x1xf32> to vector<9x128xf32>
    %86 = arith.subf %69, %85 : vector<9x128xf32>
    %cst_43 = arith.constant 9.99999974E-6 : f32
    %87 = vector.broadcast %cst_43 : f32 to vector<9x1xf32>
    %88 = arith.addf %84, %87 : vector<9x1xf32>
    %89 = math.rsqrt %88 : vector<9x1xf32>
    %90 = vector.broadcast %89 : vector<9x1xf32> to vector<9x128xf32>
    %91 = arith.mulf %86, %90 : vector<9x128xf32>
    %92 = vector.broadcast %71 : vector<1x128xf32> to vector<9x128xf32>
    %93 = arith.mulf %91, %92 : vector<9x128xf32>
    %94 = vector.broadcast %73 : vector<1x128xf32> to vector<9x128xf32>
    %95 = arith.addf %93, %94 : vector<9x128xf32>
    %96 = arith.truncf %95 : vector<9x128xf32> to vector<9x128xbf16>
    %c0_44 = arith.constant 0 : index
    %c0_45 = arith.constant 0 : index
    %c0_46 = arith.constant 0 : index
    %97 = vector.load %arg23[%c0_44, %c0_45, %c0_46] : memref<1x128x512xbf16, #tpu.memory_space<vmem>>, vector<1x128x512xbf16>
    %98 = vector.shape_cast %97 : vector<1x128x512xbf16> to vector<128x512xbf16>
    %cst_47 = arith.constant dense<0.000000e+00> : vector<9x512xf32>
    %99 = tpu.matmul %96, %98, %cst_47 {dimension_numbers = #tpu.dot_dimension_numbers<[1], [0], [0], [1], [0, 0, 1, 1], [], []>} : vector<9x128xbf16>, vector<128x512xbf16>, vector<9x512xf32> -> vector<9x512xf32>
    %c0_48 = arith.constant 0 : index
    %c0_49 = arith.constant 0 : index
    %c0_50 = arith.constant 0 : index
    %100 = vector.load %arg24[%c0_48, %c0_49, %c0_50] : memref<1x1x512xf32, #tpu.memory_space<vmem>>, vector<1x1x512xf32>
    %101 = vector.shape_cast %100 : vector<1x1x512xf32> to vector<1x512xf32>
    %102 = vector.broadcast %101 : vector<1x512xf32> to vector<9x512xf32>
    %103 = arith.addf %99, %102 : vector<9x512xf32>
    %104 = arith.mulf %103, %103 : vector<9x512xf32>
    %105 = arith.mulf %103, %104 : vector<9x512xf32>
    %cst_51 = arith.constant 4.471500e-02 : f32
    %106 = vector.broadcast %cst_51 : f32 to vector<9x512xf32>
    %107 = arith.mulf %106, %105 : vector<9x512xf32>
    %108 = arith.addf %103, %107 : vector<9x512xf32>
    %cst_52 = arith.constant 0.797884583 : f32
    %109 = vector.broadcast %cst_52 : f32 to vector<9x512xf32>
    %110 = arith.mulf %109, %108 : vector<9x512xf32>
    %111 = math.tanh %110 : vector<9x512xf32>
    %cst_53 = arith.constant 1.000000e+00 : f32
    %112 = vector.broadcast %cst_53 : f32 to vector<9x512xf32>
    %113 = arith.addf %112, %111 : vector<9x512xf32>
    %cst_54 = arith.constant 5.000000e-01 : f32
    %114 = vector.broadcast %cst_54 : f32 to vector<9x512xf32>
    %115 = arith.mulf %114, %113 : vector<9x512xf32>
    %116 = arith.mulf %103, %115 : vector<9x512xf32>
    %117 = arith.truncf %116 : vector<9x512xf32> to vector<9x512xbf16>
    %c0_55 = arith.constant 0 : index
    %c0_56 = arith.constant 0 : index
    %c0_57 = arith.constant 0 : index
    %118 = vector.load %arg25[%c0_55, %c0_56, %c0_57] : memref<1x512x128xbf16, #tpu.memory_space<vmem>>, vector<1x512x128xbf16>
    %119 = vector.shape_cast %118 : vector<1x512x128xbf16> to vector<512x128xbf16>
    %cst_58 = arith.constant dense<0.000000e+00> : vector<9x128xf32>
    %120 = tpu.matmul %117, %119, %cst_58 {dimension_numbers = #tpu.dot_dimension_numbers<[1], [0], [0], [1], [0, 0, 1, 1], [], []>} : vector<9x512xbf16>, vector<512x128xbf16>, vector<9x128xf32> -> vector<9x128xf32>
    %c0_59 = arith.constant 0 : index
    %c0_60 = arith.constant 0 : index
    %c0_61 = arith.constant 0 : index
    %121 = vector.load %arg26[%c0_59, %c0_60, %c0_61] : memref<1x1x128xf32, #tpu.memory_space<vmem>>, vector<1x1x128xf32>
    %122 = vector.shape_cast %121 : vector<1x1x128xf32> to vector<1x128xf32>
    %123 = vector.broadcast %122 : vector<1x128xf32> to vector<9x128xf32>
    %124 = arith.addf %120, %123 : vector<9x128xf32>
    %125 = arith.addf %69, %124 : vector<9x128xf32>
    %c0_62 = arith.constant 0 : index
    %c0_63 = arith.constant 0 : index
    %126 = vector.load %arg32[%c0_62, %c0_63] : memref<9x128xf32, #tpu.memory_space<vmem>>, vector<9x128xf32>
    tpu.vector_store %arg32[%c0_62, %c0_63], %125 {strides = array<i32>} : memref<9x128xf32, #tpu.memory_space<vmem>>, vector<9x128xf32>,
    %c1_i32 = arith.constant 1 : i32
    %127 = arith.cmpi eq, %arg1, %c1_i32 : i32
    %128 = arith.extui %127 : i1 to i32
    %c0_i32_64 = arith.constant 0 : i32
    %129 = arith.cmpi ne, %128, %c0_i32_64 : i32
    scf.if %129 {
      %c0_65 = arith.constant 0 : index
      %c0_66 = arith.constant 0 : index
      %130 = vector.load %arg27[%c0_65, %c0_66] : memref<1x128xf32, #tpu.memory_space<vmem>>, vector<1x128xf32>
      %c0_67 = arith.constant 0 : index
      %c0_68 = arith.constant 0 : index
      %131 = vector.load %arg28[%c0_67, %c0_68] : memref<1x128xf32, #tpu.memory_space<vmem>>, vector<1x128xf32>
      %cst_69 = arith.constant dense<0.000000e+00> : vector<9xf32>
      %132 = vector.multi_reduction <add>, %125, %cst_69 [1] : vector<9x128xf32> to vector<9xf32>
      %133 = vector.shape_cast %132 : vector<9xf32> to vector<9x1xf32>
      %cst_70 = arith.constant 1.280000e+02 : f32
      %134 = vector.broadcast %cst_70 : f32 to vector<9x1xf32>
      %135 = arith.divf %133, %134 : vector<9x1xf32>
      %136 = vector.broadcast %135 : vector<9x1xf32> to vector<9x128xf32>
      %137 = arith.subf %125, %136 : vector<9x128xf32>
      %138 = arith.mulf %137, %137 : vector<9x128xf32>
      %cst_71 = arith.constant dense<0.000000e+00> : vector<9xf32>
      %139 = vector.multi_reduction <add>, %138, %cst_71 [1] : vector<9x128xf32> to vector<9xf32>
      %140 = vector.shape_cast %139 : vector<9xf32> to vector<9x1xf32>
      %cst_72 = arith.constant 1.280000e+02 : f32
      %141 = vector.broadcast %cst_72 : f32 to vector<9x1xf32>
      %142 = arith.divf %140, %141 : vector<9x1xf32>
      %143 = vector.broadcast %135 : vector<9x1xf32> to vector<9x128xf32>
      %144 = arith.subf %125, %143 : vector<9x128xf32>
      %cst_73 = arith.constant 9.99999974E-6 : f32
      %145 = vector.broadcast %cst_73 : f32 to vector<9x1xf32>
      %146 = arith.addf %142, %145 : vector<9x1xf32>
      %147 = math.rsqrt %146 : vector<9x1xf32>
      %148 = vector.broadcast %147 : vector<9x1xf32> to vector<9x128xf32>
      %149 = arith.mulf %144, %148 : vector<9x128xf32>
      %150 = vector.broadcast %130 : vector<1x128xf32> to vector<9x128xf32>
      %151 = arith.mulf %149, %150 : vector<9x128xf32>
      %152 = vector.broadcast %131 : vector<1x128xf32> to vector<9x128xf32>
      %153 = arith.addf %151, %152 : vector<9x128xf32>
      %154 = arith.truncf %153 : vector<9x128xf32> to vector<9x128xbf16>
      %c0_74 = arith.constant 0 : index
      %c0_75 = arith.constant 0 : index
      %155 = vector.load %arg29[%c0_74, %c0_75] : memref<128x128xbf16, #tpu.memory_space<vmem>>, vector<128x128xbf16>
      %cst_76 = arith.constant dense<0.000000e+00> : vector<9x128xf32>
      %156 = tpu.matmul %154, %155, %cst_76 {dimension_numbers = #tpu.dot_dimension_numbers<[1], [0], [0], [1], [0, 0, 1, 1], [], []>} : vector<9x128xbf16>, vector<128x128xbf16>, vector<9x128xf32> -> vector<9x128xf32>
      %c0_77 = arith.constant 0 : index
      %c0_78 = arith.constant 0 : index
      %157 = vector.load %arg30[%c0_77, %c0_78] : memref<1x128xf32, #tpu.memory_space<vmem>>, vector<1x128xf32>
      %158 = vector.broadcast %157 : vector<1x128xf32> to vector<9x128xf32>
      %159 = arith.addf %156, %158 : vector<9x128xf32>
      %c0_79 = arith.constant 0 : index
      %c0_80 = arith.constant 0 : index
      %c0_81 = arith.constant 0 : index
      %160 = vector.load %arg31[%c0_79, %c0_80, %c0_81] : memref<1x9x128xf32, #tpu.memory_space<vmem>>, vector<1x9x128xf32>
      %161 = vector.shape_cast %160 : vector<1x9x128xf32> to vector<9x128xf32>
      %162 = vector.shape_cast %159 : vector<9x128xf32> to vector<1x9x128xf32>
      tpu.vector_store %arg31[%c0_79, %c0_80, %c0_81], %162 {strides = array<i32>} : memref<1x9x128xf32, #tpu.memory_space<vmem>>, vector<1x9x128xf32>,
    } else {
    }
    return
  }
  func.func @transform_0(%arg0: i32, %arg1: i32) -> (i32, i32, i32) {
    %c0_i32 = arith.constant 0 : i32
    %c0_i32_0 = arith.constant 0 : i32
    %c0_i32_1 = arith.constant 0 : i32
    return %arg0, %c0_i32, %c0_i32_0 : i32, i32, i32
  }
  func.func @transform_1(%arg0: i32, %arg1: i32) -> (i32, i32, i32) {
    %c0_i32 = arith.constant 0 : i32
    %c0_i32_0 = arith.constant 0 : i32
    %c0_i32_1 = arith.constant 0 : i32
    return %arg0, %c0_i32, %c0_i32_0 : i32, i32, i32
  }
  func.func @transform_2(%arg0: i32, %arg1: i32) -> (i32, i32, i32) {
    %c0_i32 = arith.constant 0 : i32
    %c0_i32_0 = arith.constant 0 : i32
    %c0_i32_1 = arith.constant 0 : i32
    return %arg0, %c0_i32, %c0_i32_0 : i32, i32, i32
  }
  func.func @transform_3(%arg0: i32, %arg1: i32) -> (i32, i32, i32) {
    %c0_i32 = arith.constant 0 : i32
    %c0_i32_0 = arith.constant 0 : i32
    %c0_i32_1 = arith.constant 0 : i32
    return %arg0, %c0_i32, %c0_i32_0 : i32, i32, i32
  }
  func.func @transform_4(%arg0: i32, %arg1: i32) -> (i32, i32) {
    %c0_i32 = arith.constant 0 : i32
    %c0_i32_0 = arith.constant 0 : i32
    %c0_i32_1 = arith.constant 0 : i32
    return %c0_i32, %c0_i32_0 : i32, i32
  }
  func.func @transform_5(%arg0: i32, %arg1: i32) -> (i32, i32) {
    %c0_i32 = arith.constant 0 : i32
    %c0_i32_0 = arith.constant 0 : i32
    %c0_i32_1 = arith.constant 0 : i32
    return %c0_i32, %c0_i32_0 : i32, i32
  }
  func.func @transform_6(%arg0: i32, %arg1: i32) -> (i32, i32) {
    %c0_i32 = arith.constant 0 : i32
    %c0_i32_0 = arith.constant 0 : i32
    %c0_i32_1 = arith.constant 0 : i32
    return %c0_i32, %c0_i32_0 : i32, i32
  }
  func.func @transform_7(%arg0: i32, %arg1: i32) -> (i32, i32) {
    %c0_i32 = arith.constant 0 : i32
    %c0_i32_0 = arith.constant 0 : i32
    %c0_i32_1 = arith.constant 0 : i32
    return %c0_i32, %c0_i32_0 : i32, i32
  }
  func.func @transform_8(%arg0: i32, %arg1: i32) -> (i32, i32) {
    %c0_i32 = arith.constant 0 : i32
    %c0_i32_0 = arith.constant 0 : i32
    %c0_i32_1 = arith.constant 0 : i32
    return %c0_i32, %c0_i32_0 : i32, i32
  }
  func.func @transform_9(%arg0: i32, %arg1: i32) -> (i32, i32) {
    %c0_i32 = arith.constant 0 : i32
    %c0_i32_0 = arith.constant 0 : i32
    %c0_i32_1 = arith.constant 0 : i32
    return %c0_i32, %c0_i32_0 : i32, i32
  }
  func.func @transform_10(%arg0: i32, %arg1: i32) -> (i32, i32) {
    %c0_i32 = arith.constant 0 : i32
    %c0_i32_0 = arith.constant 0 : i32
    %c0_i32_1 = arith.constant 0 : i32
    return %c0_i32, %c0_i32_0 : i32, i32
  }
  func.func @transform_11(%arg0: i32, %arg1: i32) -> (i32, i32) {
    %c0_i32 = arith.constant 0 : i32
    %c0_i32_0 = arith.constant 0 : i32
    %c0_i32_1 = arith.constant 0 : i32
    return %c0_i32, %c0_i32_0 : i32, i32
  }
  func.func @transform_12(%arg0: i32, %arg1: i32) -> (i32, i32) {
    %c0_i32 = arith.constant 0 : i32
    %c0_i32_0 = arith.constant 0 : i32
    %c0_i32_1 = arith.constant 0 : i32
    return %c0_i32, %c0_i32_0 : i32, i32
  }
  func.func @transform_13(%arg0: i32, %arg1: i32) -> (i32, i32, i32) {
    %c0_i32 = arith.constant 0 : i32
    %c0_i32_0 = arith.constant 0 : i32
    %c0_i32_1 = arith.constant 0 : i32
    return %arg1, %c0_i32, %c0_i32_0 : i32, i32, i32
  }
  func.func @transform_14(%arg0: i32, %arg1: i32) -> (i32, i32, i32) {
    %c0_i32 = arith.constant 0 : i32
    %c0_i32_0 = arith.constant 0 : i32
    %c0_i32_1 = arith.constant 0 : i32
    return %arg1, %c0_i32, %c0_i32_0 : i32, i32, i32
  }
  func.func @transform_15(%arg0: i32, %arg1: i32) -> (i32, i32, i32) {
    %c0_i32 = arith.constant 0 : i32
    %c0_i32_0 = arith.constant 0 : i32
    %c0_i32_1 = arith.constant 0 : i32
    return %arg1, %c0_i32, %c0_i32_0 : i32, i32, i32
  }
  func.func @transform_16(%arg0: i32, %arg1: i32) -> (i32, i32, i32) {
    %c0_i32 = arith.constant 0 : i32
    %c0_i32_0 = arith.constant 0 : i32
    %c0_i32_1 = arith.constant 0 : i32
    return %arg1, %c0_i32, %c0_i32_0 : i32, i32, i32
  }
  func.func @transform_17(%arg0: i32, %arg1: i32) -> (i32, i32, i32) {
    %c0_i32 = arith.constant 0 : i32
    %c0_i32_0 = arith.constant 0 : i32
    %c0_i32_1 = arith.constant 0 : i32
    return %arg1, %c0_i32, %c0_i32_0 : i32, i32, i32
  }
  func.func @transform_18(%arg0: i32, %arg1: i32) -> (i32, i32, i32) {
    %c0_i32 = arith.constant 0 : i32
    %c0_i32_0 = arith.constant 0 : i32
    %c0_i32_1 = arith.constant 0 : i32
    return %arg1, %c0_i32, %c0_i32_0 : i32, i32, i32
  }
  func.func @transform_19(%arg0: i32, %arg1: i32) -> (i32, i32, i32) {
    %c0_i32 = arith.constant 0 : i32
    %c0_i32_0 = arith.constant 0 : i32
    %c0_i32_1 = arith.constant 0 : i32
    return %arg1, %c0_i32, %c0_i32_0 : i32, i32, i32
  }
  func.func @transform_20(%arg0: i32, %arg1: i32) -> (i32, i32, i32) {
    %c0_i32 = arith.constant 0 : i32
    %c0_i32_0 = arith.constant 0 : i32
    %c0_i32_1 = arith.constant 0 : i32
    return %arg1, %c0_i32, %c0_i32_0 : i32, i32, i32
  }
  func.func @transform_21(%arg0: i32, %arg1: i32) -> (i32, i32, i32) {
    %c0_i32 = arith.constant 0 : i32
    %c0_i32_0 = arith.constant 0 : i32
    %c0_i32_1 = arith.constant 0 : i32
    return %arg1, %c0_i32, %c0_i32_0 : i32, i32, i32
  }
  func.func @transform_22(%arg0: i32, %arg1: i32) -> (i32, i32, i32) {
    %c0_i32 = arith.constant 0 : i32
    %c0_i32_0 = arith.constant 0 : i32
    %c0_i32_1 = arith.constant 0 : i32
    return %arg1, %c0_i32, %c0_i32_0 : i32, i32, i32
  }
  func.func @transform_23(%arg0: i32, %arg1: i32) -> (i32, i32, i32) {
    %c0_i32 = arith.constant 0 : i32
    %c0_i32_0 = arith.constant 0 : i32
    %c0_i32_1 = arith.constant 0 : i32
    return %arg1, %c0_i32, %c0_i32_0 : i32, i32, i32
  }
  func.func @transform_24(%arg0: i32, %arg1: i32) -> (i32, i32, i32) {
    %c0_i32 = arith.constant 0 : i32
    %c0_i32_0 = arith.constant 0 : i32
    %c0_i32_1 = arith.constant 0 : i32
    return %arg1, %c0_i32, %c0_i32_0 : i32, i32, i32
  }
  func.func @transform_25(%arg0: i32, %arg1: i32) -> (i32, i32) {
    %c0_i32 = arith.constant 0 : i32
    %c0_i32_0 = arith.constant 0 : i32
    %c0_i32_1 = arith.constant 0 : i32
    return %c0_i32, %c0_i32_0 : i32, i32
  }
  func.func @transform_26(%arg0: i32, %arg1: i32) -> (i32, i32) {
    %c0_i32 = arith.constant 0 : i32
    %c0_i32_0 = arith.constant 0 : i32
    %c0_i32_1 = arith.constant 0 : i32
    return %c0_i32, %c0_i32_0 : i32, i32
  }
  func.func @transform_27(%arg0: i32, %arg1: i32) -> (i32, i32) {
    %c0_i32 = arith.constant 0 : i32
    %c0_i32_0 = arith.constant 0 : i32
    %c0_i32_1 = arith.constant 0 : i32
    return %c0_i32, %c0_i32_0 : i32, i32
  }
  func.func @transform_28(%arg0: i32, %arg1: i32) -> (i32, i32) {
    %c0_i32 = arith.constant 0 : i32
    %c0_i32_0 = arith.constant 0 : i32
    %c0_i32_1 = arith.constant 0 : i32
    return %c0_i32, %c0_i32_0 : i32, i32
  }
  func.func @transform_29(%arg0: i32, %arg1: i32) -> (i32, i32, i32) {
    %c0_i32 = arith.constant 0 : i32
    %c0_i32_0 = arith.constant 0 : i32
    %c0_i32_1 = arith.constant 0 : i32
    return %arg0, %c0_i32, %c0_i32_0 : i32, i32, i32
  }
}

</mosaic_0001>

<llo_original>
// kernel: abil_dt_forward.1
$region0: #{abil_dt_forward.1}
  #allocation0 [shape = 'u32[]', space=smem, size = 0x4, offset = 0x4, fixed_abs, tag = 'smem constant byte address 0x4 - core index']
  #allocation1 [shape = 'u32[144,128]{1,0:T(1,128)}', space=vmem, size = 0x12000, scoped, tag = 'internal scratch']
  #allocation2 [shape = 'f32[9,128]{1,0:T(8,128)}', space=vmem, size = 0x2000, scoped, tag = 'scratch operand']
  %s0 = inlined_call_operand.smem [shape: u32[30], index: -1, kind: input, shape index: {}]
  %s1 = sld [smem:[%s0]]
  %s2 = scalar_lea.smem %s0, 1
  %s3 = sld [smem:[%s2]]
  %s4 = scalar_lea.smem %s0, 2
  %s5 = sld [smem:[%s4]]
  %s6 = scalar_lea.smem %s0, 3
  %s7 = sld [smem:[%s6]]
  %s8 = scalar_lea.smem %s0, 4
  %s9 = sld [smem:[%s8]]
  %s10 = scalar_lea.smem %s0, 5
  %s11 = sld [smem:[%s10]]
  %s12 = scalar_lea.smem %s0, 6
  %s13 = sld [smem:[%s12]]
  %s14 = scalar_lea.smem %s0, 7
  %s15 = sld [smem:[%s14]]
  %s16 = scalar_lea.smem %s0, 8
  %s17 = sld [smem:[%s16]]
  %s18 = scalar_lea.smem %s0, 9
  %s19 = sld [smem:[%s18]]
  %s20 = scalar_lea.smem %s0, 10
  %s21 = sld [smem:[%s20]]
  %s22 = scalar_lea.smem %s0, 11
  %s23 = sld [smem:[%s22]]
  %s24 = scalar_lea.smem %s0, 12
  %s25 = sld [smem:[%s24]]
  %s26 = scalar_lea.smem %s0, 13
  %s27 = sld [smem:[%s26]]
  %s28 = scalar_lea.smem %s0, 14
  %s29 = sld [smem:[%s28]]
  %s30 = scalar_lea.smem %s0, 15
  %s31 = sld [smem:[%s30]]
  %s32 = scalar_lea.smem %s0, 16
  %s33 = sld [smem:[%s32]]
  %s34 = scalar_lea.smem %s0, 17
  %s35 = sld [smem:[%s34]]
  %s36 = scalar_lea.smem %s0, 18
  %s37 = sld [smem:[%s36]]
  %s38 = scalar_lea.smem %s0, 19
  %s39 = sld [smem:[%s38]]
  %s40 = scalar_lea.smem %s0, 20
  %s41 = sld [smem:[%s40]]
  %s42 = scalar_lea.smem %s0, 21
  %s43 = sld [smem:[%s42]]
  %s44 = scalar_lea.smem %s0, 22
  %s45 = sld [smem:[%s44]]
  %s46 = scalar_lea.smem %s0, 23
  %s47 = sld [smem:[%s46]]
  %s48 = scalar_lea.smem %s0, 24
  %s49 = sld [smem:[%s48]]
  %s50 = scalar_lea.smem %s0, 25
  %s51 = sld [smem:[%s50]]
  %s52 = scalar_lea.smem %s0, 26
  %s53 = sld [smem:[%s52]]
  %s54 = scalar_lea.smem %s0, 27
  %s55 = sld [smem:[%s54]]
  %s56 = scalar_lea.smem %s0, 28
  %s57 = sld [smem:[%s56]]
  %s58 = scalar_lea.smem %s0, 29
  %s59 = sld [smem:[%s58]]
  %s60 = sld [smem:[#allocation0]]
  $region157: #{abil_dt_forward.1} parent=0
    _
  %s62 = ssub.s32 1, %s60
  %s63 = scalar_select 0, %s62, %s60
  loop: start=0, step=1, limit=6
  $region2: #{abil_dt_forward.1} parent=0 // loop_pre_header
    _
  $region3: #{abil_dt_forward.1} parent=0 // loop_header
    %s65 = sphi 0, %s69
    %p66 = scmp.ge.s32.totalorder %s65, 6
    %s72 = sphi 0, %s84
    %s73 = sphi 0, %s80
    %s74 = sphi 0, %s72
    %s75 = sphi 0, %s73
    %s76 = sphi 0, %s74
    %s77 = sphi 0, %s75
    %s87 = sphi 0, %s89
    %s90 = sphi 0, %s87
    %s91 = sphi 0, %s90
    %s107 = sphi 0, %s91
    %s113 = sphi 0, %s115
    %s116 = sphi 0, %s113
    %s117 = sphi 0, %s116
    %s133 = sphi 0, %s117
    %s139 = sphi 0, %s141
    %s142 = sphi 0, %s139
    %s143 = sphi 0, %s142
    %s159 = sphi 0, %s143
    %s165 = sphi 0, %s167
    %s168 = sphi 0, %s165
    %s169 = sphi 0, %s168
    %s185 = sphi 0, %s169
    %s189 = sphi 0, %s189
    %s191 = sphi 0, %s189
    %s192 = sphi 0, %s191
    %s206 = sphi 0, %s192
    %s210 = sphi 0, %s210
    %s212 = sphi 0, %s210
    %s213 = sphi 0, %s212
    %s227 = sphi 0, %s213
    %s231 = sphi 0, %s231
    %s233 = sphi 0, %s231
    %s234 = sphi 0, %s233
    %s248 = sphi 0, %s234
    %s252 = sphi 0, %s252
    %s254 = sphi 0, %s252
    %s255 = sphi 0, %s254
    %s269 = sphi 0, %s255
    %s273 = sphi 0, %s273
    %s275 = sphi 0, %s273
    %s276 = sphi 0, %s275
    %s290 = sphi 0, %s276
    %s294 = sphi 0, %s294
    %s296 = sphi 0, %s294
    %s297 = sphi 0, %s296
    %s311 = sphi 0, %s297
    %s315 = sphi 0, %s315
    %s317 = sphi 0, %s315
    %s318 = sphi 0, %s317
    %s332 = sphi 0, %s318
    %s336 = sphi 0, %s336
    %s338 = sphi 0, %s336
    %s339 = sphi 0, %s338
    %s353 = sphi 0, %s339
    %s357 = sphi 0, %s357
    %s359 = sphi 0, %s357
    %s360 = sphi 0, %s359
    %s374 = sphi 0, %s360
    %s380 = sphi 0, %s382
    %s383 = sphi 0, %s380
    %s384 = sphi 0, %s383
    %s400 = sphi 0, %s384
    %s406 = sphi 0, %s408
    %s409 = sphi 0, %s406
    %s410 = sphi 0, %s409
    %s426 = sphi 0, %s410
    %s432 = sphi 0, %s434
    %s435 = sphi 0, %s432
    %s436 = sphi 0, %s435
    %s452 = sphi 0, %s436
    %s458 = sphi 0, %s460
    %s461 = sphi 0, %s458
    %s462 = sphi 0, %s461
    %s478 = sphi 0, %s462
    %s484 = sphi 0, %s486
    %s487 = sphi 0, %s484
    %s488 = sphi 0, %s487
    %s504 = sphi 0, %s488
    %s510 = sphi 0, %s512
    %s513 = sphi 0, %s510
    %s514 = sphi 0, %s513
    %s530 = sphi 0, %s514
    %s536 = sphi 0, %s538
    %s539 = sphi 0, %s536
    %s540 = sphi 0, %s539
    %s556 = sphi 0, %s540
    %s562 = sphi 0, %s564
    %s565 = sphi 0, %s562
    %s566 = sphi 0, %s565
    %s582 = sphi 0, %s566
    %s588 = sphi 0, %s590
    %s591 = sphi 0, %s588
    %s592 = sphi 0, %s591
    %s608 = sphi 0, %s592
    %s614 = sphi 0, %s616
    %s617 = sphi 0, %s614
    %s618 = sphi 0, %s617
    %s634 = sphi 0, %s618
    %s640 = sphi 0, %s642
    %s643 = sphi 0, %s640
    %s644 = sphi 0, %s643
    %s660 = sphi 0, %s644
    %s666 = sphi 0, %s668
    %s669 = sphi 0, %s666
    %s670 = sphi 0, %s669
    %s686 = sphi 0, %s670
    %s690 = sphi 0, %s690
    %s692 = sphi 0, %s690
    %s693 = sphi 0, %s692
    %s707 = sphi 0, %s693
    %s711 = sphi 0, %s711
    %s713 = sphi 0, %s711
    %s714 = sphi 0, %s713
    %s728 = sphi 0, %s714
    %s732 = sphi 0, %s732
    %s734 = sphi 0, %s732
    %s735 = sphi 0, %s734
    %s749 = sphi 0, %s735
    %s753 = sphi 0, %s753
    %s755 = sphi 0, %s753
    %s756 = sphi 0, %s755
    %s770 = sphi 0, %s756
    %s776 = sphi 0, %s778
    %s779 = sphi 0, %s776
    %s780 = sphi 0, %s779
    %s796 = sphi 0, %s780
  $region4: #{abil_dt_forward.1} parent=0 // loop_header_branch
    %68 = sbr.rel (%p66) target = $region8
  $region5: #{abil_dt_forward.1} parent=0 // loop_body
    %s70 = ssub.s32 %s65, 1
    %s71 = ssub.s32 %s65, 2
    %s78 = sadd.s32 1, %s73
    %p79 = scmp.ge.s32.totalorder %s78, 2
    %s80 = scalar_select %p79, 0, %s78
    %s81 = sadd.s32 1, %s72
    %s82 = scalar_select %p79, %s81, %s72
    %p83 = scmp.ge.s32.totalorder %s82, 2
    %s84 = scalar_select %p83, 0, %s82
    %s85 = ssub.s32 %s72, %s84
    %p86 = scmp.eq.s32.totalorder %s85, 0
    %s88 = sadd.s32 %s87, 1
    %s89 = scalar_select %p86, %s87, %s88
    %p92 = pneg %p86
    %p93 = scmp.eq.s32.totalorder %s65, 3
    %p94 = por %p92, %p93
    %p95 = scmp.ne.s32.totalorder %s87, %s90
    %p96 = scmp.eq.s32.totalorder %s65, 0
    %p97 = por %p95, %p96
    %p98 = scmp.ne.s32.totalorder %s87, %s90
    %p99 = scmp.eq.s32.totalorder %s70, 3
    %p100 = por %p98, %p99
    %p101 = scmp.ne.s32.totalorder %s90, %s91
    %p102 = scmp.eq.s32.totalorder %s70, 0
    %p103 = por %p101, %p102
    %p104 = scmp.ne.s32.totalorder %s90, %s91
    %p105 = scmp.eq.s32.totalorder %s71, 3
    %p106 = por %p104, %p105
    %p108 = scmp.ne.s32.totalorder %s91, %s107
    %p109 = scmp.eq.s32.totalorder %s71, 0
    %p110 = por %p108, %p109
    %s111 = ssub.s32 %s72, %s84
    %p112 = scmp.eq.s32.totalorder %s111, 0
    %s114 = sadd.s32 %s113, 1
    %s115 = scalar_select %p112, %s113, %s114
    %p118 = pneg %p112
    %p119 = scmp.eq.s32.totalorder %s65, 3
    %p120 = por %p118, %p119
    %p121 = scmp.ne.s32.totalorder %s113, %s116
    %p122 = scmp.eq.s32.totalorder %s65, 0
    %p123 = por %p121, %p122
    %p124 = scmp.ne.s32.totalorder %s113, %s116
    %p125 = scmp.eq.s32.totalorder %s70, 3
    %p126 = por %p124, %p125
    %p127 = scmp.ne.s32.totalorder %s116, %s117
    %p128 = scmp.eq.s32.totalorder %s70, 0
    %p129 = por %p127, %p128
    %p130 = scmp.ne.s32.totalorder %s116, %s117
    %p131 = scmp.eq.s32.totalorder %s71, 3
    %p132 = por %p130, %p131
    %p134 = scmp.ne.s32.totalorder %s117, %s133
    %p135 = scmp.eq.s32.totalorder %s71, 0
    %p136 = por %p134, %p135
    %s137 = ssub.s32 %s72, %s84
    %p138 = scmp.eq.s32.totalorder %s137, 0
    %s140 = sadd.s32 %s139, 1
    %s141 = scalar_select %p138, %s139, %s140
    %p144 = pneg %p138
    %p145 = scmp.eq.s32.totalorder %s65, 3
    %p146 = por %p144, %p145
    %p147 = scmp.ne.s32.totalorder %s139, %s142
    %p148 = scmp.eq.s32.totalorder %s65, 0
    %p149 = por %p147, %p148
    %p150 = scmp.ne.s32.totalorder %s139, %s142
    %p151 = scmp.eq.s32.totalorder %s70, 3
    %p152 = por %p150, %p151
    %p153 = scmp.ne.s32.totalorder %s142, %s143
    %p154 = scmp.eq.s32.totalorder %s70, 0
    %p155 = por %p153, %p154
    %p156 = scmp.ne.s32.totalorder %s142, %s143
    %p157 = scmp.eq.s32.totalorder %s71, 3
    %p158 = por %p156, %p157
    %p160 = scmp.ne.s32.totalorder %s143, %s159
    %p161 = scmp.eq.s32.totalorder %s71, 0
    %p162 = por %p160, %p161
    %s163 = ssub.s32 %s72, %s84
    %p164 = scmp.eq.s32.totalorder %s163, 0
    %s166 = sadd.s32 %s165, 1
    %s167 = scalar_select %p164, %s165, %s166
    %p170 = pneg %p164
    %p171 = scmp.eq.s32.totalorder %s65, 3
    %p172 = por %p170, %p171
    %p173 = scmp.ne.s32.totalorder %s165, %s168
    %p174 = scmp.eq.s32.totalorder %s65, 0
    %p175 = por %p173, %p174
    %p176 = scmp.ne.s32.totalorder %s165, %s168
    %p177 = scmp.eq.s32.totalorder %s70, 3
    %p178 = por %p176, %p177
    %p179 = scmp.ne.s32.totalorder %s168, %s169
    %p180 = scmp.eq.s32.totalorder %s70, 0
    %p181 = por %p179, %p180
    %p182 = scmp.ne.s32.totalorder %s168, %s169
    %p183 = scmp.eq.s32.totalorder %s71, 3
    %p184 = por %p182, %p183
    %p186 = scmp.ne.s32.totalorder %s169, %s185
    %p187 = scmp.eq.s32.totalorder %s71, 0
    %p188 = por %p186, %p187
    %s190 = sadd.s32 %s189, 1
    %p193 = scmp.eq.s32.totalorder %s65, 3
    %p194 = scmp.ne.s32.totalorder %s189, %s191
    %p195 = scmp.eq.s32.totalorder %s65, 0
    %p196 = por %p194, %p195
    %p197 = scmp.ne.s32.totalorder %s189, %s191
    %p198 = scmp.eq.s32.totalorder %s70, 3
    %p199 = por %p197, %p198
    %p200 = scmp.ne.s32.totalorder %s191, %s192
    %p201 = scmp.eq.s32.totalorder %s70, 0
    %p202 = por %p200, %p201
    %p203 = scmp.ne.s32.totalorder %s191, %s192
    %p204 = scmp.eq.s32.totalorder %s71, 3
    %p205 = por %p203, %p204
    %p207 = scmp.ne.s32.totalorder %s192, %s206
    %p208 = scmp.eq.s32.totalorder %s71, 0
    %p209 = por %p207, %p208
    %s211 = sadd.s32 %s210, 1
    %p214 = scmp.eq.s32.totalorder %s65, 3
    %p215 = scmp.ne.s32.totalorder %s210, %s212
    %p216 = scmp.eq.s32.totalorder %s65, 0
    %p217 = por %p215, %p216
    %p218 = scmp.ne.s32.totalorder %s210, %s212
    %p219 = scmp.eq.s32.totalorder %s70, 3
    %p220 = por %p218, %p219
    %p221 = scmp.ne.s32.totalorder %s212, %s213
    %p222 = scmp.eq.s32.totalorder %s70, 0
    %p223 = por %p221, %p222
    %p224 = scmp.ne.s32.totalorder %s212, %s213
    %p225 = scmp.eq.s32.totalorder %s71, 3
    %p226 = por %p224, %p225
    %p228 = scmp.ne.s32.totalorder %s213, %s227
    %p229 = scmp.eq.s32.totalorder %s71, 0
    %p230 = por %p228, %p229
    %s232 = sadd.s32 %s231, 1
    %p235 = scmp.eq.s32.totalorder %s65, 3
    %p236 = scmp.ne.s32.totalorder %s231, %s233
    %p237 = scmp.eq.s32.totalorder %s65, 0
    %p238 = por %p236, %p237
    %p239 = scmp.ne.s32.totalorder %s231, %s233
    %p240 = scmp.eq.s32.totalorder %s70, 3
    %p241 = por %p239, %p240
    %p242 = scmp.ne.s32.totalorder %s233, %s234
    %p243 = scmp.eq.s32.totalorder %s70, 0
    %p244 = por %p242, %p243
    %p245 = scmp.ne.s32.totalorder %s233, %s234
    %p246 = scmp.eq.s32.totalorder %s71, 3
    %p247 = por %p245, %p246
    %p249 = scmp.ne.s32.totalorder %s234, %s248
    %p250 = scmp.eq.s32.totalorder %s71, 0
    %p251 = por %p249, %p250
    %s253 = sadd.s32 %s252, 1
    %p256 = scmp.eq.s32.totalorder %s65, 3
    %p257 = scmp.ne.s32.totalorder %s252, %s254
    %p258 = scmp.eq.s32.totalorder %s65, 0
    %p259 = por %p257, %p258
    %p260 = scmp.ne.s32.totalorder %s252, %s254
    %p261 = scmp.eq.s32.totalorder %s70, 3
    %p262 = por %p260, %p261
    %p263 = scmp.ne.s32.totalorder %s254, %s255
    %p264 = scmp.eq.s32.totalorder %s70, 0
    %p265 = por %p263, %p264
    %p266 = scmp.ne.s32.totalorder %s254, %s255
    %p267 = scmp.eq.s32.totalorder %s71, 3
    %p268 = por %p266, %p267
    %p270 = scmp.ne.s32.totalorder %s255, %s269
    %p271 = scmp.eq.s32.totalorder %s71, 0
    %p272 = por %p270, %p271
    %s274 = sadd.s32 %s273, 1
    %p277 = scmp.eq.s32.totalorder %s65, 3
    %p278 = scmp.ne.s32.totalorder %s273, %s275
    %p279 = scmp.eq.s32.totalorder %s65, 0
    %p280 = por %p278, %p279
    %p281 = scmp.ne.s32.totalorder %s273, %s275
    %p282 = scmp.eq.s32.totalorder %s70, 3
    %p283 = por %p281, %p282
    %p284 = scmp.ne.s32.totalorder %s275, %s276
    %p285 = scmp.eq.s32.totalorder %s70, 0
    %p286 = por %p284, %p285
    %p287 = scmp.ne.s32.totalorder %s275, %s276
    %p288 = scmp.eq.s32.totalorder %s71, 3
    %p289 = por %p287, %p288
    %p291 = scmp.ne.s32.totalorder %s276, %s290
    %p292 = scmp.eq.s32.totalorder %s71, 0
    %p293 = por %p291, %p292
    %s295 = sadd.s32 %s294, 1
    %p298 = scmp.eq.s32.totalorder %s65, 3
    %p299 = scmp.ne.s32.totalorder %s294, %s296
    %p300 = scmp.eq.s32.totalorder %s65, 0
    %p301 = por %p299, %p300
    %p302 = scmp.ne.s32.totalorder %s294, %s296
    %p303 = scmp.eq.s32.totalorder %s70, 3
    %p304 = por %p302, %p303
    %p305 = scmp.ne.s32.totalorder %s296, %s297
    %p306 = scmp.eq.s32.totalorder %s70, 0
    %p307 = por %p305, %p306
    %p308 = scmp.ne.s32.totalorder %s296, %s297
    %p309 = scmp.eq.s32.totalorder %s71, 3
    %p310 = por %p308, %p309
    %p312 = scmp.ne.s32.totalorder %s297, %s311
    %p313 = scmp.eq.s32.totalorder %s71, 0
    %p314 = por %p312, %p313
    %s316 = sadd.s32 %s315, 1
    %p319 = scmp.eq.s32.totalorder %s65, 3
    %p320 = scmp.ne.s32.totalorder %s315, %s317
    %p321 = scmp.eq.s32.totalorder %s65, 0
    %p322 = por %p320, %p321
    %p323 = scmp.ne.s32.totalorder %s315, %s317
    %p324 = scmp.eq.s32.totalorder %s70, 3
    %p325 = por %p323, %p324
    %p326 = scmp.ne.s32.totalorder %s317, %s318
    %p327 = scmp.eq.s32.totalorder %s70, 0
    %p328 = por %p326, %p327
    %p329 = scmp.ne.s32.totalorder %s317, %s318
    %p330 = scmp.eq.s32.totalorder %s71, 3
    %p331 = por %p329, %p330
    %p333 = scmp.ne.s32.totalorder %s318, %s332
    %p334 = scmp.eq.s32.totalorder %s71, 0
    %p335 = por %p333, %p334
    %s337 = sadd.s32 %s336, 1
    %p340 = scmp.eq.s32.totalorder %s65, 3
    %p341 = scmp.ne.s32.totalorder %s336, %s338
    %p342 = scmp.eq.s32.totalorder %s65, 0
    %p343 = por %p341, %p342
    %p344 = scmp.ne.s32.totalorder %s336, %s338
    %p345 = scmp.eq.s32.totalorder %s70, 3
    %p346 = por %p344, %p345
    %p347 = scmp.ne.s32.totalorder %s338, %s339
    %p348 = scmp.eq.s32.totalorder %s70, 0
    %p349 = por %p347, %p348
    %p350 = scmp.ne.s32.totalorder %s338, %s339
    %p351 = scmp.eq.s32.totalorder %s71, 3
    %p352 = por %p350, %p351
    %p354 = scmp.ne.s32.totalorder %s339, %s353
    %p355 = scmp.eq.s32.totalorder %s71, 0
    %p356 = por %p354, %p355
    %s358 = sadd.s32 %s357, 1
    %p361 = scmp.eq.s32.totalorder %s65, 3
    %p362 = scmp.ne.s32.totalorder %s357, %s359
    %p363 = scmp.eq.s32.totalorder %s65, 0
    %p364 = por %p362, %p363
    %p365 = scmp.ne.s32.totalorder %s357, %s359
    %p366 = scmp.eq.s32.totalorder %s70, 3
    %p367 = por %p365, %p366
    %p368 = scmp.ne.s32.totalorder %s359, %s360
    %p369 = scmp.eq.s32.totalorder %s70, 0
    %p370 = por %p368, %p369
    %p371 = scmp.ne.s32.totalorder %s359, %s360
    %p372 = scmp.eq.s32.totalorder %s71, 3
    %p373 = por %p371, %p372
    %p375 = scmp.ne.s32.totalorder %s360, %s374
    %p376 = scmp.eq.s32.totalorder %s71, 0
    %p377 = por %p375, %p376
    %s378 = ssub.s32 %s73, %s80
    %p379 = scmp.eq.s32.totalorder %s378, 0
    %s381 = sadd.s32 %s380, 1
    %s382 = scalar_select %p379, %s380, %s381
    %p385 = pneg %p379
    %p386 = scmp.eq.s32.totalorder %s65, 3
    %p387 = por %p385, %p386
    %p388 = scmp.ne.s32.totalorder %s380, %s383
    %p389 = scmp.eq.s32.totalorder %s65, 0
    %p390 = por %p388, %p389
    %p391 = scmp.ne.s32.totalorder %s380, %s383
    %p392 = scmp.eq.s32.totalorder %s70, 3
    %p393 = por %p391, %p392
    %p394 = scmp.ne.s32.totalorder %s383, %s384
    %p395 = scmp.eq.s32.totalorder %s70, 0
    %p396 = por %p394, %p395
    %p397 = scmp.ne.s32.totalorder %s383, %s384
    %p398 = scmp.eq.s32.totalorder %s71, 3
    %p399 = por %p397, %p398
    %p401 = scmp.ne.s32.totalorder %s384, %s400
    %p402 = scmp.eq.s32.totalorder %s71, 0
    %p403 = por %p401, %p402
    %s404 = ssub.s32 %s73, %s80
    %p405 = scmp.eq.s32.totalorder %s404, 0
    %s407 = sadd.s32 %s406, 1
    %s408 = scalar_select %p405, %s406, %s407
    %p411 = pneg %p405
    %p412 = scmp.eq.s32.totalorder %s65, 3
    %p413 = por %p411, %p412
    %p414 = scmp.ne.s32.totalorder %s406, %s409
    %p415 = scmp.eq.s32.totalorder %s65, 0
    %p416 = por %p414, %p415
    %p417 = scmp.ne.s32.totalorder %s406, %s409
    %p418 = scmp.eq.s32.totalorder %s70, 3
    %p419 = por %p417, %p418
    %p420 = scmp.ne.s32.totalorder %s409, %s410
    %p421 = scmp.eq.s32.totalorder %s70, 0
    %p422 = por %p420, %p421
    %p423 = scmp.ne.s32.totalorder %s409, %s410
    %p424 = scmp.eq.s32.totalorder %s71, 3
    %p425 = por %p423, %p424
    %p427 = scmp.ne.s32.totalorder %s410, %s426
    %p428 = scmp.eq.s32.totalorder %s71, 0
    %p429 = por %p427, %p428
    %s430 = ssub.s32 %s73, %s80
    %p431 = scmp.eq.s32.totalorder %s430, 0
    %s433 = sadd.s32 %s432, 1
    %s434 = scalar_select %p431, %s432, %s433
    %p437 = pneg %p431
    %p438 = scmp.eq.s32.totalorder %s65, 3
    %p439 = por %p437, %p438
    %p440 = scmp.ne.s32.totalorder %s432, %s435
    %p441 = scmp.eq.s32.totalorder %s65, 0
    %p442 = por %p440, %p441
    %p443 = scmp.ne.s32.totalorder %s432, %s435
    %p444 = scmp.eq.s32.totalorder %s70, 3
    %p445 = por %p443, %p444
    %p446 = scmp.ne.s32.totalorder %s435, %s436
    %p447 = scmp.eq.s32.totalorder %s70, 0
    %p448 = por %p446, %p447
    %p449 = scmp.ne.s32.totalorder %s435, %s436
    %p450 = scmp.eq.s32.totalorder %s71, 3
    %p451 = por %p449, %p450
    %p453 = scmp.ne.s32.totalorder %s436, %s452
    %p454 = scmp.eq.s32.totalorder %s71, 0
    %p455 = por %p453, %p454
    %s456 = ssub.s32 %s73, %s80
    %p457 = scmp.eq.s32.totalorder %s456, 0
    %s459 = sadd.s32 %s458, 1
    %s460 = scalar_select %p457, %s458, %s459
    %p463 = pneg %p457
    %p464 = scmp.eq.s32.totalorder %s65, 3
    %p465 = por %p463, %p464
    %p466 = scmp.ne.s32.totalorder %s458, %s461
    %p467 = scmp.eq.s32.totalorder %s65, 0
    %p468 = por %p466, %p467
    %p469 = scmp.ne.s32.totalorder %s458, %s461
    %p470 = scmp.eq.s32.totalorder %s70, 3
    %p471 = por %p469, %p470
    %p472 = scmp.ne.s32.totalorder %s461, %s462
    %p473 = scmp.eq.s32.totalorder %s70, 0
    %p474 = por %p472, %p473
    %p475 = scmp.ne.s32.totalorder %s461, %s462
    %p476 = scmp.eq.s32.totalorder %s71, 3
    %p477 = por %p475, %p476
    %p479 = scmp.ne.s32.totalorder %s462, %s478
    %p480 = scmp.eq.s32.totalorder %s71, 0
    %p481 = por %p479, %p480
    %s482 = ssub.s32 %s73, %s80
    %p483 = scmp.eq.s32.totalorder %s482, 0
    %s485 = sadd.s32 %s484, 1
    %s486 = scalar_select %p483, %s484, %s485
    %p489 = pneg %p483
    %p490 = scmp.eq.s32.totalorder %s65, 3
    %p491 = por %p489, %p490
    %p492 = scmp.ne.s32.totalorder %s484, %s487
    %p493 = scmp.eq.s32.totalorder %s65, 0
    %p494 = por %p492, %p493
    %p495 = scmp.ne.s32.totalorder %s484, %s487
    %p496 = scmp.eq.s32.totalorder %s70, 3
    %p497 = por %p495, %p496
    %p498 = scmp.ne.s32.totalorder %s487, %s488
    %p499 = scmp.eq.s32.totalorder %s70, 0
    %p500 = por %p498, %p499
    %p501 = scmp.ne.s32.totalorder %s487, %s488
    %p502 = scmp.eq.s32.totalorder %s71, 3
    %p503 = por %p501, %p502
    %p505 = scmp.ne.s32.totalorder %s488, %s504
    %p506 = scmp.eq.s32.totalorder %s71, 0
    %p507 = por %p505, %p506
    %s508 = ssub.s32 %s73, %s80
    %p509 = scmp.eq.s32.totalorder %s508, 0
    %s511 = sadd.s32 %s510, 1
    %s512 = scalar_select %p509, %s510, %s511
    %p515 = pneg %p509
    %p516 = scmp.eq.s32.totalorder %s65, 3
    %p517 = por %p515, %p516
    %p518 = scmp.ne.s32.totalorder %s510, %s513
    %p519 = scmp.eq.s32.totalorder %s65, 0
    %p520 = por %p518, %p519
    %p521 = scmp.ne.s32.totalorder %s510, %s513
    %p522 = scmp.eq.s32.totalorder %s70, 3
    %p523 = por %p521, %p522
    %p524 = scmp.ne.s32.totalorder %s513, %s514
    %p525 = scmp.eq.s32.totalorder %s70, 0
    %p526 = por %p524, %p525
    %p527 = scmp.ne.s32.totalorder %s513, %s514
    %p528 = scmp.eq.s32.totalorder %s71, 3
    %p529 = por %p527, %p528
    %p531 = scmp.ne.s32.totalorder %s514, %s530
    %p532 = scmp.eq.s32.totalorder %s71, 0
    %p533 = por %p531, %p532
    %s534 = ssub.s32 %s73, %s80
    %p535 = scmp.eq.s32.totalorder %s534, 0
    %s537 = sadd.s32 %s536, 1
    %s538 = scalar_select %p535, %s536, %s537
    %p541 = pneg %p535
    %p542 = scmp.eq.s32.totalorder %s65, 3
    %p543 = por %p541, %p542
    %p544 = scmp.ne.s32.totalorder %s536, %s539
    %p545 = scmp.eq.s32.totalorder %s65, 0
    %p546 = por %p544, %p545
    %p547 = scmp.ne.s32.totalorder %s536, %s539
    %p548 = scmp.eq.s32.totalorder %s70, 3
    %p549 = por %p547, %p548
    %p550 = scmp.ne.s32.totalorder %s539, %s540
    %p551 = scmp.eq.s32.totalorder %s70, 0
    %p552 = por %p550, %p551
    %p553 = scmp.ne.s32.totalorder %s539, %s540
    %p554 = scmp.eq.s32.totalorder %s71, 3
    %p555 = por %p553, %p554
    %p557 = scmp.ne.s32.totalorder %s540, %s556
    %p558 = scmp.eq.s32.totalorder %s71, 0
    %p559 = por %p557, %p558
    %s560 = ssub.s32 %s73, %s80
    %p561 = scmp.eq.s32.totalorder %s560, 0
    %s563 = sadd.s32 %s562, 1
    %s564 = scalar_select %p561, %s562, %s563
    %p567 = pneg %p561
    %p568 = scmp.eq.s32.totalorder %s65, 3
    %p569 = por %p567, %p568
    %p570 = scmp.ne.s32.totalorder %s562, %s565
    %p571 = scmp.eq.s32.totalorder %s65, 0
    %p572 = por %p570, %p571
    %p573 = scmp.ne.s32.totalorder %s562, %s565
    %p574 = scmp.eq.s32.totalorder %s70, 3
    %p575 = por %p573, %p574
    %p576 = scmp.ne.s32.totalorder %s565, %s566
    %p577 = scmp.eq.s32.totalorder %s70, 0
    %p578 = por %p576, %p577
    %p579 = scmp.ne.s32.totalorder %s565, %s566
    %p580 = scmp.eq.s32.totalorder %s71, 3
    %p581 = por %p579, %p580
    %p583 = scmp.ne.s32.totalorder %s566, %s582
    %p584 = scmp.eq.s32.totalorder %s71, 0
    %p585 = por %p583, %p584
    %s586 = ssub.s32 %s73, %s80
    %p587 = scmp.eq.s32.totalorder %s586, 0
    %s589 = sadd.s32 %s588, 1
    %s590 = scalar_select %p587, %s588, %s589
    %p593 = pneg %p587
    %p594 = scmp.eq.s32.totalorder %s65, 3
    %p595 = por %p593, %p594
    %p596 = scmp.ne.s32.totalorder %s588, %s591
    %p597 = scmp.eq.s32.totalorder %s65, 0
    %p598 = por %p596, %p597
    %p599 = scmp.ne.s32.totalorder %s588, %s591
    %p600 = scmp.eq.s32.totalorder %s70, 3
    %p601 = por %p599, %p600
    %p602 = scmp.ne.s32.totalorder %s591, %s592
    %p603 = scmp.eq.s32.totalorder %s70, 0
    %p604 = por %p602, %p603
    %p605 = scmp.ne.s32.totalorder %s591, %s592
    %p606 = scmp.eq.s32.totalorder %s71, 3
    %p607 = por %p605, %p606
    %p609 = scmp.ne.s32.totalorder %s592, %s608
    %p610 = scmp.eq.s32.totalorder %s71, 0
    %p611 = por %p609, %p610
    %s612 = ssub.s32 %s73, %s80
    %p613 = scmp.eq.s32.totalorder %s612, 0
    %s615 = sadd.s32 %s614, 1
    %s616 = scalar_select %p613, %s614, %s615
    %p619 = pneg %p613
    %p620 = scmp.eq.s32.totalorder %s65, 3
    %p621 = por %p619, %p620
    %p622 = scmp.ne.s32.totalorder %s614, %s617
    %p623 = scmp.eq.s32.totalorder %s65, 0
    %p624 = por %p622, %p623
    %p625 = scmp.ne.s32.totalorder %s614, %s617
    %p626 = scmp.eq.s32.totalorder %s70, 3
    %p627 = por %p625, %p626
    %p628 = scmp.ne.s32.totalorder %s617, %s618
    %p629 = scmp.eq.s32.totalorder %s70, 0
    %p630 = por %p628, %p629
    %p631 = scmp.ne.s32.totalorder %s617, %s618
    %p632 = scmp.eq.s32.totalorder %s71, 3
    %p633 = por %p631, %p632
    %p635 = scmp.ne.s32.totalorder %s618, %s634
    %p636 = scmp.eq.s32.totalorder %s71, 0
    %p637 = por %p635, %p636
    %s638 = ssub.s32 %s73, %s80
    %p639 = scmp.eq.s32.totalorder %s638, 0
    %s641 = sadd.s32 %s640, 1
    %s642 = scalar_select %p639, %s640, %s641
    %p645 = pneg %p639
    %p646 = scmp.eq.s32.totalorder %s65, 3
    %p647 = por %p645, %p646
    %p648 = scmp.ne.s32.totalorder %s640, %s643
    %p649 = scmp.eq.s32.totalorder %s65, 0
    %p650 = por %p648, %p649
    %p651 = scmp.ne.s32.totalorder %s640, %s643
    %p652 = scmp.eq.s32.totalorder %s70, 3
    %p653 = por %p651, %p652
    %p654 = scmp.ne.s32.totalorder %s643, %s644
    %p655 = scmp.eq.s32.totalorder %s70, 0
    %p656 = por %p654, %p655
    %p657 = scmp.ne.s32.totalorder %s643, %s644
    %p658 = scmp.eq.s32.totalorder %s71, 3
    %p659 = por %p657, %p658
    %p661 = scmp.ne.s32.totalorder %s644, %s660
    %p662 = scmp.eq.s32.totalorder %s71, 0
    %p663 = por %p661, %p662
    %s664 = ssub.s32 %s73, %s80
    %p665 = scmp.eq.s32.totalorder %s664, 0
    %s667 = sadd.s32 %s666, 1
    %s668 = scalar_select %p665, %s666, %s667
    %p671 = pneg %p665
    %p672 = scmp.eq.s32.totalorder %s65, 3
    %p673 = por %p671, %p672
    %p674 = scmp.ne.s32.totalorder %s666, %s669
    %p675 = scmp.eq.s32.totalorder %s65, 0
    %p676 = por %p674, %p675
    %p677 = scmp.ne.s32.totalorder %s666, %s669
    %p678 = scmp.eq.s32.totalorder %s70, 3
    %p679 = por %p677, %p678
    %p680 = scmp.ne.s32.totalorder %s669, %s670
    %p681 = scmp.eq.s32.totalorder %s70, 0
    %p682 = por %p680, %p681
    %p683 = scmp.ne.s32.totalorder %s669, %s670
    %p684 = scmp.eq.s32.totalorder %s71, 3
    %p685 = por %p683, %p684
    %p687 = scmp.ne.s32.totalorder %s670, %s686
    %p688 = scmp.eq.s32.totalorder %s71, 0
    %p689 = por %p687, %p688
    %s691 = sadd.s32 %s690, 1
    %p694 = scmp.eq.s32.totalorder %s65, 3
    %p695 = scmp.ne.s32.totalorder %s690, %s692
    %p696 = scmp.eq.s32.totalorder %s65, 0
    %p697 = por %p695, %p696
    %p698 = scmp.ne.s32.totalorder %s690, %s692
    %p699 = scmp.eq.s32.totalorder %s70, 3
    %p700 = por %p698, %p699
    %p701 = scmp.ne.s32.totalorder %s692, %s693
    %p702 = scmp.eq.s32.totalorder %s70, 0
    %p703 = por %p701, %p702
    %p704 = scmp.ne.s32.totalorder %s692, %s693
    %p705 = scmp.eq.s32.totalorder %s71, 3
    %p706 = por %p704, %p705
    %p708 = scmp.ne.s32.totalorder %s693, %s707
    %p709 = scmp.eq.s32.totalorder %s71, 0
    %p710 = por %p708, %p709
    %s712 = sadd.s32 %s711, 1
    %p715 = scmp.eq.s32.totalorder %s65, 3
    %p716 = scmp.ne.s32.totalorder %s711, %s713
    %p717 = scmp.eq.s32.totalorder %s65, 0
    %p718 = por %p716, %p717
    %p719 = scmp.ne.s32.totalorder %s711, %s713
    %p720 = scmp.eq.s32.totalorder %s70, 3
    %p721 = por %p719, %p720
    %p722 = scmp.ne.s32.totalorder %s713, %s714
    %p723 = scmp.eq.s32.totalorder %s70, 0
    %p724 = por %p722, %p723
    %p725 = scmp.ne.s32.totalorder %s713, %s714
    %p726 = scmp.eq.s32.totalorder %s71, 3
    %p727 = por %p725, %p726
    %p729 = scmp.ne.s32.totalorder %s714, %s728
    %p730 = scmp.eq.s32.totalorder %s71, 0
    %p731 = por %p729, %p730
    %s733 = sadd.s32 %s732, 1
    %p736 = scmp.eq.s32.totalorder %s65, 3
    %p737 = scmp.ne.s32.totalorder %s732, %s734
    %p738 = scmp.eq.s32.totalorder %s65, 0
    %p739 = por %p737, %p738
    %p740 = scmp.ne.s32.totalorder %s732, %s734
    %p741 = scmp.eq.s32.totalorder %s70, 3
    %p742 = por %p740, %p741
    %p743 = scmp.ne.s32.totalorder %s734, %s735
    %p744 = scmp.eq.s32.totalorder %s70, 0
    %p745 = por %p743, %p744
    %p746 = scmp.ne.s32.totalorder %s734, %s735
    %p747 = scmp.eq.s32.totalorder %s71, 3
    %p748 = por %p746, %p747
    %p750 = scmp.ne.s32.totalorder %s735, %s749
    %p751 = scmp.eq.s32.totalorder %s71, 0
    %p752 = por %p750, %p751
    %s754 = sadd.s32 %s753, 1
    %p757 = scmp.eq.s32.totalorder %s65, 3
    %p758 = scmp.ne.s32.totalorder %s753, %s755
    %p759 = scmp.eq.s32.totalorder %s65, 0
    %p760 = por %p758, %p759
    %p761 = scmp.ne.s32.totalorder %s753, %s755
    %p762 = scmp.eq.s32.totalorder %s70, 3
    %p763 = por %p761, %p762
    %p764 = scmp.ne.s32.totalorder %s755, %s756
    %p765 = scmp.eq.s32.totalorder %s70, 0
    %p766 = por %p764, %p765
    %p767 = scmp.ne.s32.totalorder %s755, %s756
    %p768 = scmp.eq.s32.totalorder %s71, 3
    %p769 = por %p767, %p768
    %p771 = scmp.ne.s32.totalorder %s756, %s770
    %p772 = scmp.eq.s32.totalorder %s71, 0
    %p773 = por %p771, %p772
    %s774 = ssub.s32 %s72, %s84
    %p775 = scmp.eq.s32.totalorder %s774, 0
    %s777 = sadd.s32 %s776, 1
    %s778 = scalar_select %p775, %s776, %s777
    %p781 = pneg %p775
    %p782 = scmp.eq.s32.totalorder %s65, 3
    %p783 = por %p781, %p782
    %p784 = scmp.ne.s32.totalorder %s776, %s779
    %p785 = scmp.eq.s32.totalorder %s65, 0
    %p786 = por %p784, %p785
    %p787 = scmp.ne.s32.totalorder %s776, %s779
    %p788 = scmp.eq.s32.totalorder %s70, 3
    %p789 = por %p787, %p788
    %p790 = scmp.ne.s32.totalorder %s779, %s780
    %p791 = scmp.eq.s32.totalorder %s70, 0
    %p792 = por %p790, %p791
    %p793 = scmp.ne.s32.totalorder %s779, %s780
    %p794 = scmp.eq.s32.totalorder %s71, 3
    %p795 = por %p793, %p794
    %p797 = scmp.ne.s32.totalorder %s780, %s796
    %p798 = scmp.eq.s32.totalorder %s71, 0
    %p799 = por %p797, %p798
    %p800 = scmp.le.s32.totalorder 1, %s65
    %p801 = scmp.lt.s32.totalorder %s65, 5
    %p802 = pnand %p800, %p801
    %p803 = pneg %p802
    // Predicated region
    $region9: #{abil_dt_forward.1} parent=5 // pred_check
      _
    $region10: #{abil_dt_forward.1} parent=5 // pred_check_branch
      %805 = sbr.rel (%p802) target = $region12
    $region11: #{abil_dt_forward.1} parent=5 // pred_region
      %s806 = ssub.s32 %s65, 1
      // Predicated region
      $region13: #{abil_dt_forward.1} parent=11 // pred_check
        %p807 = pneg %p202
      $region14: #{abil_dt_forward.1} parent=11 // pred_check_branch
        %809 = sbr.rel (%p807) target = $region16
      $region15: #{abil_dt_forward.1} parent=11 // pred_region
        _
      $region16: #{abil_dt_forward.1} parent=11 // pred_fallthru
        _
      // Predicated region
      $region17: #{abil_dt_forward.1} parent=11 // pred_check
        %p810 = pneg %p223
      $region18: #{abil_dt_forward.1} parent=11 // pred_check_branch
        %812 = sbr.rel (%p810) target = $region20
      $region19: #{abil_dt_forward.1} parent=11 // pred_region
        _
      $region20: #{abil_dt_forward.1} parent=11 // pred_fallthru
        _
      // Predicated region
      $region21: #{abil_dt_forward.1} parent=11 // pred_check
        %p813 = pneg %p244
      $region22: #{abil_dt_forward.1} parent=11 // pred_check_branch
        %815 = sbr.rel (%p813) target = $region24
      $region23: #{abil_dt_forward.1} parent=11 // pred_region
        _
      $region24: #{abil_dt_forward.1} parent=11 // pred_fallthru
        _
      // Predicated region
      $region25: #{abil_dt_forward.1} parent=11 // pred_check
        %p816 = pneg %p265
      $region26: #{abil_dt_forward.1} parent=11 // pred_check_branch
        %818 = sbr.rel (%p816) target = $region28
      $region27: #{abil_dt_forward.1} parent=11 // pred_region
        _
      $region28: #{abil_dt_forward.1} parent=11 // pred_fallthru
        _
      // Predicated region
      $region29: #{abil_dt_forward.1} parent=11 // pred_check
        %p819 = pneg %p286
      $region30: #{abil_dt_forward.1} parent=11 // pred_check_branch
        %821 = sbr.rel (%p819) target = $region32
      $region31: #{abil_dt_forward.1} parent=11 // pred_region
        _
      $region32: #{abil_dt_forward.1} parent=11 // pred_fallthru
        _
      // Predicated region
      $region33: #{abil_dt_forward.1} parent=11 // pred_check
        %p822 = pneg %p307
      $region34: #{abil_dt_forward.1} parent=11 // pred_check_branch
        %824 = sbr.rel (%p822) target = $region36
      $region35: #{abil_dt_forward.1} parent=11 // pred_region
        _
      $region36: #{abil_dt_forward.1} parent=11 // pred_fallthru
        _
      // Predicated region
      $region37: #{abil_dt_forward.1} parent=11 // pred_check
        %p825 = pneg %p328
      $region38: #{abil_dt_forward.1} parent=11 // pred_check_branch
        %827 = sbr.rel (%p825) target = $region40
      $region39: #{abil_dt_forward.1} parent=11 // pred_region
        _
      $region40: #{abil_dt_forward.1} parent=11 // pred_fallthru
        _
      // Predicated region
      $region41: #{abil_dt_forward.1} parent=11 // pred_check
        %p828 = pneg %p349
      $region42: #{abil_dt_forward.1} parent=11 // pred_check_branch
        %830 = sbr.rel (%p828) target = $region44
      $region43: #{abil_dt_forward.1} parent=11 // pred_region
        _
      $region44: #{abil_dt_forward.1} parent=11 // pred_fallthru
        _
      // Predicated region
      $region45: #{abil_dt_forward.1} parent=11 // pred_check
        %p831 = pneg %p370
      $region46: #{abil_dt_forward.1} parent=11 // pred_check_branch
        %833 = sbr.rel (%p831) target = $region48
      $region47: #{abil_dt_forward.1} parent=11 // pred_region
        _
      $region48: #{abil_dt_forward.1} parent=11 // pred_fallthru
        _
      // Predicated region
      $region49: #{abil_dt_forward.1} parent=11 // pred_check
        %p834 = pneg %p703
      $region50: #{abil_dt_forward.1} parent=11 // pred_check_branch
        %836 = sbr.rel (%p834) target = $region52
      $region51: #{abil_dt_forward.1} parent=11 // pred_region
        _
      $region52: #{abil_dt_forward.1} parent=11 // pred_fallthru
        _
      // Predicated region
      $region53: #{abil_dt_forward.1} parent=11 // pred_check
        %p837 = pneg %p724
      $region54: #{abil_dt_forward.1} parent=11 // pred_check_branch
        %839 = sbr.rel (%p837) target = $region56
      $region55: #{abil_dt_forward.1} parent=11 // pred_region
        _
      $region56: #{abil_dt_forward.1} parent=11 // pred_fallthru
        _
      // Predicated region
      $region57: #{abil_dt_forward.1} parent=11 // pred_check
        %p840 = pneg %p745
      $region58: #{abil_dt_forward.1} parent=11 // pred_check_branch
        %842 = sbr.rel (%p840) target = $region60
      $region59: #{abil_dt_forward.1} parent=11 // pred_region
        _
      $region60: #{abil_dt_forward.1} parent=11 // pred_fallthru
        _
      // Predicated region
      $region61: #{abil_dt_forward.1} parent=11 // pred_check
        %p843 = pneg %p766
      $region62: #{abil_dt_forward.1} parent=11 // pred_check_branch
        %845 = sbr.rel (%p843) target = $region64
      $region63: #{abil_dt_forward.1} parent=11 // pred_region
        _
      $region64: #{abil_dt_forward.1} parent=11 // pred_fallthru
        _
    $region12: #{abil_dt_forward.1} parent=5 // pred_fallthru
      _
    %p846 = scmp.lt.s32.totalorder %s65, 4
    // Predicated region
    $region65: #{abil_dt_forward.1} parent=5 // pred_check
      %p847 = pneg %p846
    $region66: #{abil_dt_forward.1} parent=5 // pred_check_branch
      %849 = sbr.rel (%p847) target = $region68
    $region67: #{abil_dt_forward.1} parent=5 // pred_region
      // Predicated region
      $region69: #{abil_dt_forward.1} parent=67 // pred_check
        %p850 = pneg %p97
      $region70: #{abil_dt_forward.1} parent=67 // pred_check_branch
        %852 = sbr.rel (%p850) target = $region72
      $region71: #{abil_dt_forward.1} parent=67 // pred_region
        %p853 = scmp.lt.s32.totalorder %s72, 1
        %s854 = scalar_select %p853, %s72, 1
        %s855 = smul.addr %s854, 4
        %s856 = smul.addr %s855, 8
        %s857 = scalar_lea.vmem %s1, %s856
      $region72: #{abil_dt_forward.1} parent=67 // pred_fallthru
        _
      // Predicated region
      $region73: #{abil_dt_forward.1} parent=67 // pred_check
        %p858 = pneg %p123
      $region74: #{abil_dt_forward.1} parent=67 // pred_check_branch
        %860 = sbr.rel (%p858) target = $region76
      $region75: #{abil_dt_forward.1} parent=67 // pred_region
        %p861 = scmp.lt.s32.totalorder %s72, 1
        %s862 = scalar_select %p861, %s72, 1
        %s863 = smul.addr %s862, 4
        %s864 = scalar_lea.vmem %s3, %s863
      $region76: #{abil_dt_forward.1} parent=67 // pred_fallthru
        _
      // Predicated region
      $region77: #{abil_dt_forward.1} parent=67 // pred_check
        %p865 = pneg %p149
      $region78: #{abil_dt_forward.1} parent=67 // pred_check_branch
        %867 = sbr.rel (%p865) target = $region80
      $region79: #{abil_dt_forward.1} parent=67 // pred_region
        %p868 = scmp.lt.s32.totalorder %s72, 1
        %s869 = scalar_select %p868, %s72, 1
        %s870 = scalar_lea.vmem %s5, %s869
      $region80: #{abil_dt_forward.1} parent=67 // pred_fallthru
        _
      // Predicated region
      $region81: #{abil_dt_forward.1} parent=67 // pred_check
        %p871 = pneg %p175
      $region82: #{abil_dt_forward.1} parent=67 // pred_check_branch
        %873 = sbr.rel (%p871) target = $region84
      $region83: #{abil_dt_forward.1} parent=67 // pred_region
        %p874 = scmp.lt.s32.totalorder %s72, 1
        %s875 = scalar_select %p874, %s72, 1
        %s876 = smul.addr %s875, 4
        %s877 = scalar_lea.vmem %s7, %s876
      $region84: #{abil_dt_forward.1} parent=67 // pred_fallthru
        _
      // Predicated region
      $region85: #{abil_dt_forward.1} parent=67 // pred_check
        %p878 = pneg %p390
      $region86: #{abil_dt_forward.1} parent=67 // pred_check_branch
        %880 = sbr.rel (%p878) target = $region88
      $region87: #{abil_dt_forward.1} parent=67 // pred_region
        %p881 = scmp.lt.s32.totalorder %s73, 1
        %s882 = scalar_select %p881, %s73, 1
        %s883 = scalar_lea.vmem %s27, %s882
      $region88: #{abil_dt_forward.1} parent=67 // pred_fallthru
        _
      // Predicated region
      $region89: #{abil_dt_forward.1} parent=67 // pred_check
        %p884 = pneg %p416
      $region90: #{abil_dt_forward.1} parent=67 // pred_check_branch
        %886 = sbr.rel (%p884) target = $region92
      $region91: #{abil_dt_forward.1} parent=67 // pred_region
        %p887 = scmp.lt.s32.totalorder %s73, 1
        %s888 = scalar_select %p887, %s73, 1
        %s889 = scalar_lea.vmem %s29, %s888
      $region92: #{abil_dt_forward.1} parent=67 // pred_fallthru
        _
      // Predicated region
      $region93: #{abil_dt_forward.1} parent=67 // pred_check
        %p890 = pneg %p442
      $region94: #{abil_dt_forward.1} parent=67 // pred_check_branch
        %892 = sbr.rel (%p890) target = $region96
      $region95: #{abil_dt_forward.1} parent=67 // pred_region
        %p893 = scmp.lt.s32.totalorder %s73, 1
        %s894 = scalar_select %p893, %s73, 1
        %s895 = smul.addr %s894, 48
        %s896 = smul.addr %s895, 4
        %s897 = scalar_lea.vmem %s31, %s896
      $region96: #{abil_dt_forward.1} parent=67 // pred_fallthru
        _
      // Predicated region
      $region97: #{abil_dt_forward.1} parent=67 // pred_check
        %p898 = pneg %p468
      $region98: #{abil_dt_forward.1} parent=67 // pred_check_branch
        %900 = sbr.rel (%p898) target = $region100
      $region99: #{abil_dt_forward.1} parent=67 // pred_region
        %p901 = scmp.lt.s32.totalorder %s73, 1
        %s902 = scalar_select %p901, %s73, 1
        %s903 = smul.addr %s902, 3
        %s904 = scalar_lea.vmem %s33, %s903
      $region100: #{abil_dt_forward.1} parent=67 // pred_fallthru
        _
      // Predicated region
      $region101: #{abil_dt_forward.1} parent=67 // pred_check
        %p905 = pneg %p494
      $region102: #{abil_dt_forward.1} parent=67 // pred_check_branch
        %907 = sbr.rel (%p905) target = $region104
      $region103: #{abil_dt_forward.1} parent=67 // pred_region
        %p908 = scmp.lt.s32.totalorder %s73, 1
        %s909 = scalar_select %p908, %s73, 1
        %s910 = smul.addr %s909, 16
        %s911 = smul.addr %s910, 4
        %s912 = scalar_lea.vmem %s35, %s911
      $region104: #{abil_dt_forward.1} parent=67 // pred_fallthru
        _
      // Predicated region
      $region105: #{abil_dt_forward.1} parent=67 // pred_check
        %p913 = pneg %p520
      $region106: #{abil_dt_forward.1} parent=67 // pred_check_branch
        %915 = sbr.rel (%p913) target = $region108
      $region107: #{abil_dt_forward.1} parent=67 // pred_region
        %p916 = scmp.lt.s32.totalorder %s73, 1
        %s917 = scalar_select %p916, %s73, 1
        %s918 = scalar_lea.vmem %s37, %s917
      $region108: #{abil_dt_forward.1} parent=67 // pred_fallthru
        _
      // Predicated region
      $region109: #{abil_dt_forward.1} parent=67 // pred_check
        %p919 = pneg %p546
      $region110: #{abil_dt_forward.1} parent=67 // pred_check_branch
        %921 = sbr.rel (%p919) target = $region112
      $region111: #{abil_dt_forward.1} parent=67 // pred_region
        %p922 = scmp.lt.s32.totalorder %s73, 1
        %s923 = scalar_select %p922, %s73, 1
        %s924 = scalar_lea.vmem %s39, %s923
      $region112: #{abil_dt_forward.1} parent=67 // pred_fallthru
        _
      // Predicated region
      $region113: #{abil_dt_forward.1} parent=67 // pred_check
        %p925 = pneg %p572
      $region114: #{abil_dt_forward.1} parent=67 // pred_check_branch
        %927 = sbr.rel (%p925) target = $region116
      $region115: #{abil_dt_forward.1} parent=67 // pred_region
        %p928 = scmp.lt.s32.totalorder %s73, 1
        %s929 = scalar_select %p928, %s73, 1
        %s930 = scalar_lea.vmem %s41, %s929
      $region116: #{abil_dt_forward.1} parent=67 // pred_fallthru
        _
      // Predicated region
      $region117: #{abil_dt_forward.1} parent=67 // pred_check
        %p931 = pneg %p598
      $region118: #{abil_dt_forward.1} parent=67 // pred_check_branch
        %933 = sbr.rel (%p931) target = $region120
      $region119: #{abil_dt_forward.1} parent=67 // pred_region
        %p934 = scmp.lt.s32.totalorder %s73, 1
        %s935 = scalar_select %p934, %s73, 1
        %s936 = smul.addr %s935, 64
        %s937 = smul.addr %s936, 4
        %s938 = scalar_lea.vmem %s43, %s937
      $region120: #{abil_dt_forward.1} parent=67 // pred_fallthru
        _
      // Predicated region
      $region121: #{abil_dt_forward.1} parent=67 // pred_check
        %p939 = pneg %p624
      $region122: #{abil_dt_forward.1} parent=67 // pred_check_branch
        %941 = sbr.rel (%p939) target = $region124
      $region123: #{abil_dt_forward.1} parent=67 // pred_region
        %p942 = scmp.lt.s32.totalorder %s73, 1
        %s943 = scalar_select %p942, %s73, 1
        %s944 = smul.addr %s943, 4
        %s945 = scalar_lea.vmem %s45, %s944
      $region124: #{abil_dt_forward.1} parent=67 // pred_fallthru
        _
      // Predicated region
      $region125: #{abil_dt_forward.1} parent=67 // pred_check
        %p946 = pneg %p650
      $region126: #{abil_dt_forward.1} parent=67 // pred_check_branch
        %948 = sbr.rel (%p946) target = $region128
      $region127: #{abil_dt_forward.1} parent=67 // pred_region
        %p949 = scmp.lt.s32.totalorder %s73, 1
        %s950 = scalar_select %p949, %s73, 1
        %s951 = smul.addr %s950, 64
        %s952 = smul.addr %s951, 4
        %s953 = scalar_lea.vmem %s47, %s952
      $region128: #{abil_dt_forward.1} parent=67 // pred_fallthru
        _
      // Predicated region
      $region129: #{abil_dt_forward.1} parent=67 // pred_check
        %p954 = pneg %p676
      $region130: #{abil_dt_forward.1} parent=67 // pred_check_branch
        %956 = sbr.rel (%p954) target = $region132
      $region131: #{abil_dt_forward.1} parent=67 // pred_region
        %p957 = scmp.lt.s32.totalorder %s73, 1
        %s958 = scalar_select %p957, %s73, 1
        %s959 = scalar_lea.vmem %s49, %s958
      $region132: #{abil_dt_forward.1} parent=67 // pred_fallthru
        _
    $region68: #{abil_dt_forward.1} parent=5 // pred_fallthru
      _
    %p960 = scmp.le.s32.totalorder 1, %s65
    %p961 = scmp.lt.s32.totalorder %s65, 5
    %p962 = pnand %p960, %p961
    %p963 = pneg %p962
    // Predicated region
    $region133: #{abil_dt_forward.1} parent=5 // pred_check
      _
    $region134: #{abil_dt_forward.1} parent=5 // pred_check_branch
      %965 = sbr.rel (%p962) target = $region136
    $region135: #{abil_dt_forward.1} parent=5 // pred_region
      %s966 = ssub.s32 %s65, 1
      %p967 = scmp.lt.s32.totalorder %s74, 1
      %s968 = scalar_select %p967, %s74, 1
      %s969 = smul.addr %s968, 4
      %s970 = smul.addr %s969, 8
      %s971 = scalar_lea.vmem %s1, %s970
      %p972 = pneg %p103
      %p973 = pneg %p100
      %p974 = scmp.lt.s32.totalorder %s74, 1
      %s975 = scalar_select %p974, %s74, 1
      %s976 = smul.addr %s975, 4
      %s977 = scalar_lea.vmem %s3, %s976
      %p978 = pneg %p129
      %p979 = pneg %p126
      %p980 = scmp.lt.s32.totalorder %s74, 1
      %s981 = scalar_select %p980, %s74, 1
      %s982 = scalar_lea.vmem %s5, %s981
      %p983 = pneg %p155
      %p984 = pneg %p152
      %p985 = scmp.lt.s32.totalorder %s74, 1
      %s986 = scalar_select %p985, %s74, 1
      %s987 = smul.addr %s986, 4
      %s988 = scalar_lea.vmem %s7, %s987
      %p989 = pneg %p181
      %p990 = pneg %p178
      %p991 = pneg %p202
      %p992 = pneg %p199
      %p993 = pneg %p223
      %p994 = pneg %p220
      %p995 = pneg %p244
      %p996 = pneg %p241
      %p997 = pneg %p265
      %p998 = pneg %p262
      %p999 = pneg %p286
      %p1000 = pneg %p283
      %p1001 = pneg %p307
      %p1002 = pneg %p304
      %p1003 = pneg %p328
      %p1004 = pneg %p325
      %p1005 = pneg %p349
      %p1006 = pneg %p346
      %p1007 = pneg %p370
      %p1008 = pneg %p367
      %p1009 = scmp.lt.s32.totalorder %s75, 1
      %s1010 = scalar_select %p1009, %s75, 1
      %s1011 = scalar_lea.vmem %s27, %s1010
      %p1012 = pneg %p396
      %p1013 = pneg %p393
      %p1014 = scmp.lt.s32.totalorder %s75, 1
      %s1015 = scalar_select %p1014, %s75, 1
      %s1016 = scalar_lea.vmem %s29, %s1015
      %p1017 = pneg %p422
      %p1018 = pneg %p419
      %p1019 = scmp.lt.s32.totalorder %s75, 1
      %s1020 = scalar_select %p1019, %s75, 1
      %s1021 = smul.addr %s1020, 48
      %s1022 = smul.addr %s1021, 4
      %s1023 = scalar_lea.vmem %s31, %s1022
      %p1024 = pneg %p448
      %p1025 = pneg %p445
      %p1026 = scmp.lt.s32.totalorder %s75, 1
      %s1027 = scalar_select %p1026, %s75, 1
      %s1028 = smul.addr %s1027, 3
      %s1029 = scalar_lea.vmem %s33, %s1028
      %p1030 = pneg %p474
      %p1031 = pneg %p471
      %p1032 = scmp.lt.s32.totalorder %s75, 1
      %s1033 = scalar_select %p1032, %s75, 1
      %s1034 = smul.addr %s1033, 16
      %s1035 = smul.addr %s1034, 4
      %s1036 = scalar_lea.vmem %s35, %s1035
      %p1037 = pneg %p500
      %p1038 = pneg %p497
      %p1039 = scmp.lt.s32.totalorder %s75, 1
      %s1040 = scalar_select %p1039, %s75, 1
      %s1041 = scalar_lea.vmem %s37, %s1040
      %p1042 = pneg %p526
      %p1043 = pneg %p523
      %p1044 = scmp.lt.s32.totalorder %s75, 1
      %s1045 = scalar_select %p1044, %s75, 1
      %s1046 = scalar_lea.vmem %s39, %s1045
      %p1047 = pneg %p552
      %p1048 = pneg %p549
      %p1049 = scmp.lt.s32.totalorder %s75, 1
      %s1050 = scalar_select %p1049, %s75, 1
      %s1051 = scalar_lea.vmem %s41, %s1050
      %p1052 = pneg %p578
      %p1053 = pneg %p575
      %p1054 = scmp.lt.s32.totalorder %s75, 1
      %s1055 = scalar_select %p1054, %s75, 1
      %s1056 = smul.addr %s1055, 64
      %s1057 = smul.addr %s1056, 4
      %s1058 = scalar_lea.vmem %s43, %s1057
      %p1059 = pneg %p604
      %p1060 = pneg %p601
      %p1061 = scmp.lt.s32.totalorder %s75, 1
      %s1062 = scalar_select %p1061, %s75, 1
      %s1063 = smul.addr %s1062, 4
      %s1064 = scalar_lea.vmem %s45, %s1063
      %p1065 = pneg %p630
      %p1066 = pneg %p627
      %p1067 = scmp.lt.s32.totalorder %s75, 1
      %s1068 = scalar_select %p1067, %s75, 1
      %s1069 = smul.addr %s1068, 64
      %s1070 = smul.addr %s1069, 4
      %s1071 = scalar_lea.vmem %s47, %s1070
      %p1072 = pneg %p656
      %p1073 = pneg %p653
      %p1074 = scmp.lt.s32.totalorder %s75, 1
      %s1075 = scalar_select %p1074, %s75, 1
      %s1076 = scalar_lea.vmem %s49, %s1075
      %p1077 = pneg %p682
      %p1078 = pneg %p679
      %p1079 = pneg %p703
      %p1080 = pneg %p700
      %p1081 = pneg %p724
      %p1082 = pneg %p721
      %p1083 = pneg %p745
      %p1084 = pneg %p742
      %p1085 = pneg %p766
      %p1086 = pneg %p763
      %p1087 = pneg %p792
      %p1088 = pneg %p789
      %p1089 = scmp.lt.s32.totalorder %s74, 1
      %s1090 = scalar_select %p1089, %s74, 1
      %s1091 = smul.addr %s1090, 2
      %s1092 = smul.addr %s1091, 8
      %s1093 = scalar_lea.vmem %s59, %s1092
      %p1094 = scmp.lt.s32.totalorder %s74, 1
      %s1095 = scalar_select %p1094, %s74, 1
      %s1096 = smul.addr %s1095, 4
      %s1097 = smul.addr %s1096, 8
      %s1098 = scalar_lea.vmem %s1, %s1097
      %p1099 = scmp.lt.s32.totalorder %s74, 1
      %s1100 = scalar_select %p1099, %s74, 1
      %s1101 = smul.addr %s1100, 4
      %s1102 = scalar_lea.vmem %s3, %s1101
      %p1103 = scmp.lt.s32.totalorder %s74, 1
      %s1104 = scalar_select %p1103, %s74, 1
      %s1105 = scalar_lea.vmem %s5, %s1104
      %p1106 = scmp.lt.s32.totalorder %s74, 1
      %s1107 = scalar_select %p1106, %s74, 1
      %s1108 = smul.addr %s1107, 4
      %s1109 = scalar_lea.vmem %s7, %s1108
      %p1110 = scmp.lt.s32.totalorder %s75, 1
      %s1111 = scalar_select %p1110, %s75, 1
      %s1112 = scalar_lea.vmem %s27, %s1111
      %p1113 = scmp.lt.s32.totalorder %s75, 1
      %s1114 = scalar_select %p1113, %s75, 1
      %s1115 = scalar_lea.vmem %s29, %s1114
      %p1116 = scmp.lt.s32.totalorder %s75, 1
      %s1117 = scalar_select %p1116, %s75, 1
      %s1118 = smul.addr %s1117, 48
      %s1119 = smul.addr %s1118, 4
      %s1120 = scalar_lea.vmem %s31, %s1119
      %p1121 = scmp.lt.s32.totalorder %s75, 1
      %s1122 = scalar_select %p1121, %s75, 1
      %s1123 = smul.addr %s1122, 3
      %s1124 = scalar_lea.vmem %s33, %s1123
      %p1125 = scmp.lt.s32.totalorder %s75, 1
      %s1126 = scalar_select %p1125, %s75, 1
      %s1127 = smul.addr %s1126, 16
      %s1128 = smul.addr %s1127, 4
      %s1129 = scalar_lea.vmem %s35, %s1128
      %p1130 = scmp.lt.s32.totalorder %s75, 1
      %s1131 = scalar_select %p1130, %s75, 1
      %s1132 = scalar_lea.vmem %s37, %s1131
      %p1133 = scmp.lt.s32.totalorder %s75, 1
      %s1134 = scalar_select %p1133, %s75, 1
      %s1135 = scalar_lea.vmem %s39, %s1134
      %p1136 = scmp.lt.s32.totalorder %s75, 1
      %s1137 = scalar_select %p1136, %s75, 1
      %s1138 = scalar_lea.vmem %s41, %s1137
      %p1139 = scmp.lt.s32.totalorder %s75, 1
      %s1140 = scalar_select %p1139, %s75, 1
      %s1141 = smul.addr %s1140, 64
      %s1142 = smul.addr %s1141, 4
      %s1143 = scalar_lea.vmem %s43, %s1142
      %p1144 = scmp.lt.s32.totalorder %s75, 1
      %s1145 = scalar_select %p1144, %s75, 1
      %s1146 = smul.addr %s1145, 4
      %s1147 = scalar_lea.vmem %s45, %s1146
      %p1148 = scmp.lt.s32.totalorder %s75, 1
      %s1149 = scalar_select %p1148, %s75, 1
      %s1150 = smul.addr %s1149, 64
      %s1151 = smul.addr %s1150, 4
      %s1152 = scalar_lea.vmem %s47, %s1151
      %p1153 = scmp.lt.s32.totalorder %s75, 1
      %s1154 = scalar_select %p1153, %s75, 1
      %s1155 = scalar_lea.vmem %s49, %s1154
      %p1156 = scmp.lt.s32.totalorder %s74, 1
      %s1157 = scalar_select %p1156, %s74, 1
      %s1158 = smul.addr %s1157, 2
      %s1159 = smul.addr %s1158, 8
      %s1160 = scalar_lea.vmem %s59, %s1159
      %p1162 = scmp.eq.s32.totalorder %s75, 0
      // Predicated region
      $region137: #{abil_dt_forward.1} parent=135 // pred_check
        %p1163 = pneg %p1162
      $region138: #{abil_dt_forward.1} parent=135 // pred_check_branch
        %1165 = sbr.rel (%p1163) target = $region140
      $region139: #{abil_dt_forward.1} parent=135 // pred_region
        %v1166 = vld [vmem:[%s1098] sm:$0xff]
        %v1167 = vld [vmem:[%s1098 + $0x8] sm:$0xff]
        %v1168 = vld [vmem:[%s1098 + $0x10] sm:$0xff]
        %v1169 = vld [vmem:[%s1098 + $0x18] sm:$0xff]
        %v1170 = vpack.c.bf16 %v1167, %v1166
        %v1171 = vpack.c.bf16 %v1169, %v1168
        %v1172 = vld [vmem:[%s9] sm:$0xf]
        %v1173 = vld [vmem:[%s9 + $0x4] sm:$0xf]
        %v1174 = vld [vmem:[%s11] sm:$0x1]
        %v1176 = vlaneseq
        %v1177 = vshrl.u32 %v1176, 7
        %v1178 = vsub.s32 0, %v1177
        %v1179 = vrot.slane %v1174, %v1178
        %v1183 = vunpack.c.l.b16 %v1172
        %v1184 = vunpack.c.l.b16 %v1173
        %v1185 = vpack.c.b16 %v1184, %v1183
        %vm1187 = vcmask 130048
        %v1189 = vsel %vm1187, %v1170, 0
        %v1192 = vsel %vm1187, %v1171, 0
        %1194 = vmatprep.subr.bf16.mxu0 0
        %1195 = vmatpush1.bf16.msra.mxu0 %v1185
        %1196 = vmatprep.subr.bf16.mxu0 0
        %1197 = vmatpush1.bf16.msra.mxu0 0
        %1198 = vmatprep.subr.bf16.mxu0 0
        %1199 = vmatpush1.bf16.msra.mxu0 0
        %1200 = vmatprep.subr.bf16.mxu0 0
        %1201 = vmatpush1.bf16.msra.mxu0 0
        %1202 = vmatprep.subr.bf16.mxu0 0
        %1203 = vmatpush1.bf16.msra.mxu0 0
        %1204 = vmatprep.subr.bf16.mxu0 0
        %1205 = vmatpush1.bf16.msra.mxu0 0
        %1206 = vmatprep.subr.bf16.mxu0 0
        %1207 = vmatpush1.bf16.msra.mxu0 0
        %1208 = vmatprep.subr.bf16.mxu0 0
        %1209 = vmatpush1.bf16.msra.mxu0 0
        %1210 = vmatprep.subr.bf16.mxu0 0
        %1211 = vmatpush1.bf16.msra.mxu0 0
        %1212 = vmatprep.subr.bf16.mxu0 0
        %1213 = vmatpush1.bf16.msra.mxu0 0
        %1214 = vmatprep.subr.bf16.mxu0 0
        %1215 = vmatpush1.bf16.msra.mxu0 0
        %1216 = vmatprep.subr.bf16.mxu0 0
        %1217 = vmatpush1.bf16.msra.mxu0 0
        %1218 = vmatprep.subr.bf16.mxu0 0
        %1219 = vmatpush1.bf16.msra.mxu0 0
        %1220 = vmatprep.subr.bf16.mxu0 0
        %1221 = vmatpush1.bf16.msra.mxu0 0
        %1222 = vmatprep.subr.bf16.mxu0 0
        %1223 = vmatpush1.bf16.msra.mxu0 0
        %1224 = vmatprep.subr.bf16.mxu0 0
        %1225 = vmatpush1.bf16.msra.mxu0 0
        %1226 = vmatprep.mubr.bf16.mxu0 0
        %1227 = vmatmul.mubr.bf16.gmra.mrb[0].mxu0 %v1189
        %v1228 = vpop.f32.mrb[0].mxu0
        %v1229 = vadd.f32 %v1179, %v1228
        %v1230 = vpop.f32.mrb[0].mxu0
        %v1231 = vpop.f32.mrb[0].mxu0
        %v1232 = vadd.f32 %v1179, %v1231
        %v1233 = vpop.f32.mrb[0].mxu0
        %1234 = vmatprep.mubr.bf16.mxu0 0
        %1235 = vmatmul.mubr.bf16.gmra.mrb[0].mxu0 %v1192
        %v1236 = vpop.f32.mrb[0].mxu0
        %v1237 = vadd.f32 %v1179, %v1236
        %v1238 = vpop.f32.mrb[0].mxu0
        %v1239 = vpop.f32.mrb[0].mxu0
        %v1240 = vadd.f32 %v1179, %v1239
        %v1241 = vpop.f32.mrb[0].mxu0
        %1242 = vdwg.mxu0
        %v1243 = vmax.f32 %v1229, 0.0
        %v1244 = vmax.f32 %v1232, 0.0
        %v1245 = vmax.f32 %v1237, 0.0
        %v1246 = vmax.f32 %v1240, 0.0
        %v1247 = vpack.c.bf16 %v1244, %v1243
        %v1248 = vpack.c.bf16 %v1246, %v1245
        %v1249 = vld [vmem:[%s13] sm:$0xf]
        %v1250 = vld [vmem:[%s13 + $0x4] sm:$0xf]
        %v1251 = vld [vmem:[%s13 + $0x8] sm:$0xf]
        %v1252 = vld [vmem:[%s13 + $0xc] sm:$0xf]
        %v1253 = vld [vmem:[%s13 + $0x10] sm:$0xf]
        %v1254 = vld [vmem:[%s13 + $0x14] sm:$0xf]
        %v1255 = vld [vmem:[%s13 + $0x18] sm:$0xf]
        %v1256 = vld [vmem:[%s13 + $0x1c] sm:$0xf]
        %v1257 = vld [vmem:[%s13 + $0x20] sm:$0xf]
        %v1258 = vld [vmem:[%s13 + $0x24] sm:$0xf]
        %v1259 = vld [vmem:[%s13 + $0x28] sm:$0xf]
        %v1260 = vld [vmem:[%s13 + $0x2c] sm:$0xf]
        %v1261 = vld [vmem:[%s13 + $0x30] sm:$0xf]
        %v1262 = vld [vmem:[%s13 + $0x34] sm:$0xf]
        %v1263 = vld [vmem:[%s13 + $0x38] sm:$0xf]
        %v1264 = vld [vmem:[%s13 + $0x3c] sm:$0xf]
        %v1265 = vld [vmem:[%s15] sm:$0x1]
        %v1267 = vlaneseq
        %v1268 = vshrl.u32 %v1267, 7
        %v1269 = vsub.s32 0, %v1268
        %v1270 = vrot.slane %v1265, %v1269
        %v1288 = vunpack.c.l.b16 %v1249
        %v1289 = vunpack.c.l.b16 %v1250
        %v1290 = vunpack.c.l.b16 %v1251
        %v1291 = vunpack.c.l.b16 %v1252
        %v1292 = vunpack.c.l.b16 %v1253
        %v1293 = vunpack.c.l.b16 %v1254
        %v1294 = vunpack.c.l.b16 %v1255
        %v1295 = vunpack.c.l.b16 %v1256
        %v1296 = vunpack.c.l.b16 %v1257
        %v1297 = vunpack.c.l.b16 %v1258
        %v1298 = vunpack.c.l.b16 %v1259
        %v1299 = vunpack.c.l.b16 %v1260
        %v1300 = vunpack.c.l.b16 %v1261
        %v1301 = vunpack.c.l.b16 %v1262
        %v1302 = vunpack.c.l.b16 %v1263
        %v1303 = vunpack.c.l.b16 %v1264
        %v1304 = vpack.c.b16 %v1289, %v1288
        %v1305 = vpack.c.b16 %v1291, %v1290
        %v1306 = vpack.c.b16 %v1293, %v1292
        %v1307 = vpack.c.b16 %v1295, %v1294
        %v1308 = vpack.c.b16 %v1297, %v1296
        %v1309 = vpack.c.b16 %v1299, %v1298
        %v1310 = vpack.c.b16 %v1301, %v1300
        %v1311 = vpack.c.b16 %v1303, %v1302
        %1320 = vmatprep.subr.bf16.mxu0 0
        %1321 = vmatpush1.bf16.msra.mxu0 %v1304
        %1322 = vmatprep.subr.bf16.mxu0 0
        %1323 = vmatpush1.bf16.msra.mxu0 %v1305
        %1324 = vmatprep.subr.bf16.mxu0 0
        %1325 = vmatpush1.bf16.msra.mxu0 %v1306
        %1326 = vmatprep.subr.bf16.mxu0 0
        %1327 = vmatpush1.bf16.msra.mxu0 %v1307
        %1328 = vmatprep.subr.bf16.mxu0 0
        %1329 = vmatpush1.bf16.msra.mxu0 %v1308
        %1330 = vmatprep.subr.bf16.mxu0 0
        %1331 = vmatpush1.bf16.msra.mxu0 %v1309
        %1332 = vmatprep.subr.bf16.mxu0 0
        %1333 = vmatpush1.bf16.msra.mxu0 %v1310
        %1334 = vmatprep.subr.bf16.mxu0 0
        %1335 = vmatpush1.bf16.msra.mxu0 %v1311
        %1336 = vmatprep.subr.bf16.mxu0 0
        %1337 = vmatpush1.bf16.msra.mxu0 0
        %1338 = vmatprep.subr.bf16.mxu0 0
        %1339 = vmatpush1.bf16.msra.mxu0 0
        %1340 = vmatprep.subr.bf16.mxu0 0
        %1341 = vmatpush1.bf16.msra.mxu0 0
        %1342 = vmatprep.subr.bf16.mxu0 0
        %1343 = vmatpush1.bf16.msra.mxu0 0
        %1344 = vmatprep.subr.bf16.mxu0 0
        %1345 = vmatpush1.bf16.msra.mxu0 0
        %1346 = vmatprep.subr.bf16.mxu0 0
        %1347 = vmatpush1.bf16.msra.mxu0 0
        %1348 = vmatprep.subr.bf16.mxu0 0
        %1349 = vmatpush1.bf16.msra.mxu0 0
        %1350 = vmatprep.subr.bf16.mxu0 0
        %1351 = vmatpush1.bf16.msra.mxu0 0
        %1352 = vmatprep.mubr.bf16.mxu0 0
        %1353 = vmatmul.mubr.bf16.gmra.mrb[0].mxu0 %v1247
        %v1354 = vpop.f32.mrb[0].mxu0
        %v1355 = vadd.f32 %v1270, %v1354
        %v1356 = vpop.f32.mrb[0].mxu0
        %v1357 = vpop.f32.mrb[0].mxu0
        %v1358 = vadd.f32 %v1270, %v1357
        %v1359 = vpop.f32.mrb[0].mxu0
        %1360 = vmatprep.mubr.bf16.mxu0 0
        %1361 = vmatmul.mubr.bf16.gmra.mrb[0].mxu0 %v1248
        %v1362 = vpop.f32.mrb[0].mxu0
        %v1363 = vadd.f32 %v1270, %v1362
        %v1364 = vpop.f32.mrb[0].mxu0
        %v1365 = vpop.f32.mrb[0].mxu0
        %v1366 = vadd.f32 %v1270, %v1365
        %v1367 = vpop.f32.mrb[0].mxu0
        %1368 = vdwg.mxu0
        %v1369 = vmax.f32 %v1355, 0.0
        %v1370 = vmax.f32 %v1358, 0.0
        %v1371 = vmax.f32 %v1363, 0.0
        %v1372 = vmax.f32 %v1366, 0.0
        %v1373 = vld [vmem:[%s1102] sm:$0xf]
        %vm1374 = vcmask 60416
        %v1375 = vsel %vm1374, %v1373, 0.0
        %1376 = vadd.xlane.f32.xlu0 %v1375
        %v1377 = vpop.xlane.xlu0 %1376
        %v1378 = vadd.f32 %v1377, 1e-06
        %v1379 = vld [vmem:[%s1105] sm:$0x1]
        %v1380 = vpack.c.bf16 %v1379, %v1379
        %v1381 = vld [vmem:[%s17] sm:$0xf]
        %v1382 = vld [vmem:[%s17 + $0x4] sm:$0xf]
        %v1383 = vld [vmem:[%s19] sm:$0x1]
        %v1386 = vunpack.c.l.b16 %v1381
        %v1387 = vunpack.c.l.b16 %v1382
        %v1388 = vpack.c.b16 %v1387, %v1386
        %v1391 = vsel %vm1187, %v1380, 0
        %1393 = vmatprep.subr.bf16.mxu0 0
        %1394 = vmatpush1.bf16.msra.mxu0 %v1388
        %1395 = vmatprep.subr.bf16.mxu0 0
        %1396 = vmatpush1.bf16.msra.mxu0 0
        %1397 = vmatprep.subr.bf16.mxu0 0
        %1398 = vmatpush1.bf16.msra.mxu0 0
        %1399 = vmatprep.subr.bf16.mxu0 0
        %1400 = vmatpush1.bf16.msra.mxu0 0
        %1401 = vmatprep.subr.bf16.mxu0 0
        %1402 = vmatpush1.bf16.msra.mxu0 0
        %1403 = vmatprep.subr.bf16.mxu0 0
        %1404 = vmatpush1.bf16.msra.mxu0 0
        %1405 = vmatprep.subr.bf16.mxu0 0
        %1406 = vmatpush1.bf16.msra.mxu0 0
        %1407 = vmatprep.subr.bf16.mxu0 0
        %1408 = vmatpush1.bf16.msra.mxu0 0
        %1409 = vmatprep.subr.bf16.mxu0 0
        %1410 = vmatpush1.bf16.msra.mxu0 0
        %1411 = vmatprep.subr.bf16.mxu0 0
        %1412 = vmatpush1.bf16.msra.mxu0 0
        %1413 = vmatprep.subr.bf16.mxu0 0
        %1414 = vmatpush1.bf16.msra.mxu0 0
        %1415 = vmatprep.subr.bf16.mxu0 0
        %1416 = vmatpush1.bf16.msra.mxu0 0
        %1417 = vmatprep.subr.bf16.mxu0 0
        %1418 = vmatpush1.bf16.msra.mxu0 0
        %1419 = vmatprep.subr.bf16.mxu0 0
        %1420 = vmatpush1.bf16.msra.mxu0 0
        %1421 = vmatprep.subr.bf16.mxu0 0
        %1422 = vmatpush1.bf16.msra.mxu0 0
        %1423 = vmatprep.subr.bf16.mxu0 0
        %1424 = vmatpush1.bf16.msra.mxu0 0
        %1425 = vmatprep.mubr.bf16.mxu0 0
        %1426 = vmatmul.mubr.bf16.gmra.mrb[0].mxu0 %v1391
        %v1427 = vpop.f32.mrb[0].mxu0
        %v1428 = vadd.f32 %v1383, %v1427
        %v1429 = vpop.f32.mrb[0].mxu0
        %v1430 = vpop.f32.mrb[0].mxu0
        %v1431 = vpop.f32.mrb[0].mxu0
        %1432 = vdwg.mxu0
        %v1433 = vld [vmem:[%s1109] sm:$0xf]
        %v1434 = vlaneseq
        %v1435 = vand.u32 %v1434, 127
        %1436 = vset.pattern.permute.xlu0 0
        %1437 = vperm.xlu0 %1436, %v1433
        %v1438 = vpop.permute.xlu0 %1437
        %vm1439 = vcmp.eq.s32.totalorder %v1435, %v1438
        %v1440 = vsel %vm1439, 1, 0
        %v1441 = vcvt.s32.f32 %v1440
        %v1442 = vpack.c.bf16 %v1441, %v1441
        %v1443 = vld [vmem:[%s21] sm:$0x3]
        %vm1444 = vcmask 31744
        %v1446 = vsel %vm1444, %v1442, 0
        %vm1448 = vcmask 1041408
        %v1450 = vsel %vm1448, %v1443, 0
        %1452 = vmatprep.subr.bf16.mxu0 0
        %1453 = vmatpush1.bf16.msra.mxu0 %v1450
        %1454 = vmatprep.subr.bf16.mxu0 0
        %1455 = vmatpush1.bf16.msra.mxu0 0
        %1456 = vmatprep.subr.bf16.mxu0 0
        %1457 = vmatpush1.bf16.msra.mxu0 0
        %1458 = vmatprep.subr.bf16.mxu0 0
        %1459 = vmatpush1.bf16.msra.mxu0 0
        %1460 = vmatprep.subr.bf16.mxu0 0
        %1461 = vmatpush1.bf16.msra.mxu0 0
        %1462 = vmatprep.subr.bf16.mxu0 0
        %1463 = vmatpush1.bf16.msra.mxu0 0
        %1464 = vmatprep.subr.bf16.mxu0 0
        %1465 = vmatpush1.bf16.msra.mxu0 0
        %1466 = vmatprep.subr.bf16.mxu0 0
        %1467 = vmatpush1.bf16.msra.mxu0 0
        %1468 = vmatprep.subr.bf16.mxu0 0
        %1469 = vmatpush1.bf16.msra.mxu0 0
        %1470 = vmatprep.subr.bf16.mxu0 0
        %1471 = vmatpush1.bf16.msra.mxu0 0
        %1472 = vmatprep.subr.bf16.mxu0 0
        %1473 = vmatpush1.bf16.msra.mxu0 0
        %1474 = vmatprep.subr.bf16.mxu0 0
        %1475 = vmatpush1.bf16.msra.mxu0 0
        %1476 = vmatprep.subr.bf16.mxu0 0
        %1477 = vmatpush1.bf16.msra.mxu0 0
        %1478 = vmatprep.subr.bf16.mxu0 0
        %1479 = vmatpush1.bf16.msra.mxu0 0
        %1480 = vmatprep.subr.bf16.mxu0 0
        %1481 = vmatpush1.bf16.msra.mxu0 0
        %1482 = vmatprep.subr.bf16.mxu0 0
        %1483 = vmatpush1.bf16.msra.mxu0 0
        %1484 = vmatprep.mubr.bf16.mxu0 0
        %1485 = vmatmul.mubr.bf16.gmra.mrb[0].mxu0 %v1446
        %v1486 = vpop.f32.mrb[0].mxu0
        %v1487 = vadd.f32 0.0, %v1486
        %v1488 = vpop.f32.mrb[0].mxu0
        %v1489 = vpop.f32.mrb[0].mxu0
        %v1490 = vpop.f32.mrb[0].mxu0
        %1491 = vdwg.mxu0
        %v1492 = vld [vmem:[%s23] sm:$0xff]
        %v1493 = vld [vmem:[%s23 + $0x8] sm:$0x1]
        %v1494 = vadd.f32 %v1428, %v1492
        %1495 = vst [vmem:[#allocation2] sm:$0x1] %v1494
        %vm1496 = vcmask 64512
        %v1498 = vsel %vm1496, %v1373, 0
        %1500 = vmatprep.subr.mxu0 0.0
        %1501 = vmatpush1.msra.mxu0 %v1369
        %1502 = vmatprep.subr.mxu0 0.0
        %1503 = vmatpush1.msra.mxu0 0.0
        %1504 = vmatprep.subr.mxu0 0.0
        %1505 = vmatpush1.msra.mxu0 0.0
        %1506 = vmatprep.subr.mxu0 0.0
        %1507 = vmatpush1.msra.mxu0 0.0
        %1508 = vmatprep.subr.mxu0 0.0
        %1509 = vmatpush1.msra.mxu0 0.0
        %1510 = vmatprep.subr.mxu0 0.0
        %1511 = vmatpush1.msra.mxu0 0.0
        %1512 = vmatprep.subr.mxu0 0.0
        %1513 = vmatpush1.msra.mxu0 0.0
        %1514 = vmatprep.subr.mxu0 0.0
        %1515 = vmatpush1.msra.mxu0 0.0
        %1516 = vmatprep.subr.mxu0 0.0
        %1517 = vmatpush1.msra.mxu0 0.0
        %1518 = vmatprep.subr.mxu0 0.0
        %1519 = vmatpush1.msra.mxu0 0.0
        %1520 = vmatprep.subr.mxu0 0.0
        %1521 = vmatpush1.msra.mxu0 0.0
        %1522 = vmatprep.subr.mxu0 0.0
        %1523 = vmatpush1.msra.mxu0 0.0
        %1524 = vmatprep.subr.mxu0 0.0
        %1525 = vmatpush1.msra.mxu0 0.0
        %1526 = vmatprep.subr.mxu0 0.0
        %1527 = vmatpush1.msra.mxu0 0.0
        %1528 = vmatprep.subr.mxu0 0.0
        %1529 = vmatpush1.msra.mxu0 0.0
        %1530 = vmatprep.subr.mxu0 0.0
        %1531 = vmatpush1.msra.mxu0 0.0
        %1532 = vmatprep.subr.mxu0 0.0
        %1533 = vmatpush1.msra.mxu0 0.0
        %1534 = vmatprep.subr.mxu0 0.0
        %1535 = vmatpush1.msra.mxu0 0.0
        %1536 = vmatprep.subr.mxu0 0.0
        %1537 = vmatpush1.msra.mxu0 0.0
        %1538 = vmatprep.subr.mxu0 0.0
        %1539 = vmatpush1.msra.mxu0 0.0
        %1540 = vmatprep.subr.mxu0 0.0
        %1541 = vmatpush1.msra.mxu0 0.0
        %1542 = vmatprep.subr.mxu0 0.0
        %1543 = vmatpush1.msra.mxu0 0.0
        %1544 = vmatprep.subr.mxu0 0.0
        %1545 = vmatpush1.msra.mxu0 0.0
        %1546 = vmatprep.subr.mxu0 0.0
        %1547 = vmatpush1.msra.mxu0 0.0
        %1548 = vmatprep.subr.mxu0 0.0
        %1549 = vmatpush1.msra.mxu0 0.0
        %1550 = vmatprep.subr.mxu0 0.0
        %1551 = vmatpush1.msra.mxu0 0.0
        %1552 = vmatprep.subr.mxu0 0.0
        %1553 = vmatpush1.msra.mxu0 0.0
        %1554 = vmatprep.subr.mxu0 0.0
        %1555 = vmatpush1.msra.mxu0 0.0
        %1556 = vmatprep.subr.mxu0 0.0
        %1557 = vmatpush1.msra.mxu0 0.0
        %1558 = vmatprep.subr.mxu0 0.0
        %1559 = vmatpush1.msra.mxu0 0.0
        %1560 = vmatprep.subr.mxu0 0.0
        %1561 = vmatpush1.msra.mxu0 0.0
        %1562 = vmatprep.subr.mxu0 0.0
        %1563 = vmatpush1.msra.mxu0 0.0
        %1564 = vmatprep.mubr.f32.mxu0 0.0
        %1565 = vmatmul.mubr.f32.gmra.mrb[0].mxu0 %v1498
        %v1566 = vpop.f32.mrb[0].mxu0
        %v1567 = vadd.f32 0.0, %v1566
        %v1568 = vpop.f32.mrb[0].mxu0
        %1569 = vdwg.mxu0
        %v1570 = vrcp.pop %v1378
        %v1571 = vmul.f32 %v1567, %v1570
        %v1573 = vrot.slane %v1492, 1
        %v1575 = vadd.f32 %v1571, %v1573
        %1576 = vst [vmem:[#allocation2 + $0x1] sm:$0x1] %v1575
        %v1577 = vrot.slane %v1492, 2
        %v1579 = vadd.f32 %v1487, %v1577
        %1580 = vst [vmem:[#allocation2 + $0x2] sm:$0x1] %v1579
        %v1581 = vrot.slane %v1373, 1
        %v1582 = vsel %vm1496, %v1581, 0
        %1584 = vmatprep.subr.mxu0 0.0
        %1585 = vmatpush1.msra.mxu0 %v1370
        %1586 = vmatprep.subr.mxu0 0.0
        %1587 = vmatpush1.msra.mxu0 0.0
        %1588 = vmatprep.subr.mxu0 0.0
        %1589 = vmatpush1.msra.mxu0 0.0
        %1590 = vmatprep.subr.mxu0 0.0
        %1591 = vmatpush1.msra.mxu0 0.0
        %1592 = vmatprep.subr.mxu0 0.0
        %1593 = vmatpush1.msra.mxu0 0.0
        %1594 = vmatprep.subr.mxu0 0.0
        %1595 = vmatpush1.msra.mxu0 0.0
        %1596 = vmatprep.subr.mxu0 0.0
        %1597 = vmatpush1.msra.mxu0 0.0
        %1598 = vmatprep.subr.mxu0 0.0
        %1599 = vmatpush1.msra.mxu0 0.0
        %1600 = vmatprep.subr.mxu0 0.0
        %1601 = vmatpush1.msra.mxu0 0.0
        %1602 = vmatprep.subr.mxu0 0.0
        %1603 = vmatpush1.msra.mxu0 0.0
        %1604 = vmatprep.subr.mxu0 0.0
        %1605 = vmatpush1.msra.mxu0 0.0
        %1606 = vmatprep.subr.mxu0 0.0
        %1607 = vmatpush1.msra.mxu0 0.0
        %1608 = vmatprep.subr.mxu0 0.0
        %1609 = vmatpush1.msra.mxu0 0.0
        %1610 = vmatprep.subr.mxu0 0.0
        %1611 = vmatpush1.msra.mxu0 0.0
        %1612 = vmatprep.subr.mxu0 0.0
        %1613 = vmatpush1.msra.mxu0 0.0
        %1614 = vmatprep.subr.mxu0 0.0
        %1615 = vmatpush1.msra.mxu0 0.0
        %1616 = vmatprep.subr.mxu0 0.0
        %1617 = vmatpush1.msra.mxu0 0.0
        %1618 = vmatprep.subr.mxu0 0.0
        %1619 = vmatpush1.msra.mxu0 0.0
        %1620 = vmatprep.subr.mxu0 0.0
        %1621 = vmatpush1.msra.mxu0 0.0
        %1622 = vmatprep.subr.mxu0 0.0
        %1623 = vmatpush1.msra.mxu0 0.0
        %1624 = vmatprep.subr.mxu0 0.0
        %1625 = vmatpush1.msra.mxu0 0.0
        %1626 = vmatprep.subr.mxu0 0.0
        %1627 = vmatpush1.msra.mxu0 0.0
        %1628 = vmatprep.subr.mxu0 0.0
        %1629 = vmatpush1.msra.mxu0 0.0
        %1630 = vmatprep.subr.mxu0 0.0
        %1631 = vmatpush1.msra.mxu0 0.0
        %1632 = vmatprep.subr.mxu0 0.0
        %1633 = vmatpush1.msra.mxu0 0.0
        %1634 = vmatprep.subr.mxu0 0.0
        %1635 = vmatpush1.msra.mxu0 0.0
        %1636 = vmatprep.subr.mxu0 0.0
        %1637 = vmatpush1.msra.mxu0 0.0
        %1638 = vmatprep.subr.mxu0 0.0
        %1639 = vmatpush1.msra.mxu0 0.0
        %1640 = vmatprep.subr.mxu0 0.0
        %1641 = vmatpush1.msra.mxu0 0.0
        %1642 = vmatprep.subr.mxu0 0.0
        %1643 = vmatpush1.msra.mxu0 0.0
        %1644 = vmatprep.subr.mxu0 0.0
        %1645 = vmatpush1.msra.mxu0 0.0
        %1646 = vmatprep.subr.mxu0 0.0
        %1647 = vmatpush1.msra.mxu0 0.0
        %1648 = vmatprep.mubr.f32.mxu0 0.0
        %1649 = vmatmul.mubr.f32.gmra.mrb[0].mxu0 %v1582
        %v1650 = vpop.f32.mrb[0].mxu0
        %v1651 = vadd.f32 0.0, %v1650
        %v1652 = vpop.f32.mrb[0].mxu0
        %1653 = vdwg.mxu0
        %v1655 = vrot.slane %v1378, 1
        %v1657 = vrcp.pop %v1655
        %v1658 = vmul.f32 %v1651, %v1657
        %v1659 = vrot.slane %v1492, 3
        %v1661 = vadd.f32 %v1658, %v1659
        %1662 = vst [vmem:[#allocation2 + $0x3] sm:$0x1] %v1661
        %v1663 = vadd.f32 %v1487, %v1659
        %1664 = vst [vmem:[#allocation2 + $0x3] sm:$0x2] %v1663
        %v1665 = vrot.slane %v1373, 2
        %v1666 = vsel %vm1496, %v1665, 0
        %1668 = vmatprep.subr.mxu0 0.0
        %1669 = vmatpush1.msra.mxu0 %v1371
        %1670 = vmatprep.subr.mxu0 0.0
        %1671 = vmatpush1.msra.mxu0 0.0
        %1672 = vmatprep.subr.mxu0 0.0
        %1673 = vmatpush1.msra.mxu0 0.0
        %1674 = vmatprep.subr.mxu0 0.0
        %1675 = vmatpush1.msra.mxu0 0.0
        %1676 = vmatprep.subr.mxu0 0.0
        %1677 = vmatpush1.msra.mxu0 0.0
        %1678 = vmatprep.subr.mxu0 0.0
        %1679 = vmatpush1.msra.mxu0 0.0
        %1680 = vmatprep.subr.mxu0 0.0
        %1681 = vmatpush1.msra.mxu0 0.0
        %1682 = vmatprep.subr.mxu0 0.0
        %1683 = vmatpush1.msra.mxu0 0.0
        %1684 = vmatprep.subr.mxu0 0.0
        %1685 = vmatpush1.msra.mxu0 0.0
        %1686 = vmatprep.subr.mxu0 0.0
        %1687 = vmatpush1.msra.mxu0 0.0
        %1688 = vmatprep.subr.mxu0 0.0
        %1689 = vmatpush1.msra.mxu0 0.0
        %1690 = vmatprep.subr.mxu0 0.0
        %1691 = vmatpush1.msra.mxu0 0.0
        %1692 = vmatprep.subr.mxu0 0.0
        %1693 = vmatpush1.msra.mxu0 0.0
        %1694 = vmatprep.subr.mxu0 0.0
        %1695 = vmatpush1.msra.mxu0 0.0
        %1696 = vmatprep.subr.mxu0 0.0
        %1697 = vmatpush1.msra.mxu0 0.0
        %1698 = vmatprep.subr.mxu0 0.0
        %1699 = vmatpush1.msra.mxu0 0.0
        %1700 = vmatprep.subr.mxu0 0.0
        %1701 = vmatpush1.msra.mxu0 0.0
        %1702 = vmatprep.subr.mxu0 0.0
        %1703 = vmatpush1.msra.mxu0 0.0
        %1704 = vmatprep.subr.mxu0 0.0
        %1705 = vmatpush1.msra.mxu0 0.0
        %1706 = vmatprep.subr.mxu0 0.0
        %1707 = vmatpush1.msra.mxu0 0.0
        %1708 = vmatprep.subr.mxu0 0.0
        %1709 = vmatpush1.msra.mxu0 0.0
        %1710 = vmatprep.subr.mxu0 0.0
        %1711 = vmatpush1.msra.mxu0 0.0
        %1712 = vmatprep.subr.mxu0 0.0
        %1713 = vmatpush1.msra.mxu0 0.0
        %1714 = vmatprep.subr.mxu0 0.0
        %1715 = vmatpush1.msra.mxu0 0.0
        %1716 = vmatprep.subr.mxu0 0.0
        %1717 = vmatpush1.msra.mxu0 0.0
        %1718 = vmatprep.subr.mxu0 0.0
        %1719 = vmatpush1.msra.mxu0 0.0
        %1720 = vmatprep.subr.mxu0 0.0
        %1721 = vmatpush1.msra.mxu0 0.0
        %1722 = vmatprep.subr.mxu0 0.0
        %1723 = vmatpush1.msra.mxu0 0.0
        %1724 = vmatprep.subr.mxu0 0.0
        %1725 = vmatpush1.msra.mxu0 0.0
        %1726 = vmatprep.subr.mxu0 0.0
        %1727 = vmatpush1.msra.mxu0 0.0
        %1728 = vmatprep.subr.mxu0 0.0
        %1729 = vmatpush1.msra.mxu0 0.0
        %1730 = vmatprep.subr.mxu0 0.0
        %1731 = vmatpush1.msra.mxu0 0.0
        %1732 = vmatprep.mubr.f32.mxu0 0.0
        %1733 = vmatmul.mubr.f32.gmra.mrb[0].mxu0 %v1666
        %v1734 = vpop.f32.mrb[0].mxu0
        %v1735 = vadd.f32 0.0, %v1734
        %v1736 = vpop.f32.mrb[0].mxu0
        %1737 = vdwg.mxu0
        %v1738 = vrot.slane %v1378, 2
        %v1740 = vrcp.pop %v1738
        %v1741 = vmul.f32 %v1735, %v1740
        %v1742 = vrot.slane %v1492, 5
        %v1744 = vadd.f32 %v1741, %v1742
        %1745 = vst [vmem:[#allocation2 + $0x5] sm:$0x1] %v1744
        %v1746 = vrot.slane %v1492, 4
        %v1748 = vadd.f32 %v1487, %v1746
        %1749 = vst [vmem:[#allocation2 + $0x4] sm:$0x4] %v1748
        %v1750 = vrot.slane %v1373, 3
        %v1751 = vsel %vm1496, %v1750, 0
        %1753 = vmatprep.subr.mxu0 0.0
        %1754 = vmatpush1.msra.mxu0 %v1372
        %1755 = vmatprep.subr.mxu0 0.0
        %1756 = vmatpush1.msra.mxu0 0.0
        %1757 = vmatprep.subr.mxu0 0.0
        %1758 = vmatpush1.msra.mxu0 0.0
        %1759 = vmatprep.subr.mxu0 0.0
        %1760 = vmatpush1.msra.mxu0 0.0
        %1761 = vmatprep.subr.mxu0 0.0
        %1762 = vmatpush1.msra.mxu0 0.0
        %1763 = vmatprep.subr.mxu0 0.0
        %1764 = vmatpush1.msra.mxu0 0.0
        %1765 = vmatprep.subr.mxu0 0.0
        %1766 = vmatpush1.msra.mxu0 0.0
        %1767 = vmatprep.subr.mxu0 0.0
        %1768 = vmatpush1.msra.mxu0 0.0
        %1769 = vmatprep.subr.mxu0 0.0
        %1770 = vmatpush1.msra.mxu0 0.0
        %1771 = vmatprep.subr.mxu0 0.0
        %1772 = vmatpush1.msra.mxu0 0.0
        %1773 = vmatprep.subr.mxu0 0.0
        %1774 = vmatpush1.msra.mxu0 0.0
        %1775 = vmatprep.subr.mxu0 0.0
        %1776 = vmatpush1.msra.mxu0 0.0
        %1777 = vmatprep.subr.mxu0 0.0
        %1778 = vmatpush1.msra.mxu0 0.0
        %1779 = vmatprep.subr.mxu0 0.0
        %1780 = vmatpush1.msra.mxu0 0.0
        %1781 = vmatprep.subr.mxu0 0.0
        %1782 = vmatpush1.msra.mxu0 0.0
        %1783 = vmatprep.subr.mxu0 0.0
        %1784 = vmatpush1.msra.mxu0 0.0
        %1785 = vmatprep.subr.mxu0 0.0
        %1786 = vmatpush1.msra.mxu0 0.0
        %1787 = vmatprep.subr.mxu0 0.0
        %1788 = vmatpush1.msra.mxu0 0.0
        %1789 = vmatprep.subr.mxu0 0.0
        %1790 = vmatpush1.msra.mxu0 0.0
        %1791 = vmatprep.subr.mxu0 0.0
        %1792 = vmatpush1.msra.mxu0 0.0
        %1793 = vmatprep.subr.mxu0 0.0
        %1794 = vmatpush1.msra.mxu0 0.0
        %1795 = vmatprep.subr.mxu0 0.0
        %1796 = vmatpush1.msra.mxu0 0.0
        %1797 = vmatprep.subr.mxu0 0.0
        %1798 = vmatpush1.msra.mxu0 0.0
        %1799 = vmatprep.subr.mxu0 0.0
        %1800 = vmatpush1.msra.mxu0 0.0
        %1801 = vmatprep.subr.mxu0 0.0
        %1802 = vmatpush1.msra.mxu0 0.0
        %1803 = vmatprep.subr.mxu0 0.0
        %1804 = vmatpush1.msra.mxu0 0.0
        %1805 = vmatprep.subr.mxu0 0.0
        %1806 = vmatpush1.msra.mxu0 0.0
        %1807 = vmatprep.subr.mxu0 0.0
        %1808 = vmatpush1.msra.mxu0 0.0
        %1809 = vmatprep.subr.mxu0 0.0
        %1810 = vmatpush1.msra.mxu0 0.0
        %1811 = vmatprep.subr.mxu0 0.0
        %1812 = vmatpush1.msra.mxu0 0.0
        %1813 = vmatprep.subr.mxu0 0.0
        %1814 = vmatpush1.msra.mxu0 0.0
        %1815 = vmatprep.subr.mxu0 0.0
        %1816 = vmatpush1.msra.mxu0 0.0
        %1817 = vmatprep.mubr.f32.mxu0 0.0
        %1818 = vmatmul.mubr.f32.gmra.mrb[0].mxu0 %v1751
        %v1819 = vpop.f32.mrb[0].mxu0
        %v1820 = vadd.f32 0.0, %v1819
        %v1821 = vpop.f32.mrb[0].mxu0
        %1822 = vdwg.mxu0
        %v1823 = vrot.slane %v1378, 3
        %v1825 = vrcp.pop %v1823
        %v1826 = vmul.f32 %v1820, %v1825
        %v1827 = vrot.slane %v1492, 7
        %v1829 = vadd.f32 %v1826, %v1827
        %1830 = vst [vmem:[#allocation2 + $0x7] sm:$0x1] %v1829
        %v1832 = vrot.slane %v1493, 5
        %v1834 = vadd.f32 %v1487, %v1832
        %1835 = vst [vmem:[#allocation2 + $0x5] sm:$0x8] %v1834
      $region140: #{abil_dt_forward.1} parent=135 // pred_fallthru
        _
      %v1836 = vld [vmem:[#allocation2] sm:$0xff]
      %v1837 = vld [vmem:[#allocation2 + $0x8] sm:$0x1]
      %v1838 = vld [vmem:[%s1112] sm:$0x1]
      %v1839 = vld [vmem:[%s1115] sm:$0x1]
      %1840 = vadd.xlane.f32.xlu0 %v1836
      %v1841 = vpop.xlane.xlu0 %1840
      %vm1842 = vcmask 1040384
      %v1843 = vsel %vm1842, %v1837, 0.0
      %1844 = vadd.xlane.f32.xlu0 %v1843
      %v1845 = vpop.xlane.xlu0 %1844
      %v1846 = vrcp.pop 128.0
      %v1847 = vmul.f32 %v1841, %v1846
      %v1848 = vmul.f32 %v1845, %v1846
      %v1849 = vsub.f32 %v1836, %v1847
      %v1850 = vsub.f32 %v1837, %v1848
      %v1851 = vmul.f32 %v1849, %v1849
      %v1852 = vmul.f32 %v1850, %v1850
      %1853 = vadd.xlane.f32.xlu0 %v1851
      %v1854 = vpop.xlane.xlu0 %1853
      %v1855 = vsel %vm1842, %v1852, 0.0
      %1856 = vadd.xlane.f32.xlu0 %v1855
      %v1857 = vpop.xlane.xlu0 %1856
      %v1858 = vmul.f32 %v1854, %v1846
      %v1859 = vmul.f32 %v1857, %v1846
      %v1860 = vadd.f32 %v1858, 1e-05
      %v1861 = vadd.f32 %v1859, 1e-05
      %v1862 = vrsqrt.pop %v1860
      %v1863 = vrsqrt.pop %v1861
      %v1864 = vmul.f32 %v1849, %v1862
      %v1865 = vmul.f32 %v1850, %v1863
      %v1867 = vlaneseq
      %v1868 = vshrl.u32 %v1867, 7
      %v1869 = vsub.s32 0, %v1868
      %v1870 = vrot.slane %v1838, %v1869
      %v1872 = vmul.f32 %v1864, %v1870
      %v1873 = vmul.f32 %v1865, %v1870
      %v1875 = vlaneseq
      %v1876 = vshrl.u32 %v1875, 7
      %v1877 = vsub.s32 0, %v1876
      %v1878 = vrot.slane %v1839, %v1877
      %v1880 = vadd.f32 %v1872, %v1878
      %v1881 = vadd.f32 %v1873, %v1878
      %v1882 = vpack.c.bf16 %v1881, %v1880
      %v1883 = vld [vmem:[%s1120] sm:$0xff]
      %v1884 = vld [vmem:[%s1120 + $0x8] sm:$0xf]
      %v1885 = vld [vmem:[%s1120 + $0xc] sm:$0xff]
      %v1886 = vld [vmem:[%s1120 + $0x14] sm:$0xf]
      %v1887 = vld [vmem:[%s1120 + $0x18] sm:$0xff]
      %v1888 = vld [vmem:[%s1120 + $0x20] sm:$0xf]
      %v1889 = vld [vmem:[%s1120 + $0x24] sm:$0xff]
      %v1890 = vld [vmem:[%s1120 + $0x2c] sm:$0xf]
      %v1891 = vld [vmem:[%s1120 + $0x30] sm:$0xff]
      %v1892 = vld [vmem:[%s1120 + $0x38] sm:$0xf]
      %v1893 = vld [vmem:[%s1120 + $0x3c] sm:$0xff]
      %v1894 = vld [vmem:[%s1120 + $0x44] sm:$0xf]
      %v1895 = vld [vmem:[%s1120 + $0x48] sm:$0xff]
      %v1896 = vld [vmem:[%s1120 + $0x50] sm:$0xf]
      %v1897 = vld [vmem:[%s1120 + $0x54] sm:$0xff]
      %v1898 = vld [vmem:[%s1120 + $0x5c] sm:$0xf]
      %v1899 = vld [vmem:[%s1120 + $0x60] sm:$0xff]
      %v1900 = vld [vmem:[%s1120 + $0x68] sm:$0xf]
      %v1901 = vld [vmem:[%s1120 + $0x6c] sm:$0xff]
      %v1902 = vld [vmem:[%s1120 + $0x74] sm:$0xf]
      %v1903 = vld [vmem:[%s1120 + $0x78] sm:$0xff]
      %v1904 = vld [vmem:[%s1120 + $0x80] sm:$0xf]
      %v1905 = vld [vmem:[%s1120 + $0x84] sm:$0xff]
      %v1906 = vld [vmem:[%s1120 + $0x8c] sm:$0xf]
      %v1907 = vld [vmem:[%s1120 + $0x90] sm:$0xff]
      %v1908 = vld [vmem:[%s1120 + $0x98] sm:$0xf]
      %v1909 = vld [vmem:[%s1120 + $0x9c] sm:$0xff]
      %v1910 = vld [vmem:[%s1120 + $0xa4] sm:$0xf]
      %v1911 = vld [vmem:[%s1120 + $0xa8] sm:$0xff]
      %v1912 = vld [vmem:[%s1120 + $0xb0] sm:$0xf]
      %v1913 = vld [vmem:[%s1120 + $0xb4] sm:$0xff]
      %v1914 = vld [vmem:[%s1120 + $0xbc] sm:$0xf]
      %v1915 = vld [vmem:[%s1124] sm:$0x7]
      %v1917 = vlaneseq
      %v1918 = vshrl.u32 %v1917, 7
      %v1919 = vsub.s32 0, %v1918
      %v1920 = vrot.slane %v1915, %v1919
      %v1921 = vlaneseq
      %v1922 = vshrl.u32 %v1921, 7
      %v1923 = vsub.s32 1, %v1922
      %v1924 = vrot.slane %v1915, %v1923
      %v1925 = vlaneseq
      %v1926 = vshrl.u32 %v1925, 7
      %v1927 = vsub.s32 2, %v1926
      %v1928 = vrot.slane %v1915, %v1927
      %v1964 = vunpack.c.l.b16 %v1883
      %v1965 = vunpack.c.h.b16 %v1883
      %v1966 = vunpack.c.l.b16 %v1884
      %v1967 = vunpack.c.l.b16 %v1885
      %v1968 = vunpack.c.h.b16 %v1885
      %v1969 = vunpack.c.l.b16 %v1886
      %v1970 = vunpack.c.l.b16 %v1887
      %v1971 = vunpack.c.h.b16 %v1887
      %v1972 = vunpack.c.l.b16 %v1888
      %v1973 = vunpack.c.l.b16 %v1889
      %v1974 = vunpack.c.h.b16 %v1889
      %v1975 = vunpack.c.l.b16 %v1890
      %v1976 = vunpack.c.l.b16 %v1891
      %v1977 = vunpack.c.h.b16 %v1891
      %v1978 = vunpack.c.l.b16 %v1892
      %v1979 = vunpack.c.l.b16 %v1893
      %v1980 = vunpack.c.h.b16 %v1893
      %v1981 = vunpack.c.l.b16 %v1894
      %v1982 = vunpack.c.l.b16 %v1895
      %v1983 = vunpack.c.h.b16 %v1895
      %v1984 = vunpack.c.l.b16 %v1896
      %v1985 = vunpack.c.l.b16 %v1897
      %v1986 = vunpack.c.h.b16 %v1897
      %v1987 = vunpack.c.l.b16 %v1898
      %v1988 = vunpack.c.l.b16 %v1899
      %v1989 = vunpack.c.h.b16 %v1899
      %v1990 = vunpack.c.l.b16 %v1900
      %v1991 = vunpack.c.l.b16 %v1901
      %v1992 = vunpack.c.h.b16 %v1901
      %v1993 = vunpack.c.l.b16 %v1902
      %v1994 = vunpack.c.l.b16 %v1903
      %v1995 = vunpack.c.h.b16 %v1903
      %v1996 = vunpack.c.l.b16 %v1904
      %v1997 = vunpack.c.l.b16 %v1905
      %v1998 = vunpack.c.h.b16 %v1905
      %v1999 = vunpack.c.l.b16 %v1906
      %v2000 = vunpack.c.l.b16 %v1907
      %v2001 = vunpack.c.h.b16 %v1907
      %v2002 = vunpack.c.l.b16 %v1908
      %v2003 = vunpack.c.l.b16 %v1909
      %v2004 = vunpack.c.h.b16 %v1909
      %v2005 = vunpack.c.l.b16 %v1910
      %v2006 = vunpack.c.l.b16 %v1911
      %v2007 = vunpack.c.h.b16 %v1911
      %v2008 = vunpack.c.l.b16 %v1912
      %v2009 = vunpack.c.l.b16 %v1913
      %v2010 = vunpack.c.h.b16 %v1913
      %v2011 = vunpack.c.l.b16 %v1914
      %v2012 = vpack.c.b16 %v1967, %v1964
      %v2013 = vpack.c.b16 %v1968, %v1965
      %v2014 = vpack.c.b16 %v1969, %v1966
      %v2015 = vpack.c.b16 %v1973, %v1970
      %v2016 = vpack.c.b16 %v1974, %v1971
      %v2017 = vpack.c.b16 %v1975, %v1972
      %v2018 = vpack.c.b16 %v1979, %v1976
      %v2019 = vpack.c.b16 %v1980, %v1977
      %v2020 = vpack.c.b16 %v1981, %v1978
      %v2021 = vpack.c.b16 %v1985, %v1982
      %v2022 = vpack.c.b16 %v1986, %v1983
      %v2023 = vpack.c.b16 %v1987, %v1984
      %v2024 = vpack.c.b16 %v1991, %v1988
      %v2025 = vpack.c.b16 %v1992, %v1989
      %v2026 = vpack.c.b16 %v1993, %v1990
      %v2027 = vpack.c.b16 %v1997, %v1994
      %v2028 = vpack.c.b16 %v1998, %v1995
      %v2029 = vpack.c.b16 %v1999, %v1996
      %v2030 = vpack.c.b16 %v2003, %v2000
      %v2031 = vpack.c.b16 %v2004, %v2001
      %v2032 = vpack.c.b16 %v2005, %v2002
      %v2033 = vpack.c.b16 %v2009, %v2006
      %v2034 = vpack.c.b16 %v2010, %v2007
      %v2035 = vpack.c.b16 %v2011, %v2008
      %2060 = vmatprep.subr.bf16.mxu0 %v2013
      %2061 = vmatpush1.bf16.msra.mxu0 %v2012
      %2062 = vmatprep.subr.bf16.mxu0 %v2016
      %2063 = vmatpush1.bf16.msra.mxu0 %v2015
      %2064 = vmatprep.subr.bf16.mxu0 %v2019
      %2065 = vmatpush1.bf16.msra.mxu0 %v2018
      %2066 = vmatprep.subr.bf16.mxu0 %v2022
      %2067 = vmatpush1.bf16.msra.mxu0 %v2021
      %2068 = vmatprep.subr.bf16.mxu0 %v2025
      %2069 = vmatpush1.bf16.msra.mxu0 %v2024
      %2070 = vmatprep.subr.bf16.mxu0 %v2028
      %2071 = vmatpush1.bf16.msra.mxu0 %v2027
      %2072 = vmatprep.subr.bf16.mxu0 %v2031
      %2073 = vmatpush1.bf16.msra.mxu0 %v2030
      %2074 = vmatprep.subr.bf16.mxu0 %v2034
      %2075 = vmatpush1.bf16.msra.mxu0 %v2033
      %2076 = vmatprep.subr.bf16.mxu0 0
      %2077 = vmatpush1.bf16.msra.mxu0 0
      %2078 = vmatprep.subr.bf16.mxu0 0
      %2079 = vmatpush1.bf16.msra.mxu0 0
      %2080 = vmatprep.subr.bf16.mxu0 0
      %2081 = vmatpush1.bf16.msra.mxu0 0
      %2082 = vmatprep.subr.bf16.mxu0 0
      %2083 = vmatpush1.bf16.msra.mxu0 0
      %2084 = vmatprep.subr.bf16.mxu0 0
      %2085 = vmatpush1.bf16.msra.mxu0 0
      %2086 = vmatprep.subr.bf16.mxu0 0
      %2087 = vmatpush1.bf16.msra.mxu0 0
      %2088 = vmatprep.subr.bf16.mxu0 0
      %2089 = vmatpush1.bf16.msra.mxu0 0
      %2090 = vmatprep.subr.bf16.mxu0 0
      %2091 = vmatpush1.bf16.msra.mxu0 0
      %2092 = vmatprep.mubr.bf16.mxu0 0
      %2093 = vmatmul.mubr.bf16.gmra.mrb[0].mxu0 %v1882
      %v2094 = vpop.f32.mrb[0].mxu0
      %v2095 = vadd.f32 %v1920, %v2094
      %v2096 = vpop.f32.mrb[0].mxu0
      %v2097 = vadd.f32 %v1924, %v2096
      %v2098 = vpop.f32.mrb[0].mxu0
      %v2099 = vadd.f32 %v1920, %v2098
      %v2100 = vpop.f32.mrb[0].mxu0
      %v2101 = vadd.f32 %v1924, %v2100
      %2102 = vdwg.mxu0
      %2103 = vmatprep.subr.bf16.mxu0 0
      %2104 = vmatpush1.bf16.msra.mxu0 %v2014
      %2105 = vmatprep.subr.bf16.mxu0 0
      %2106 = vmatpush1.bf16.msra.mxu0 %v2017
      %2107 = vmatprep.subr.bf16.mxu0 0
      %2108 = vmatpush1.bf16.msra.mxu0 %v2020
      %2109 = vmatprep.subr.bf16.mxu0 0
      %2110 = vmatpush1.bf16.msra.mxu0 %v2023
      %2111 = vmatprep.subr.bf16.mxu0 0
      %2112 = vmatpush1.bf16.msra.mxu0 %v2026
      %2113 = vmatprep.subr.bf16.mxu0 0
      %2114 = vmatpush1.bf16.msra.mxu0 %v2029
      %2115 = vmatprep.subr.bf16.mxu0 0
      %2116 = vmatpush1.bf16.msra.mxu0 %v2032
      %2117 = vmatprep.subr.bf16.mxu0 0
      %2118 = vmatpush1.bf16.msra.mxu0 %v2035
      %2119 = vmatprep.subr.bf16.mxu0 0
      %2120 = vmatpush1.bf16.msra.mxu0 0
      %2121 = vmatprep.subr.bf16.mxu0 0
      %2122 = vmatpush1.bf16.msra.mxu0 0
      %2123 = vmatprep.subr.bf16.mxu0 0
      %2124 = vmatpush1.bf16.msra.mxu0 0
      %2125 = vmatprep.subr.bf16.mxu0 0
      %2126 = vmatpush1.bf16.msra.mxu0 0
      %2127 = vmatprep.subr.bf16.mxu0 0
      %2128 = vmatpush1.bf16.msra.mxu0 0
      %2129 = vmatprep.subr.bf16.mxu0 0
      %2130 = vmatpush1.bf16.msra.mxu0 0
      %2131 = vmatprep.subr.bf16.mxu0 0
      %2132 = vmatpush1.bf16.msra.mxu0 0
      %2133 = vmatprep.subr.bf16.mxu0 0
      %2134 = vmatpush1.bf16.msra.mxu0 0
      %2135 = vmatprep.mubr.bf16.mxu0 0
      %2136 = vmatmul.mubr.bf16.gmra.mrb[0].mxu0 %v1882
      %v2137 = vpop.f32.mrb[0].mxu0
      %v2138 = vadd.f32 %v1928, %v2137
      %v2139 = vpop.f32.mrb[0].mxu0
      %v2140 = vpop.f32.mrb[0].mxu0
      %v2141 = vadd.f32 %v1928, %v2140
      %v2142 = vpop.f32.mrb[0].mxu0
      %2143 = vdwg.mxu0
      %v2144 = vpack.c.bf16 %v2099, %v2095
      %v2145 = vpack.c.bf16 %v2101, %v2097
      %2146 = vmatprep.subr.bf16.mxu0 0
      %2147 = vmatpush1.bf16.xpose.msra.mxu0 %v2145
      %2148 = vmatprep.subr.bf16.mxu0 0
      %2149 = vmatpush1.bf16.xpose.msra.mxu0 0
      %2150 = vmatprep.subr.bf16.mxu0 0
      %2151 = vmatpush1.bf16.xpose.msra.mxu0 0
      %2152 = vmatprep.subr.bf16.mxu0 0
      %2153 = vmatpush1.bf16.xpose.msra.mxu0 0
      %2154 = vmatprep.subr.bf16.mxu0 0
      %2155 = vmatpush1.bf16.xpose.msra.mxu0 0
      %2156 = vmatprep.subr.bf16.mxu0 0
      %2157 = vmatpush1.bf16.xpose.msra.mxu0 0
      %2158 = vmatprep.subr.bf16.mxu0 0
      %2159 = vmatpush1.bf16.xpose.msra.mxu0 0
      %2160 = vmatprep.subr.bf16.mxu0 0
      %2161 = vmatpush1.bf16.xpose.msra.mxu0 0
      %2162 = vmatprep.subr.bf16.mxu0 0
      %2163 = vmatpush1.bf16.xpose.msra.mxu0 0
      %2164 = vmatprep.subr.bf16.mxu0 0
      %2165 = vmatpush1.bf16.xpose.msra.mxu0 0
      %2166 = vmatprep.subr.bf16.mxu0 0
      %2167 = vmatpush1.bf16.xpose.msra.mxu0 0
      %2168 = vmatprep.subr.bf16.mxu0 0
      %2169 = vmatpush1.bf16.xpose.msra.mxu0 0
      %2170 = vmatprep.subr.bf16.mxu0 0
      %2171 = vmatpush1.bf16.xpose.msra.mxu0 0
      %2172 = vmatprep.subr.bf16.mxu0 0
      %2173 = vmatpush1.bf16.xpose.msra.mxu0 0
      %2174 = vmatprep.subr.bf16.mxu0 0
      %2175 = vmatpush1.bf16.xpose.msra.mxu0 0
      %2176 = vmatprep.subr.bf16.mxu0 0
      %2177 = vmatpush1.bf16.xpose.msra.mxu0 0
      %2178 = vmatprep.mubr.bf16.mxu0 0
      %2179 = vmatmul.mubr.bf16.gmra.mrb[0].mxu0 %v2144
      %v2180 = vpop.f32.mrb[0].mxu0
      %v2181 = vadd.f32 0.0, %v2180
      %v2182 = vpop.f32.mrb[0].mxu0
      %v2183 = vpop.f32.mrb[0].mxu0
      %v2184 = vadd.f32 0.0, %v2183
      %v2185 = vpop.f32.mrb[0].mxu0
      %2186 = vdwg.mxu0
      %v2187 = vmul.f32 %v2181, 0.088388346
      %v2188 = vmul.f32 %v2184, 0.088388346
      %v2189 = vld [vmem:[%s25] sm:$0xff]
      %v2190 = vld [vmem:[%s25 + $0x8] sm:$0x1]
      %v2191 = vadd.f32 %v2187, %v2189
      %v2192 = vadd.f32 %v2188, %v2190
      %vm2193 = vcmask 72704
      %v2194 = vsel %vm2193, %v2191, -inf
      %2195 = vmax.xlane.f32.xlu0 %v2194
      %v2196 = vpop.xlane.xlu0 %2195
      %vm2197 = vcmask 65536
      %v2198 = vsel %vm2197, %v2192, -inf
      %2199 = vmax.xlane.f32.xlu0 %v2198
      %v2200 = vpop.xlane.xlu0 %2199
      %v2201 = vsub.f32 %v2191, %v2196
      %v2202 = vsub.f32 %v2192, %v2200
      %v2203 = vmul.f32 %v2201, 1.442695
      %v2204 = vpow.pop %v2203
      %v2205 = vmul.f32 %v2202, 1.442695
      %v2206 = vpow.pop %v2205
      %v2207 = vsel %vm2193, %v2204, 0.0
      %2208 = vadd.xlane.f32.xlu0 %v2207
      %v2209 = vpop.xlane.xlu0 %2208
      %v2210 = vsel %vm2197, %v2206, 0.0
      %2211 = vadd.xlane.f32.xlu0 %v2210
      %v2212 = vpop.xlane.xlu0 %2211
      %v2213 = vrcp.pop %v2209
      %v2214 = vrcp.pop %v2212
      %v2215 = vmul.f32 %v2204, %v2213
      %v2216 = vmul.f32 %v2206, %v2214
      %v2217 = vpack.c.bf16 %v2216, %v2215
      %v2218 = vpack.c.bf16 %v2141, %v2138
      %v2220 = vsel %vm2193, %v2217, 0
      %vm2222 = vcmask 1043456
      %vm2223 = vcmask 1044480
      %v2224 = vsel %vm2222, 4294967295, 65535
      %v2225 = vsel %vm2223, %v2224, 0
      %v2227 = vand.u32 %v2218, %v2225
      %2229 = vmatprep.subr.bf16.mxu0 0
      %2230 = vmatpush1.bf16.msra.mxu0 %v2227
      %2231 = vmatprep.subr.bf16.mxu0 0
      %2232 = vmatpush1.bf16.msra.mxu0 0
      %2233 = vmatprep.subr.bf16.mxu0 0
      %2234 = vmatpush1.bf16.msra.mxu0 0
      %2235 = vmatprep.subr.bf16.mxu0 0
      %2236 = vmatpush1.bf16.msra.mxu0 0
      %2237 = vmatprep.subr.bf16.mxu0 0
      %2238 = vmatpush1.bf16.msra.mxu0 0
      %2239 = vmatprep.subr.bf16.mxu0 0
      %2240 = vmatpush1.bf16.msra.mxu0 0
      %2241 = vmatprep.subr.bf16.mxu0 0
      %2242 = vmatpush1.bf16.msra.mxu0 0
      %2243 = vmatprep.subr.bf16.mxu0 0
      %2244 = vmatpush1.bf16.msra.mxu0 0
      %2245 = vmatprep.subr.bf16.mxu0 0
      %2246 = vmatpush1.bf16.msra.mxu0 0
      %2247 = vmatprep.subr.bf16.mxu0 0
      %2248 = vmatpush1.bf16.msra.mxu0 0
      %2249 = vmatprep.subr.bf16.mxu0 0
      %2250 = vmatpush1.bf16.msra.mxu0 0
      %2251 = vmatprep.subr.bf16.mxu0 0
      %2252 = vmatpush1.bf16.msra.mxu0 0
      %2253 = vmatprep.subr.bf16.mxu0 0
      %2254 = vmatpush1.bf16.msra.mxu0 0
      %2255 = vmatprep.subr.bf16.mxu0 0
      %2256 = vmatpush1.bf16.msra.mxu0 0
      %2257 = vmatprep.subr.bf16.mxu0 0
      %2258 = vmatpush1.bf16.msra.mxu0 0
      %2259 = vmatprep.subr.bf16.mxu0 0
      %2260 = vmatpush1.bf16.msra.mxu0 0
      %2261 = vmatprep.mubr.bf16.mxu0 0
      %2262 = vmatmul.mubr.bf16.gmra.mrb[0].mxu0 %v2220
      %v2263 = vpop.f32.mrb[0].mxu0
      %v2264 = vadd.f32 0.0, %v2263
      %v2265 = vpop.f32.mrb[0].mxu0
      %v2266 = vpop.f32.mrb[0].mxu0
      %v2267 = vadd.f32 0.0, %v2266
      %v2268 = vpop.f32.mrb[0].mxu0
      %2269 = vdwg.mxu0
      %v2270 = vpack.c.bf16 %v2267, %v2264
      %v2271 = vld [vmem:[%s1129] sm:$0xf]
      %v2272 = vld [vmem:[%s1129 + $0x4] sm:$0xf]
      %v2273 = vld [vmem:[%s1129 + $0x8] sm:$0xf]
      %v2274 = vld [vmem:[%s1129 + $0xc] sm:$0xf]
      %v2275 = vld [vmem:[%s1129 + $0x10] sm:$0xf]
      %v2276 = vld [vmem:[%s1129 + $0x14] sm:$0xf]
      %v2277 = vld [vmem:[%s1129 + $0x18] sm:$0xf]
      %v2278 = vld [vmem:[%s1129 + $0x1c] sm:$0xf]
      %v2279 = vld [vmem:[%s1129 + $0x20] sm:$0xf]
      %v2280 = vld [vmem:[%s1129 + $0x24] sm:$0xf]
      %v2281 = vld [vmem:[%s1129 + $0x28] sm:$0xf]
      %v2282 = vld [vmem:[%s1129 + $0x2c] sm:$0xf]
      %v2283 = vld [vmem:[%s1129 + $0x30] sm:$0xf]
      %v2284 = vld [vmem:[%s1129 + $0x34] sm:$0xf]
      %v2285 = vld [vmem:[%s1129 + $0x38] sm:$0xf]
      %v2286 = vld [vmem:[%s1129 + $0x3c] sm:$0xf]
      %v2287 = vld [vmem:[%s1132] sm:$0x1]
      %v2289 = vlaneseq
      %v2290 = vshrl.u32 %v2289, 7
      %v2291 = vsub.s32 0, %v2290
      %v2292 = vrot.slane %v2287, %v2291
      %v2310 = vunpack.c.l.b16 %v2271
      %v2311 = vunpack.c.l.b16 %v2272
      %v2312 = vunpack.c.l.b16 %v2273
      %v2313 = vunpack.c.l.b16 %v2274
      %v2314 = vunpack.c.l.b16 %v2275
      %v2315 = vunpack.c.l.b16 %v2276
      %v2316 = vunpack.c.l.b16 %v2277
      %v2317 = vunpack.c.l.b16 %v2278
      %v2318 = vunpack.c.l.b16 %v2279
      %v2319 = vunpack.c.l.b16 %v2280
      %v2320 = vunpack.c.l.b16 %v2281
      %v2321 = vunpack.c.l.b16 %v2282
      %v2322 = vunpack.c.l.b16 %v2283
      %v2323 = vunpack.c.l.b16 %v2284
      %v2324 = vunpack.c.l.b16 %v2285
      %v2325 = vunpack.c.l.b16 %v2286
      %v2326 = vpack.c.b16 %v2311, %v2310
      %v2327 = vpack.c.b16 %v2313, %v2312
      %v2328 = vpack.c.b16 %v2315, %v2314
      %v2329 = vpack.c.b16 %v2317, %v2316
      %v2330 = vpack.c.b16 %v2319, %v2318
      %v2331 = vpack.c.b16 %v2321, %v2320
      %v2332 = vpack.c.b16 %v2323, %v2322
      %v2333 = vpack.c.b16 %v2325, %v2324
      %2342 = vmatprep.subr.bf16.mxu0 0
      %2343 = vmatpush1.bf16.msra.mxu0 %v2326
      %2344 = vmatprep.subr.bf16.mxu0 0
      %2345 = vmatpush1.bf16.msra.mxu0 %v2327
      %2346 = vmatprep.subr.bf16.mxu0 0
      %2347 = vmatpush1.bf16.msra.mxu0 %v2328
      %2348 = vmatprep.subr.bf16.mxu0 0
      %2349 = vmatpush1.bf16.msra.mxu0 %v2329
      %2350 = vmatprep.subr.bf16.mxu0 0
      %2351 = vmatpush1.bf16.msra.mxu0 %v2330
      %2352 = vmatprep.subr.bf16.mxu0 0
      %2353 = vmatpush1.bf16.msra.mxu0 %v2331
      %2354 = vmatprep.subr.bf16.mxu0 0
      %2355 = vmatpush1.bf16.msra.mxu0 %v2332
      %2356 = vmatprep.subr.bf16.mxu0 0
      %2357 = vmatpush1.bf16.msra.mxu0 %v2333
      %2358 = vmatprep.subr.bf16.mxu0 0
      %2359 = vmatpush1.bf16.msra.mxu0 0
      %2360 = vmatprep.subr.bf16.mxu0 0
      %2361 = vmatpush1.bf16.msra.mxu0 0
      %2362 = vmatprep.subr.bf16.mxu0 0
      %2363 = vmatpush1.bf16.msra.mxu0 0
      %2364 = vmatprep.subr.bf16.mxu0 0
      %2365 = vmatpush1.bf16.msra.mxu0 0
      %2366 = vmatprep.subr.bf16.mxu0 0
      %2367 = vmatpush1.bf16.msra.mxu0 0
      %2368 = vmatprep.subr.bf16.mxu0 0
      %2369 = vmatpush1.bf16.msra.mxu0 0
      %2370 = vmatprep.subr.bf16.mxu0 0
      %2371 = vmatpush1.bf16.msra.mxu0 0
      %2372 = vmatprep.subr.bf16.mxu0 0
      %2373 = vmatpush1.bf16.msra.mxu0 0
      %2374 = vmatprep.mubr.bf16.mxu0 0
      %2375 = vmatmul.mubr.bf16.gmra.mrb[0].mxu0 %v2270
      %v2376 = vpop.f32.mrb[0].mxu0
      %v2377 = vadd.f32 %v2292, %v2376
      %v2378 = vpop.f32.mrb[0].mxu0
      %v2379 = vpop.f32.mrb[0].mxu0
      %v2380 = vadd.f32 %v2292, %v2379
      %v2381 = vpop.f32.mrb[0].mxu0
      %2382 = vdwg.mxu0
      %v2383 = vadd.f32 %v1836, %v2377
      %v2384 = vadd.f32 %v1837, %v2380
      %v2385 = vld [vmem:[%s1135] sm:$0x1]
      %v2386 = vld [vmem:[%s1138] sm:$0x1]
      %2387 = vadd.xlane.f32.xlu0 %v2383
      %v2388 = vpop.xlane.xlu0 %2387
      %v2389 = vsel %vm1842, %v2384, 0.0
      %2390 = vadd.xlane.f32.xlu0 %v2389
      %v2391 = vpop.xlane.xlu0 %2390
      %v2392 = vmul.f32 %v2388, %v1846
      %v2393 = vmul.f32 %v2391, %v1846
      %v2394 = vsub.f32 %v2383, %v2392
      %v2395 = vsub.f32 %v2384, %v2393
      %v2396 = vmul.f32 %v2394, %v2394
      %v2397 = vmul.f32 %v2395, %v2395
      %2398 = vadd.xlane.f32.xlu0 %v2396
      %v2399 = vpop.xlane.xlu0 %2398
      %v2400 = vsel %vm1842, %v2397, 0.0
      %2401 = vadd.xlane.f32.xlu0 %v2400
      %v2402 = vpop.xlane.xlu0 %2401
      %v2403 = vmul.f32 %v2399, %v1846
      %v2404 = vmul.f32 %v2402, %v1846
      %v2405 = vadd.f32 %v2403, 1e-05
      %v2406 = vadd.f32 %v2404, 1e-05
      %v2407 = vrsqrt.pop %v2405
      %v2408 = vrsqrt.pop %v2406
      %v2409 = vmul.f32 %v2394, %v2407
      %v2410 = vmul.f32 %v2395, %v2408
      %v2412 = vlaneseq
      %v2413 = vshrl.u32 %v2412, 7
      %v2414 = vsub.s32 0, %v2413
      %v2415 = vrot.slane %v2385, %v2414
      %v2417 = vmul.f32 %v2409, %v2415
      %v2418 = vmul.f32 %v2410, %v2415
      %v2420 = vlaneseq
      %v2421 = vshrl.u32 %v2420, 7
      %v2422 = vsub.s32 0, %v2421
      %v2423 = vrot.slane %v2386, %v2422
      %v2425 = vadd.f32 %v2417, %v2423
      %v2426 = vadd.f32 %v2418, %v2423
      %v2427 = vpack.c.bf16 %v2426, %v2425
      %v2428 = vld [vmem:[%s1143] sm:$0xff]
      %v2429 = vld [vmem:[%s1143 + $0x8] sm:$0xff]
      %v2430 = vld [vmem:[%s1143 + $0x10] sm:$0xff]
      %v2431 = vld [vmem:[%s1143 + $0x18] sm:$0xff]
      %v2432 = vld [vmem:[%s1143 + $0x20] sm:$0xff]
      %v2433 = vld [vmem:[%s1143 + $0x28] sm:$0xff]
      %v2434 = vld [vmem:[%s1143 + $0x30] sm:$0xff]
      %v2435 = vld [vmem:[%s1143 + $0x38] sm:$0xff]
      %v2436 = vld [vmem:[%s1143 + $0x40] sm:$0xff]
      %v2437 = vld [vmem:[%s1143 + $0x48] sm:$0xff]
      %v2438 = vld [vmem:[%s1143 + $0x50] sm:$0xff]
      %v2439 = vld [vmem:[%s1143 + $0x58] sm:$0xff]
      %v2440 = vld [vmem:[%s1143 + $0x60] sm:$0xff]
      %v2441 = vld [vmem:[%s1143 + $0x68] sm:$0xff]
      %v2442 = vld [vmem:[%s1143 + $0x70] sm:$0xff]
      %v2443 = vld [vmem:[%s1143 + $0x78] sm:$0xff]
      %v2444 = vld [vmem:[%s1143 + $0x80] sm:$0xff]
      %v2445 = vld [vmem:[%s1143 + $0x88] sm:$0xff]
      %v2446 = vld [vmem:[%s1143 + $0x90] sm:$0xff]
      %v2447 = vld [vmem:[%s1143 + $0x98] sm:$0xff]
      %v2448 = vld [vmem:[%s1143 + $0xa0] sm:$0xff]
      %v2449 = vld [vmem:[%s1143 + $0xa8] sm:$0xff]
      %v2450 = vld [vmem:[%s1143 + $0xb0] sm:$0xff]
      %v2451 = vld [vmem:[%s1143 + $0xb8] sm:$0xff]
      %v2452 = vld [vmem:[%s1143 + $0xc0] sm:$0xff]
      %v2453 = vld [vmem:[%s1143 + $0xc8] sm:$0xff]
      %v2454 = vld [vmem:[%s1143 + $0xd0] sm:$0xff]
      %v2455 = vld [vmem:[%s1143 + $0xd8] sm:$0xff]
      %v2456 = vld [vmem:[%s1143 + $0xe0] sm:$0xff]
      %v2457 = vld [vmem:[%s1143 + $0xe8] sm:$0xff]
      %v2458 = vld [vmem:[%s1143 + $0xf0] sm:$0xff]
      %v2459 = vld [vmem:[%s1143 + $0xf8] sm:$0xff]
      %v2460 = vld [vmem:[%s1147] sm:$0xf]
      %v2462 = vlaneseq
      %v2463 = vshrl.u32 %v2462, 7
      %v2464 = vsub.s32 0, %v2463
      %v2465 = vrot.slane %v2460, %v2464
      %v2466 = vlaneseq
      %v2467 = vshrl.u32 %v2466, 7
      %v2468 = vsub.s32 1, %v2467
      %v2469 = vrot.slane %v2460, %v2468
      %v2470 = vlaneseq
      %v2471 = vshrl.u32 %v2470, 7
      %v2472 = vsub.s32 2, %v2471
      %v2473 = vrot.slane %v2460, %v2472
      %v2474 = vlaneseq
      %v2475 = vshrl.u32 %v2474, 7
      %v2476 = vsub.s32 3, %v2475
      %v2477 = vrot.slane %v2460, %v2476
      %v2514 = vunpack.c.l.b16 %v2428
      %v2515 = vunpack.c.h.b16 %v2428
      %v2516 = vunpack.c.l.b16 %v2429
      %v2517 = vunpack.c.h.b16 %v2429
      %v2518 = vunpack.c.l.b16 %v2430
      %v2519 = vunpack.c.h.b16 %v2430
      %v2520 = vunpack.c.l.b16 %v2431
      %v2521 = vunpack.c.h.b16 %v2431
      %v2522 = vunpack.c.l.b16 %v2432
      %v2523 = vunpack.c.h.b16 %v2432
      %v2524 = vunpack.c.l.b16 %v2433
      %v2525 = vunpack.c.h.b16 %v2433
      %v2526 = vunpack.c.l.b16 %v2434
      %v2527 = vunpack.c.h.b16 %v2434
      %v2528 = vunpack.c.l.b16 %v2435
      %v2529 = vunpack.c.h.b16 %v2435
      %v2530 = vunpack.c.l.b16 %v2436
      %v2531 = vunpack.c.h.b16 %v2436
      %v2532 = vunpack.c.l.b16 %v2437
      %v2533 = vunpack.c.h.b16 %v2437
      %v2534 = vunpack.c.l.b16 %v2438
      %v2535 = vunpack.c.h.b16 %v2438
      %v2536 = vunpack.c.l.b16 %v2439
      %v2537 = vunpack.c.h.b16 %v2439
      %v2538 = vunpack.c.l.b16 %v2440
      %v2539 = vunpack.c.h.b16 %v2440
      %v2540 = vunpack.c.l.b16 %v2441
      %v2541 = vunpack.c.h.b16 %v2441
      %v2542 = vunpack.c.l.b16 %v2442
      %v2543 = vunpack.c.h.b16 %v2442
      %v2544 = vunpack.c.l.b16 %v2443
      %v2545 = vunpack.c.h.b16 %v2443
      %v2546 = vunpack.c.l.b16 %v2444
      %v2547 = vunpack.c.h.b16 %v2444
      %v2548 = vunpack.c.l.b16 %v2445
      %v2549 = vunpack.c.h.b16 %v2445
      %v2550 = vunpack.c.l.b16 %v2446
      %v2551 = vunpack.c.h.b16 %v2446
      %v2552 = vunpack.c.l.b16 %v2447
      %v2553 = vunpack.c.h.b16 %v2447
      %v2554 = vunpack.c.l.b16 %v2448
      %v2555 = vunpack.c.h.b16 %v2448
      %v2556 = vunpack.c.l.b16 %v2449
      %v2557 = vunpack.c.h.b16 %v2449
      %v2558 = vunpack.c.l.b16 %v2450
      %v2559 = vunpack.c.h.b16 %v2450
      %v2560 = vunpack.c.l.b16 %v2451
      %v2561 = vunpack.c.h.b16 %v2451
      %v2562 = vunpack.c.l.b16 %v2452
      %v2563 = vunpack.c.h.b16 %v2452
      %v2564 = vunpack.c.l.b16 %v2453
      %v2565 = vunpack.c.h.b16 %v2453
      %v2566 = vunpack.c.l.b16 %v2454
      %v2567 = vunpack.c.h.b16 %v2454
      %v2568 = vunpack.c.l.b16 %v2455
      %v2569 = vunpack.c.h.b16 %v2455
      %v2570 = vunpack.c.l.b16 %v2456
      %v2571 = vunpack.c.h.b16 %v2456
      %v2572 = vunpack.c.l.b16 %v2457
      %v2573 = vunpack.c.h.b16 %v2457
      %v2574 = vunpack.c.l.b16 %v2458
      %v2575 = vunpack.c.h.b16 %v2458
      %v2576 = vunpack.c.l.b16 %v2459
      %v2577 = vunpack.c.h.b16 %v2459
      %v2578 = vpack.c.b16 %v2518, %v2514
      %v2579 = vpack.c.b16 %v2519, %v2515
      %v2580 = vpack.c.b16 %v2520, %v2516
      %v2581 = vpack.c.b16 %v2521, %v2517
      %v2582 = vpack.c.b16 %v2526, %v2522
      %v2583 = vpack.c.b16 %v2527, %v2523
      %v2584 = vpack.c.b16 %v2528, %v2524
      %v2585 = vpack.c.b16 %v2529, %v2525
      %v2586 = vpack.c.b16 %v2534, %v2530
      %v2587 = vpack.c.b16 %v2535, %v2531
      %v2588 = vpack.c.b16 %v2536, %v2532
      %v2589 = vpack.c.b16 %v2537, %v2533
      %v2590 = vpack.c.b16 %v2542, %v2538
      %v2591 = vpack.c.b16 %v2543, %v2539
      %v2592 = vpack.c.b16 %v2544, %v2540
      %v2593 = vpack.c.b16 %v2545, %v2541
      %v2594 = vpack.c.b16 %v2550, %v2546
      %v2595 = vpack.c.b16 %v2551, %v2547
      %v2596 = vpack.c.b16 %v2552, %v2548
      %v2597 = vpack.c.b16 %v2553, %v2549
      %v2598 = vpack.c.b16 %v2558, %v2554
      %v2599 = vpack.c.b16 %v2559, %v2555
      %v2600 = vpack.c.b16 %v2560, %v2556
      %v2601 = vpack.c.b16 %v2561, %v2557
      %v2602 = vpack.c.b16 %v2566, %v2562
      %v2603 = vpack.c.b16 %v2567, %v2563
      %v2604 = vpack.c.b16 %v2568, %v2564
      %v2605 = vpack.c.b16 %v2569, %v2565
      %v2606 = vpack.c.b16 %v2574, %v2570
      %v2607 = vpack.c.b16 %v2575, %v2571
      %v2608 = vpack.c.b16 %v2576, %v2572
      %v2609 = vpack.c.b16 %v2577, %v2573
      %2642 = vmatprep.subr.bf16.mxu0 %v2579
      %2643 = vmatpush1.bf16.msra.mxu0 %v2578
      %2644 = vmatprep.subr.bf16.mxu0 %v2583
      %2645 = vmatpush1.bf16.msra.mxu0 %v2582
      %2646 = vmatprep.subr.bf16.mxu0 %v2587
      %2647 = vmatpush1.bf16.msra.mxu0 %v2586
      %2648 = vmatprep.subr.bf16.mxu0 %v2591
      %2649 = vmatpush1.bf16.msra.mxu0 %v2590
      %2650 = vmatprep.subr.bf16.mxu0 %v2595
      %2651 = vmatpush1.bf16.msra.mxu0 %v2594
      %2652 = vmatprep.subr.bf16.mxu0 %v2599
      %2653 = vmatpush1.bf16.msra.mxu0 %v2598
      %2654 = vmatprep.subr.bf16.mxu0 %v2603
      %2655 = vmatpush1.bf16.msra.mxu0 %v2602
      %2656 = vmatprep.subr.bf16.mxu0 %v2607
      %2657 = vmatpush1.bf16.msra.mxu0 %v2606
      %2658 = vmatprep.subr.bf16.mxu0 0
      %2659 = vmatpush1.bf16.msra.mxu0 0
      %2660 = vmatprep.subr.bf16.mxu0 0
      %2661 = vmatpush1.bf16.msra.mxu0 0
      %2662 = vmatprep.subr.bf16.mxu0 0
      %2663 = vmatpush1.bf16.msra.mxu0 0
      %2664 = vmatprep.subr.bf16.mxu0 0
      %2665 = vmatpush1.bf16.msra.mxu0 0
      %2666 = vmatprep.subr.bf16.mxu0 0
      %2667 = vmatpush1.bf16.msra.mxu0 0
      %2668 = vmatprep.subr.bf16.mxu0 0
      %2669 = vmatpush1.bf16.msra.mxu0 0
      %2670 = vmatprep.subr.bf16.mxu0 0
      %2671 = vmatpush1.bf16.msra.mxu0 0
      %2672 = vmatprep.subr.bf16.mxu0 0
      %2673 = vmatpush1.bf16.msra.mxu0 0
      %2674 = vmatprep.mubr.bf16.mxu0 0
      %2675 = vmatmul.mubr.bf16.gmra.mrb[0].mxu0 %v2427
      %v2676 = vpop.f32.mrb[0].mxu0
      %v2677 = vadd.f32 %v2465, %v2676
      %v2678 = vpop.f32.mrb[0].mxu0
      %v2679 = vadd.f32 %v2469, %v2678
      %v2680 = vpop.f32.mrb[0].mxu0
      %v2681 = vadd.f32 %v2465, %v2680
      %v2682 = vpop.f32.mrb[0].mxu0
      %v2683 = vadd.f32 %v2469, %v2682
      %2684 = vdwg.mxu0
      %2685 = vmatprep.subr.bf16.mxu0 %v2581
      %2686 = vmatpush1.bf16.msra.mxu0 %v2580
      %2687 = vmatprep.subr.bf16.mxu0 %v2585
      %2688 = vmatpush1.bf16.msra.mxu0 %v2584
      %2689 = vmatprep.subr.bf16.mxu0 %v2589
      %2690 = vmatpush1.bf16.msra.mxu0 %v2588
      %2691 = vmatprep.subr.bf16.mxu0 %v2593
      %2692 = vmatpush1.bf16.msra.mxu0 %v2592
      %2693 = vmatprep.subr.bf16.mxu0 %v2597
      %2694 = vmatpush1.bf16.msra.mxu0 %v2596
      %2695 = vmatprep.subr.bf16.mxu0 %v2601
      %2696 = vmatpush1.bf16.msra.mxu0 %v2600
      %2697 = vmatprep.subr.bf16.mxu0 %v2605
      %2698 = vmatpush1.bf16.msra.mxu0 %v2604
      %2699 = vmatprep.subr.bf16.mxu0 %v2609
      %2700 = vmatpush1.bf16.msra.mxu0 %v2608
      %2701 = vmatprep.subr.bf16.mxu0 0
      %2702 = vmatpush1.bf16.msra.mxu0 0
      %2703 = vmatprep.subr.bf16.mxu0 0
      %2704 = vmatpush1.bf16.msra.mxu0 0
      %2705 = vmatprep.subr.bf16.mxu0 0
      %2706 = vmatpush1.bf16.msra.mxu0 0
      %2707 = vmatprep.subr.bf16.mxu0 0
      %2708 = vmatpush1.bf16.msra.mxu0 0
      %2709 = vmatprep.subr.bf16.mxu0 0
      %2710 = vmatpush1.bf16.msra.mxu0 0
      %2711 = vmatprep.subr.bf16.mxu0 0
      %2712 = vmatpush1.bf16.msra.mxu0 0
      %2713 = vmatprep.subr.bf16.mxu0 0
      %2714 = vmatpush1.bf16.msra.mxu0 0
      %2715 = vmatprep.subr.bf16.mxu0 0
      %2716 = vmatpush1.bf16.msra.mxu0 0
      %2717 = vmatprep.mubr.bf16.mxu0 0
      %2718 = vmatmul.mubr.bf16.gmra.mrb[0].mxu0 %v2427
      %v2719 = vpop.f32.mrb[0].mxu0
      %v2720 = vadd.f32 %v2473, %v2719
      %v2721 = vpop.f32.mrb[0].mxu0
      %v2722 = vadd.f32 %v2477, %v2721
      %v2723 = vpop.f32.mrb[0].mxu0
      %v2724 = vadd.f32 %v2473, %v2723
      %v2725 = vpop.f32.mrb[0].mxu0
      %v2726 = vadd.f32 %v2477, %v2725
      %2727 = vdwg.mxu0
      %v2728 = vmul.f32 %v2677, %v2677
      %v2729 = vmul.f32 %v2679, %v2679
      %v2730 = vmul.f32 %v2720, %v2720
      %v2731 = vmul.f32 %v2722, %v2722
      %v2732 = vmul.f32 %v2681, %v2681
      %v2733 = vmul.f32 %v2683, %v2683
      %v2734 = vmul.f32 %v2724, %v2724
      %v2735 = vmul.f32 %v2726, %v2726
      %v2736 = vmul.f32 %v2677, %v2728
      %v2737 = vmul.f32 %v2679, %v2729
      %v2738 = vmul.f32 %v2720, %v2730
      %v2739 = vmul.f32 %v2722, %v2731
      %v2740 = vmul.f32 %v2681, %v2732
      %v2741 = vmul.f32 %v2683, %v2733
      %v2742 = vmul.f32 %v2724, %v2734
      %v2743 = vmul.f32 %v2726, %v2735
      %v2744 = vmul.f32 %v2736, 0.044715
      %v2745 = vmul.f32 %v2737, 0.044715
      %v2746 = vmul.f32 %v2738, 0.044715
      %v2747 = vmul.f32 %v2739, 0.044715
      %v2748 = vmul.f32 %v2740, 0.044715
      %v2749 = vmul.f32 %v2741, 0.044715
      %v2750 = vmul.f32 %v2742, 0.044715
      %v2751 = vmul.f32 %v2743, 0.044715
      %v2752 = vadd.f32 %v2677, %v2744
      %v2753 = vadd.f32 %v2679, %v2745
      %v2754 = vadd.f32 %v2720, %v2746
      %v2755 = vadd.f32 %v2722, %v2747
      %v2756 = vadd.f32 %v2681, %v2748
      %v2757 = vadd.f32 %v2683, %v2749
      %v2758 = vadd.f32 %v2724, %v2750
      %v2759 = vadd.f32 %v2726, %v2751
      %v2760 = vmul.f32 %v2752, 0.7978846
      %v2761 = vmul.f32 %v2753, 0.7978846
      %v2762 = vmul.f32 %v2754, 0.7978846
      %v2763 = vmul.f32 %v2755, 0.7978846
      %v2764 = vmul.f32 %v2756, 0.7978846
      %v2765 = vmul.f32 %v2757, 0.7978846
      %v2766 = vmul.f32 %v2758, 0.7978846
      %v2767 = vmul.f32 %v2759, 0.7978846
      %v2768 = vtanh.pop %v2760
      %v2769 = vtanh.pop %v2761
      %v2770 = vtanh.pop %v2762
      %v2771 = vtanh.pop %v2763
      %v2772 = vtanh.pop %v2764
      %v2773 = vtanh.pop %v2765
      %v2774 = vtanh.pop %v2766
      %v2775 = vtanh.pop %v2767
      %v2776 = vadd.f32 %v2768, 1.0
      %v2777 = vadd.f32 %v2769, 1.0
      %v2778 = vadd.f32 %v2770, 1.0
      %v2779 = vadd.f32 %v2771, 1.0
      %v2780 = vadd.f32 %v2772, 1.0
      %v2781 = vadd.f32 %v2773, 1.0
      %v2782 = vadd.f32 %v2774, 1.0
      %v2783 = vadd.f32 %v2775, 1.0
      %v2784 = vmul.f32 %v2776, 0.5
      %v2785 = vmul.f32 %v2777, 0.5
      %v2786 = vmul.f32 %v2778, 0.5
      %v2787 = vmul.f32 %v2779, 0.5
      %v2788 = vmul.f32 %v2780, 0.5
      %v2789 = vmul.f32 %v2781, 0.5
      %v2790 = vmul.f32 %v2782, 0.5
      %v2791 = vmul.f32 %v2783, 0.5
      %v2792 = vmul.f32 %v2677, %v2784
      %v2793 = vmul.f32 %v2679, %v2785
      %v2794 = vmul.f32 %v2720, %v2786
      %v2795 = vmul.f32 %v2722, %v2787
      %v2796 = vmul.f32 %v2681, %v2788
      %v2797 = vmul.f32 %v2683, %v2789
      %v2798 = vmul.f32 %v2724, %v2790
      %v2799 = vmul.f32 %v2726, %v2791
      %v2800 = vpack.c.bf16 %v2796, %v2792
      %v2801 = vpack.c.bf16 %v2797, %v2793
      %v2802 = vpack.c.bf16 %v2798, %v2794
      %v2803 = vpack.c.bf16 %v2799, %v2795
      %v2804 = vld [vmem:[%s1152] sm:$0xf]
      %v2805 = vld [vmem:[%s1152 + $0x4] sm:$0xf]
      %v2806 = vld [vmem:[%s1152 + $0x8] sm:$0xf]
      %v2807 = vld [vmem:[%s1152 + $0xc] sm:$0xf]
      %v2808 = vld [vmem:[%s1152 + $0x10] sm:$0xf]
      %v2809 = vld [vmem:[%s1152 + $0x14] sm:$0xf]
      %v2810 = vld [vmem:[%s1152 + $0x18] sm:$0xf]
      %v2811 = vld [vmem:[%s1152 + $0x1c] sm:$0xf]
      %v2812 = vld [vmem:[%s1152 + $0x20] sm:$0xf]
      %v2813 = vld [vmem:[%s1152 + $0x24] sm:$0xf]
      %v2814 = vld [vmem:[%s1152 + $0x28] sm:$0xf]
      %v2815 = vld [vmem:[%s1152 + $0x2c] sm:$0xf]
      %v2816 = vld [vmem:[%s1152 + $0x30] sm:$0xf]
      %v2817 = vld [vmem:[%s1152 + $0x34] sm:$0xf]
      %v2818 = vld [vmem:[%s1152 + $0x38] sm:$0xf]
      %v2819 = vld [vmem:[%s1152 + $0x3c] sm:$0xf]
      %v2820 = vld [vmem:[%s1152 + $0x40] sm:$0xf]
      %v2821 = vld [vmem:[%s1152 + $0x44] sm:$0xf]
      %v2822 = vld [vmem:[%s1152 + $0x48] sm:$0xf]
      %v2823 = vld [vmem:[%s1152 + $0x4c] sm:$0xf]
      %v2824 = vld [vmem:[%s1152 + $0x50] sm:$0xf]
      %v2825 = vld [vmem:[%s1152 + $0x54] sm:$0xf]
      %v2826 = vld [vmem:[%s1152 + $0x58] sm:$0xf]
      %v2827 = vld [vmem:[%s1152 + $0x5c] sm:$0xf]
      %v2828 = vld [vmem:[%s1152 + $0x60] sm:$0xf]
      %v2829 = vld [vmem:[%s1152 + $0x64] sm:$0xf]
      %v2830 = vld [vmem:[%s1152 + $0x68] sm:$0xf]
      %v2831 = vld [vmem:[%s1152 + $0x6c] sm:$0xf]
      %v2832 = vld [vmem:[%s1152 + $0x70] sm:$0xf]
      %v2833 = vld [vmem:[%s1152 + $0x74] sm:$0xf]
      %v2834 = vld [vmem:[%s1152 + $0x78] sm:$0xf]
      %v2835 = vld [vmem:[%s1152 + $0x7c] sm:$0xf]
      %v2836 = vld [vmem:[%s1152 + $0x80] sm:$0xf]
      %v2837 = vld [vmem:[%s1152 + $0x84] sm:$0xf]
      %v2838 = vld [vmem:[%s1152 + $0x88] sm:$0xf]
      %v2839 = vld [vmem:[%s1152 + $0x8c] sm:$0xf]
      %v2840 = vld [vmem:[%s1152 + $0x90] sm:$0xf]
      %v2841 = vld [vmem:[%s1152 + $0x94] sm:$0xf]
      %v2842 = vld [vmem:[%s1152 + $0x98] sm:$0xf]
      %v2843 = vld [vmem:[%s1152 + $0x9c] sm:$0xf]
      %v2844 = vld [vmem:[%s1152 + $0xa0] sm:$0xf]
      %v2845 = vld [vmem:[%s1152 + $0xa4] sm:$0xf]
      %v2846 = vld [vmem:[%s1152 + $0xa8] sm:$0xf]
      %v2847 = vld [vmem:[%s1152 + $0xac] sm:$0xf]
      %v2848 = vld [vmem:[%s1152 + $0xb0] sm:$0xf]
      %v2849 = vld [vmem:[%s1152 + $0xb4] sm:$0xf]
      %v2850 = vld [vmem:[%s1152 + $0xb8] sm:$0xf]
      %v2851 = vld [vmem:[%s1152 + $0xbc] sm:$0xf]
      %v2852 = vld [vmem:[%s1152 + $0xc0] sm:$0xf]
      %v2853 = vld [vmem:[%s1152 + $0xc4] sm:$0xf]
      %v2854 = vld [vmem:[%s1152 + $0xc8] sm:$0xf]
      %v2855 = vld [vmem:[%s1152 + $0xcc] sm:$0xf]
      %v2856 = vld [vmem:[%s1152 + $0xd0] sm:$0xf]
      %v2857 = vld [vmem:[%s1152 + $0xd4] sm:$0xf]
      %v2858 = vld [vmem:[%s1152 + $0xd8] sm:$0xf]
      %v2859 = vld [vmem:[%s1152 + $0xdc] sm:$0xf]
      %v2860 = vld [vmem:[%s1152 + $0xe0] sm:$0xf]
      %v2861 = vld [vmem:[%s1152 + $0xe4] sm:$0xf]
      %v2862 = vld [vmem:[%s1152 + $0xe8] sm:$0xf]
      %v2863 = vld [vmem:[%s1152 + $0xec] sm:$0xf]
      %v2864 = vld [vmem:[%s1152 + $0xf0] sm:$0xf]
      %v2865 = vld [vmem:[%s1152 + $0xf4] sm:$0xf]
      %v2866 = vld [vmem:[%s1152 + $0xf8] sm:$0xf]
      %v2867 = vld [vmem:[%s1152 + $0xfc] sm:$0xf]
      %v2868 = vld [vmem:[%s1155] sm:$0x1]
      %v2870 = vlaneseq
      %v2871 = vshrl.u32 %v2870, 7
      %v2872 = vsub.s32 0, %v2871
      %v2873 = vrot.slane %v2868, %v2872
      %v2939 = vunpack.c.l.b16 %v2804
      %v2940 = vunpack.c.l.b16 %v2805
      %v2941 = vunpack.c.l.b16 %v2806
      %v2942 = vunpack.c.l.b16 %v2807
      %v2943 = vunpack.c.l.b16 %v2808
      %v2944 = vunpack.c.l.b16 %v2809
      %v2945 = vunpack.c.l.b16 %v2810
      %v2946 = vunpack.c.l.b16 %v2811
      %v2947 = vunpack.c.l.b16 %v2812
      %v2948 = vunpack.c.l.b16 %v2813
      %v2949 = vunpack.c.l.b16 %v2814
      %v2950 = vunpack.c.l.b16 %v2815
      %v2951 = vunpack.c.l.b16 %v2816
      %v2952 = vunpack.c.l.b16 %v2817
      %v2953 = vunpack.c.l.b16 %v2818
      %v2954 = vunpack.c.l.b16 %v2819
      %v2955 = vunpack.c.l.b16 %v2820
      %v2956 = vunpack.c.l.b16 %v2821
      %v2957 = vunpack.c.l.b16 %v2822
      %v2958 = vunpack.c.l.b16 %v2823
      %v2959 = vunpack.c.l.b16 %v2824
      %v2960 = vunpack.c.l.b16 %v2825
      %v2961 = vunpack.c.l.b16 %v2826
      %v2962 = vunpack.c.l.b16 %v2827
      %v2963 = vunpack.c.l.b16 %v2828
      %v2964 = vunpack.c.l.b16 %v2829
      %v2965 = vunpack.c.l.b16 %v2830
      %v2966 = vunpack.c.l.b16 %v2831
      %v2967 = vunpack.c.l.b16 %v2832
      %v2968 = vunpack.c.l.b16 %v2833
      %v2969 = vunpack.c.l.b16 %v2834
      %v2970 = vunpack.c.l.b16 %v2835
      %v2971 = vunpack.c.l.b16 %v2836
      %v2972 = vunpack.c.l.b16 %v2837
      %v2973 = vunpack.c.l.b16 %v2838
      %v2974 = vunpack.c.l.b16 %v2839
      %v2975 = vunpack.c.l.b16 %v2840
      %v2976 = vunpack.c.l.b16 %v2841
      %v2977 = vunpack.c.l.b16 %v2842
      %v2978 = vunpack.c.l.b16 %v2843
      %v2979 = vunpack.c.l.b16 %v2844
      %v2980 = vunpack.c.l.b16 %v2845
      %v2981 = vunpack.c.l.b16 %v2846
      %v2982 = vunpack.c.l.b16 %v2847
      %v2983 = vunpack.c.l.b16 %v2848
      %v2984 = vunpack.c.l.b16 %v2849
      %v2985 = vunpack.c.l.b16 %v2850
      %v2986 = vunpack.c.l.b16 %v2851
      %v2987 = vunpack.c.l.b16 %v2852
      %v2988 = vunpack.c.l.b16 %v2853
      %v2989 = vunpack.c.l.b16 %v2854
      %v2990 = vunpack.c.l.b16 %v2855
      %v2991 = vunpack.c.l.b16 %v2856
      %v2992 = vunpack.c.l.b16 %v2857
      %v2993 = vunpack.c.l.b16 %v2858
      %v2994 = vunpack.c.l.b16 %v2859
      %v2995 = vunpack.c.l.b16 %v2860
      %v2996 = vunpack.c.l.b16 %v2861
      %v2997 = vunpack.c.l.b16 %v2862
      %v2998 = vunpack.c.l.b16 %v2863
      %v2999 = vunpack.c.l.b16 %v2864
      %v3000 = vunpack.c.l.b16 %v2865
      %v3001 = vunpack.c.l.b16 %v2866
      %v3002 = vunpack.c.l.b16 %v2867
      %v3003 = vpack.c.b16 %v2940, %v2939
      %v3004 = vpack.c.b16 %v2942, %v2941
      %v3005 = vpack.c.b16 %v2944, %v2943
      %v3006 = vpack.c.b16 %v2946, %v2945
      %v3007 = vpack.c.b16 %v2948, %v2947
      %v3008 = vpack.c.b16 %v2950, %v2949
      %v3009 = vpack.c.b16 %v2952, %v2951
      %v3010 = vpack.c.b16 %v2954, %v2953
      %v3011 = vpack.c.b16 %v2956, %v2955
      %v3012 = vpack.c.b16 %v2958, %v2957
      %v3013 = vpack.c.b16 %v2960, %v2959
      %v3014 = vpack.c.b16 %v2962, %v2961
      %v3015 = vpack.c.b16 %v2964, %v2963
      %v3016 = vpack.c.b16 %v2966, %v2965
      %v3017 = vpack.c.b16 %v2968, %v2967
      %v3018 = vpack.c.b16 %v2970, %v2969
      %v3019 = vpack.c.b16 %v2972, %v2971
      %v3020 = vpack.c.b16 %v2974, %v2973
      %v3021 = vpack.c.b16 %v2976, %v2975
      %v3022 = vpack.c.b16 %v2978, %v2977
      %v3023 = vpack.c.b16 %v2980, %v2979
      %v3024 = vpack.c.b16 %v2982, %v2981
      %v3025 = vpack.c.b16 %v2984, %v2983
      %v3026 = vpack.c.b16 %v2986, %v2985
      %v3027 = vpack.c.b16 %v2988, %v2987
      %v3028 = vpack.c.b16 %v2990, %v2989
      %v3029 = vpack.c.b16 %v2992, %v2991
      %v3030 = vpack.c.b16 %v2994, %v2993
      %v3031 = vpack.c.b16 %v2996, %v2995
      %v3032 = vpack.c.b16 %v2998, %v2997
      %v3033 = vpack.c.b16 %v3000, %v2999
      %v3034 = vpack.c.b16 %v3002, %v3001
      %3067 = vmatprep.subr.bf16.mxu0 0
      %3068 = vmatpush1.bf16.msra.mxu0 %v3003
      %3069 = vmatprep.subr.bf16.mxu0 0
      %3070 = vmatpush1.bf16.msra.mxu0 %v3004
      %3071 = vmatprep.subr.bf16.mxu0 0
      %3072 = vmatpush1.bf16.msra.mxu0 %v3005
      %3073 = vmatprep.subr.bf16.mxu0 0
      %3074 = vmatpush1.bf16.msra.mxu0 %v3006
      %3075 = vmatprep.subr.bf16.mxu0 0
      %3076 = vmatpush1.bf16.msra.mxu0 %v3007
      %3077 = vmatprep.subr.bf16.mxu0 0
      %3078 = vmatpush1.bf16.msra.mxu0 %v3008
      %3079 = vmatprep.subr.bf16.mxu0 0
      %3080 = vmatpush1.bf16.msra.mxu0 %v3009
      %3081 = vmatprep.subr.bf16.mxu0 0
      %3082 = vmatpush1.bf16.msra.mxu0 %v3010
      %3083 = vmatprep.subr.bf16.mxu0 0
      %3084 = vmatpush1.bf16.msra.mxu0 %v3011
      %3085 = vmatprep.subr.bf16.mxu0 0
      %3086 = vmatpush1.bf16.msra.mxu0 %v3012
      %3087 = vmatprep.subr.bf16.mxu0 0
      %3088 = vmatpush1.bf16.msra.mxu0 %v3013
      %3089 = vmatprep.subr.bf16.mxu0 0
      %3090 = vmatpush1.bf16.msra.mxu0 %v3014
      %3091 = vmatprep.subr.bf16.mxu0 0
      %3092 = vmatpush1.bf16.msra.mxu0 %v3015
      %3093 = vmatprep.subr.bf16.mxu0 0
      %3094 = vmatpush1.bf16.msra.mxu0 %v3016
      %3095 = vmatprep.subr.bf16.mxu0 0
      %3096 = vmatpush1.bf16.msra.mxu0 %v3017
      %3097 = vmatprep.subr.bf16.mxu0 0
      %3098 = vmatpush1.bf16.msra.mxu0 %v3018
      %3099 = vmatprep.mubr.bf16.mxu0 %v2801
      %3100 = vmatmul.mubr.bf16.gmra.mrb[0].mxu0 %v2800
      %v3101 = vpop.f32.mrb[0].mxu0
      %v3102 = vadd.f32 %v2873, %v3101
      %v3103 = vpop.f32.mrb[0].mxu0
      %v3104 = vpop.f32.mrb[0].mxu0
      %v3105 = vadd.f32 %v2873, %v3104
      %v3106 = vpop.f32.mrb[0].mxu0
      %3107 = vdwg.mxu0
      %3108 = vmatprep.subr.bf16.mxu0 0
      %3109 = vmatpush1.bf16.msra.mxu0 %v3019
      %3110 = vmatprep.subr.bf16.mxu0 0
      %3111 = vmatpush1.bf16.msra.mxu0 %v3020
      %3112 = vmatprep.subr.bf16.mxu0 0
      %3113 = vmatpush1.bf16.msra.mxu0 %v3021
      %3114 = vmatprep.subr.bf16.mxu0 0
      %3115 = vmatpush1.bf16.msra.mxu0 %v3022
      %3116 = vmatprep.subr.bf16.mxu0 0
      %3117 = vmatpush1.bf16.msra.mxu0 %v3023
      %3118 = vmatprep.subr.bf16.mxu0 0
      %3119 = vmatpush1.bf16.msra.mxu0 %v3024
      %3120 = vmatprep.subr.bf16.mxu0 0
      %3121 = vmatpush1.bf16.msra.mxu0 %v3025
      %3122 = vmatprep.subr.bf16.mxu0 0
      %3123 = vmatpush1.bf16.msra.mxu0 %v3026
      %3124 = vmatprep.subr.bf16.mxu0 0
      %3125 = vmatpush1.bf16.msra.mxu0 %v3027
      %3126 = vmatprep.subr.bf16.mxu0 0
      %3127 = vmatpush1.bf16.msra.mxu0 %v3028
      %3128 = vmatprep.subr.bf16.mxu0 0
      %3129 = vmatpush1.bf16.msra.mxu0 %v3029
      %3130 = vmatprep.subr.bf16.mxu0 0
      %3131 = vmatpush1.bf16.msra.mxu0 %v3030
      %3132 = vmatprep.subr.bf16.mxu0 0
      %3133 = vmatpush1.bf16.msra.mxu0 %v3031
      %3134 = vmatprep.subr.bf16.mxu0 0
      %3135 = vmatpush1.bf16.msra.mxu0 %v3032
      %3136 = vmatprep.subr.bf16.mxu0 0
      %3137 = vmatpush1.bf16.msra.mxu0 %v3033
      %3138 = vmatprep.subr.bf16.mxu0 0
      %3139 = vmatpush1.bf16.msra.mxu0 %v3034
      %3140 = vmatprep.mubr.bf16.mxu0 %v2803
      %3141 = vmatmul.mubr.bf16.gmra.mrb[0].mxu0 %v2802
      %v3142 = vpop.f32.mrb[0].mxu0
      %v3143 = vadd.f32 %v3102, %v3142
      %v3144 = vpop.f32.mrb[0].mxu0
      %v3145 = vpop.f32.mrb[0].mxu0
      %v3146 = vadd.f32 %v3105, %v3145
      %v3147 = vpop.f32.mrb[0].mxu0
      %3148 = vdwg.mxu0
      %v3149 = vadd.f32 %v2383, %v3143
      %v3150 = vadd.f32 %v2384, %v3146
      %3151 = vst [vmem:[#allocation2] sm:$0xff] %v3149
      %3152 = vst [vmem:[#allocation2 + $0x8] sm:$0x1] %v3150
      %p3153 = scmp.eq.s32.totalorder %s75, 1
      // Predicated region
      $region141: #{abil_dt_forward.1} parent=135 // pred_check
        %p3154 = pneg %p3153
      $region142: #{abil_dt_forward.1} parent=135 // pred_check_branch
        %3156 = sbr.rel (%p3154) target = $region144
      $region143: #{abil_dt_forward.1} parent=135 // pred_region
        %v3157 = vld [vmem:[%s51] sm:$0x1]
        %v3158 = vld [vmem:[%s53] sm:$0x1]
        %3159 = vadd.xlane.f32.xlu0 %v3149
        %v3160 = vpop.xlane.xlu0 %3159
        %v3161 = vsel %vm1842, %v3150, 0.0
        %3162 = vadd.xlane.f32.xlu0 %v3161
        %v3163 = vpop.xlane.xlu0 %3162
        %v3164 = vmul.f32 %v3160, %v1846
        %v3165 = vmul.f32 %v3163, %v1846
        %v3166 = vsub.f32 %v3149, %v3164
        %v3167 = vsub.f32 %v3150, %v3165
        %v3168 = vmul.f32 %v3166, %v3166
        %v3169 = vmul.f32 %v3167, %v3167
        %3170 = vadd.xlane.f32.xlu0 %v3168
        %v3171 = vpop.xlane.xlu0 %3170
        %v3172 = vsel %vm1842, %v3169, 0.0
        %3173 = vadd.xlane.f32.xlu0 %v3172
        %v3174 = vpop.xlane.xlu0 %3173
        %v3175 = vmul.f32 %v3171, %v1846
        %v3176 = vmul.f32 %v3174, %v1846
        %v3177 = vadd.f32 %v3175, 1e-05
        %v3178 = vadd.f32 %v3176, 1e-05
        %v3179 = vrsqrt.pop %v3177
        %v3180 = vrsqrt.pop %v3178
        %v3181 = vmul.f32 %v3166, %v3179
        %v3182 = vmul.f32 %v3167, %v3180
        %v3184 = vlaneseq
        %v3185 = vshrl.u32 %v3184, 7
        %v3186 = vsub.s32 0, %v3185
        %v3187 = vrot.slane %v3157, %v3186
        %v3189 = vmul.f32 %v3181, %v3187
        %v3190 = vmul.f32 %v3182, %v3187
        %v3192 = vlaneseq
        %v3193 = vshrl.u32 %v3192, 7
        %v3194 = vsub.s32 0, %v3193
        %v3195 = vrot.slane %v3158, %v3194
        %v3197 = vadd.f32 %v3189, %v3195
        %v3198 = vadd.f32 %v3190, %v3195
        %v3199 = vpack.c.bf16 %v3198, %v3197
        %v3200 = vld [vmem:[%s55] sm:$0xf]
        %v3201 = vld [vmem:[%s55 + $0x4] sm:$0xf]
        %v3202 = vld [vmem:[%s55 + $0x8] sm:$0xf]
        %v3203 = vld [vmem:[%s55 + $0xc] sm:$0xf]
        %v3204 = vld [vmem:[%s55 + $0x10] sm:$0xf]
        %v3205 = vld [vmem:[%s55 + $0x14] sm:$0xf]
        %v3206 = vld [vmem:[%s55 + $0x18] sm:$0xf]
        %v3207 = vld [vmem:[%s55 + $0x1c] sm:$0xf]
        %v3208 = vld [vmem:[%s55 + $0x20] sm:$0xf]
        %v3209 = vld [vmem:[%s55 + $0x24] sm:$0xf]
        %v3210 = vld [vmem:[%s55 + $0x28] sm:$0xf]
        %v3211 = vld [vmem:[%s55 + $0x2c] sm:$0xf]
        %v3212 = vld [vmem:[%s55 + $0x30] sm:$0xf]
        %v3213 = vld [vmem:[%s55 + $0x34] sm:$0xf]
        %v3214 = vld [vmem:[%s55 + $0x38] sm:$0xf]
        %v3215 = vld [vmem:[%s55 + $0x3c] sm:$0xf]
        %v3216 = vld [vmem:[%s57] sm:$0x1]
        %v3218 = vlaneseq
        %v3219 = vshrl.u32 %v3218, 7
        %v3220 = vsub.s32 0, %v3219
        %v3221 = vrot.slane %v3216, %v3220
        %v3239 = vunpack.c.l.b16 %v3200
        %v3240 = vunpack.c.l.b16 %v3201
        %v3241 = vunpack.c.l.b16 %v3202
        %v3242 = vunpack.c.l.b16 %v3203
        %v3243 = vunpack.c.l.b16 %v3204
        %v3244 = vunpack.c.l.b16 %v3205
        %v3245 = vunpack.c.l.b16 %v3206
        %v3246 = vunpack.c.l.b16 %v3207
        %v3247 = vunpack.c.l.b16 %v3208
        %v3248 = vunpack.c.l.b16 %v3209
        %v3249 = vunpack.c.l.b16 %v3210
        %v3250 = vunpack.c.l.b16 %v3211
        %v3251 = vunpack.c.l.b16 %v3212
        %v3252 = vunpack.c.l.b16 %v3213
        %v3253 = vunpack.c.l.b16 %v3214
        %v3254 = vunpack.c.l.b16 %v3215
        %v3255 = vpack.c.b16 %v3240, %v3239
        %v3256 = vpack.c.b16 %v3242, %v3241
        %v3257 = vpack.c.b16 %v3244, %v3243
        %v3258 = vpack.c.b16 %v3246, %v3245
        %v3259 = vpack.c.b16 %v3248, %v3247
        %v3260 = vpack.c.b16 %v3250, %v3249
        %v3261 = vpack.c.b16 %v3252, %v3251
        %v3262 = vpack.c.b16 %v3254, %v3253
        %3271 = vmatprep.subr.bf16.mxu0 0
        %3272 = vmatpush1.bf16.msra.mxu0 %v3255
        %3273 = vmatprep.subr.bf16.mxu0 0
        %3274 = vmatpush1.bf16.msra.mxu0 %v3256
        %3275 = vmatprep.subr.bf16.mxu0 0
        %3276 = vmatpush1.bf16.msra.mxu0 %v3257
        %3277 = vmatprep.subr.bf16.mxu0 0
        %3278 = vmatpush1.bf16.msra.mxu0 %v3258
        %3279 = vmatprep.subr.bf16.mxu0 0
        %3280 = vmatpush1.bf16.msra.mxu0 %v3259
        %3281 = vmatprep.subr.bf16.mxu0 0
        %3282 = vmatpush1.bf16.msra.mxu0 %v3260
        %3283 = vmatprep.subr.bf16.mxu0 0
        %3284 = vmatpush1.bf16.msra.mxu0 %v3261
        %3285 = vmatprep.subr.bf16.mxu0 0
        %3286 = vmatpush1.bf16.msra.mxu0 %v3262
        %3287 = vmatprep.subr.bf16.mxu0 0
        %3288 = vmatpush1.bf16.msra.mxu0 0
        %3289 = vmatprep.subr.bf16.mxu0 0
        %3290 = vmatpush1.bf16.msra.mxu0 0
        %3291 = vmatprep.subr.bf16.mxu0 0
        %3292 = vmatpush1.bf16.msra.mxu0 0
        %3293 = vmatprep.subr.bf16.mxu0 0
        %3294 = vmatpush1.bf16.msra.mxu0 0
        %3295 = vmatprep.subr.bf16.mxu0 0
        %3296 = vmatpush1.bf16.msra.mxu0 0
        %3297 = vmatprep.subr.bf16.mxu0 0
        %3298 = vmatpush1.bf16.msra.mxu0 0
        %3299 = vmatprep.subr.bf16.mxu0 0
        %3300 = vmatpush1.bf16.msra.mxu0 0
        %3301 = vmatprep.subr.bf16.mxu0 0
        %3302 = vmatpush1.bf16.msra.mxu0 0
        %3303 = vmatprep.mubr.bf16.mxu0 0
        %3304 = vmatmul.mubr.bf16.gmra.mrb[0].mxu0 %v3199
        %v3305 = vpop.f32.mrb[0].mxu0
        %v3306 = vadd.f32 %v3221, %v3305
        %v3307 = vpop.f32.mrb[0].mxu0
        %v3308 = vpop.f32.mrb[0].mxu0
        %v3309 = vadd.f32 %v3221, %v3308
        %v3310 = vpop.f32.mrb[0].mxu0
        %3311 = vdwg.mxu0
        %3312 = vst [vmem:[%s1160] sm:$0xff] %v3306
        %3313 = vst [vmem:[%s1160 + $0x8] sm:$0x1] %v3309
      $region144: #{abil_dt_forward.1} parent=135 // pred_fallthru
        _
      %p3314 = scmp.lt.s32.totalorder %s74, 1
      %s3315 = scalar_select %p3314, %s74, 1
      %s3316 = smul.addr %s3315, 2
      %s3317 = smul.addr %s3316, 8
      %s3318 = scalar_lea.vmem %s59, %s3317
      // Predicated region
      $region145: #{abil_dt_forward.1} parent=135 // pred_check
        %p3319 = pneg %p789
      $region146: #{abil_dt_forward.1} parent=135 // pred_check_branch
        %3321 = sbr.rel (%p3319) target = $region148
      $region147: #{abil_dt_forward.1} parent=135 // pred_region
        _
      $region148: #{abil_dt_forward.1} parent=135 // pred_fallthru
        _
    $region136: #{abil_dt_forward.1} parent=5 // pred_fallthru
      _
    %p3322 = scmp.le.s32.totalorder 2, %s65
    // Predicated region
    $region149: #{abil_dt_forward.1} parent=5 // pred_check
      %p3323 = pneg %p3322
    $region150: #{abil_dt_forward.1} parent=5 // pred_check_branch
      %3325 = sbr.rel (%p3323) target = $region152
    $region151: #{abil_dt_forward.1} parent=5 // pred_region
      %s3326 = ssub.s32 %s65, 2
      // Predicated region
      $region153: #{abil_dt_forward.1} parent=151 // pred_check
        %p3327 = pneg %p795
      $region154: #{abil_dt_forward.1} parent=151 // pred_check_branch
        %3329 = sbr.rel (%p3327) target = $region156
      $region155: #{abil_dt_forward.1} parent=151 // pred_region
        %p3330 = scmp.lt.s32.totalorder %s76, 1
        %s3331 = scalar_select %p3330, %s76, 1
        %s3332 = smul.addr %s3331, 2
        %s3333 = smul.addr %s3332, 8
        %s3334 = scalar_lea.vmem %s59, %s3333
      $region156: #{abil_dt_forward.1} parent=151 // pred_fallthru
        _
    $region152: #{abil_dt_forward.1} parent=5 // pred_fallthru
      _
  $region6: #{abil_dt_forward.1} parent=0 // loop_footer
    %s69 = sadd.s32 1, %s65
  $region7: #{abil_dt_forward.1} parent=0 // loop_footer_branch
    %64 = sbr.rel target = $region3
  $region8: #{abil_dt_forward.1} parent=0 // loop_exit
    _

</llo_original>
